<compile_context>
chip_gen: v6e
topology: v6e:2x2x1
jax: 0.10.0
libtpu: 0.0.40
codegen_flags: <defaults>
</compile_context>

<pallas_src>
import numpy as np
import jax
import jax.numpy as jnp
from jax import lax
from jax.experimental import pallas as pl
from jax.experimental.pallas import tpu as pltpu


# ---------------------------------------------------------------------------
# Pallas kernel: one program per batch block, whole recurrence inside.
# ---------------------------------------------------------------------------
def bilstm_kernel(x_ref, mask_ref, wx_ref, wh_ref, b_ref,
                  out_f_ref, out_b_ref, h_f_ref, h_b_ref, pre_ref):
    # x_ref    : (T, BB, E)  bf16, time-major batch block
    # mask_ref : (T, BB, H)  f32, 1.0 where t < len[b] else 0.0
    # wx_ref   : (E, 8H)     bf16  [W_ih_fwd | W_ih_bwd]
    # wh_ref   : (H, 8H)     bf16  [W_hh_fwd | W_hh_bwd]
    # b_ref    : (1, 8H)     f32   [b_fwd | b_bwd]  (b_ih + b_hh folded)
    # out_f_ref: (T, BB, H)  f32  forward outputs (zero past length)
    # out_b_ref: (T, BB, H)  f32  backward outputs (zero past length)
    # h_f_ref  : (BB, H)     f32  final forward hidden
    # h_b_ref  : (BB, H)     f32  final backward hidden
    # pre_ref  : (T*BB, 8H)  f32  scratch: hoisted input projection (+bias)
    T, BB, E = x_ref.shape
    H = h_f_ref.shape[1]
    G = 4 * H

    wx = wx_ref[...]           # (E, 8H) bf16
    bias = b_ref[...]          # (1, 8H) f32
    # Input projection (+ folded bias) for every timestep, both directions —
    # hoisted out of the serial recurrence (MXU, f32 accumulate).
    for t in range(T):
        pre_ref[pl.ds(t * BB, BB), :] = (
            jnp.dot(x_ref[t], wx, preferred_element_type=jnp.float32) + bias)

    wh = wh_ref[...]           # (H, 8H) bf16, resident across the loop

    def step(s, carry):
        h, c = carry                    # (2BB, H) f32, [fwd ; bwd] stacked
        tb = T - 1 - s                  # backward direction's time index
        rf = s * BB                     # forward rows in pre_ref
        rb = tb * BB                    # backward rows in pre_ref

        # Fused recurrent matmul for both directions: (2BB, H) @ (H, 8H),
        # bf16 operands, f32 accumulation.
        rec = jnp.dot(h.astype(jnp.bfloat16), wh,
                      preferred_element_type=jnp.float32)          # (2BB, 8H)

        # PyTorch gate order per direction: i, f, g, o.
        gf = pre_ref[pl.ds(rf, BB), 0:G] + rec[0:BB, 0:G]           # (BB, 4H)
        gb = pre_ref[pl.ds(rb, BB), G:2 * G] + rec[BB:2 * BB, G:2 * G]
        g = jnp.concatenate([gf, gb], axis=0)                       # (2BB, 4H)

        i_g = jax.nn.sigmoid(g[:, 0:H])
        f_g = jax.nn.sigmoid(g[:, H:2 * H])
        g_g = jnp.tanh(g[:, 2 * H:3 * H])
        o_g = jax.nn.sigmoid(g[:, 3 * H:4 * H])

        c_new = f_g * c + i_g * g_g
        h_new = o_g * jnp.tanh(c_new)

        # boolean mask -> single vsel per masked tensor (mask load/compare is
        # independent of the carry, so it is off the critical path)
        m = jnp.concatenate([mask_ref[s], mask_ref[tb]], axis=0) != 0.0
        c_keep = jnp.where(m, c_new, c)
        h_keep = jnp.where(m, h_new, h)
        out_m = jnp.where(m, h_new, 0.0)

        # Lane-dense full-row stores into the per-direction output buffers
        # (stay in VMEM; single HBM writeback at kernel end).
        out_f_ref[s] = out_m[0:BB]
        out_b_ref[tb] = out_m[BB:2 * BB]

        return (h_keep, c_keep)

    z = jnp.zeros((2 * BB, H), jnp.float32)
    h, c = lax.fori_loop(0, T, step, (z, z), unroll=True)

    # Final hidden written exactly once, after the recurrence.
    h_f_ref[...] = h[0:BB]
    h_b_ref[...] = h[BB:2 * BB]


def bilstm_pallas(x_tbe, lengths, params):
    """x_tbe: (T, B, E) float (time-major); lengths: (B,) int32.
    Returns output (B, T, 2H) and final hidden (B, 2H)."""
    T, B, E = x_tbe.shape
    H = params["w_h"].shape[0]
    G8 = params["w_x"].shape[1]            # 8H

    # Batch-parallel grid for v7x's 2 TensorCores; harmless (grid=(1,)) on
    # v5e/v6e.  BB stays 8-sublane aligned.
    nblk = 2 if (B % 16 == 0) else 1
    BB = B // nblk

    # validity mask precomputed in the wrapper (kept as f32; H=32 stream is
    # negligible — see review; compared to bool inside the kernel)
    valid = (jnp.arange(T, dtype=jnp.int32)[:, None]
             < lengths.astype(jnp.int32)[None, :])                   # (T, B)
    mask = jnp.broadcast_to(valid[:, :, None], (T, B, H)).astype(jnp.float32)

    # bf16 MXU operands (f32 accumulation + f32 gates inside the kernel)
    x_bf = x_tbe.astype(jnp.bfloat16)
    wx = params["w_x"].astype(jnp.bfloat16)
    wh = params["w_h"].astype(jnp.bfloat16)
    b = params["b"].astype(jnp.float32)

    out_f, out_b, h_f, h_b = pl.pallas_call(
        bilstm_kernel,
        out_shape=[jax.ShapeDtypeStruct((T, B, H), jnp.float32),
                   jax.ShapeDtypeStruct((T, B, H), jnp.float32),
                   jax.ShapeDtypeStruct((B, H), jnp.float32),
                   jax.ShapeDtypeStruct((B, H), jnp.float32)],
        grid=(nblk,),
        in_specs=[pl.BlockSpec((T, BB, E), lambda i: (0, i, 0)),   # x
                  pl.BlockSpec((T, BB, H), lambda i: (0, i, 0)),   # mask
                  pl.BlockSpec((E, G8), lambda i: (0, 0)),         # W_ih stacked
                  pl.BlockSpec((H, G8), lambda i: (0, 0)),         # W_hh stacked
                  pl.BlockSpec((1, G8), lambda i: (0, 0))],        # bias stacked
        out_specs=[pl.BlockSpec((T, BB, H), lambda i: (0, i, 0)),  # fwd outputs
                   pl.BlockSpec((T, BB, H), lambda i: (0, i, 0)),  # bwd outputs
                   pl.BlockSpec((BB, H), lambda i: (i, 0)),        # final h fwd
                   pl.BlockSpec((BB, H), lambda i: (i, 0))],       # final h bwd
        # pre scratch scales as T*BB*8H*4B — tile over T or use bf16 before it
        # approaches v7x's 64 MiB VMEM at production sizes.
        scratch_shapes=[pltpu.VMEM((T * BB, G8), jnp.float32)],
        compiler_params=pltpu.CompilerParams(
            dimension_semantics=("parallel",)),
    )(x_bf, mask, wx, wh, b)

    output = jnp.concatenate([out_f, out_b], axis=-1).transpose(1, 0, 2)  # (B,T,2H)
    h = jnp.concatenate([h_f, h_b], axis=-1)                              # (B,2H)
    return output, h


# ---------------------------------------------------------------------------
# Model forward (glue in plain JAX: embedding gather, reshapes).
# ---------------------------------------------------------------------------
def sentence_embedding_forward(params, doc_x, doc_sents_length):
    d0, d1, d2 = doc_x.shape
    B = d0 * d1
    # transpose the SMALL int32 token ids to time-major BEFORE the gather so
    # the E-times-larger f32 embedding tensor never takes an extra HBM trip
    ids_tb = doc_x.reshape(B, d2).T                          # (T, B) int32
    x_tbe = jnp.take(params["embedding"], ids_tb, axis=0)    # (T, B, E) f32
    lengths = doc_sents_length.reshape(B).astype(jnp.int32)
    doc_output, h = bilstm_pallas(x_tbe, lengths, params)    # (B,T,2H), (B,2H)
    doc_hidden = h.reshape(d0, d1, -1)                       # num_layers == 1
    return doc_output, doc_hidden


# ---------------------------------------------------------------------------
# Pure-JAX reference for the masked bidirectional LSTM (correctness check).
# ---------------------------------------------------------------------------
def ref_bilstm(x, lengths, p):
    B, T, E = x.shape
    H = p["w_h"].shape[0]
    G = 4 * H

    def run(wih, whh, b, reverse):
        h = jnp.zeros((B, H), jnp.float32)
        c = jnp.zeros((B, H), jnp.float32)
        outs = [None] * T
        ts = range(T - 1, -1, -1) if reverse else range(T)
        for t in ts:
            g = x[:, t] @ wih + h @ whh + b
            i = jax.nn.sigmoid(g[:, :H])
            f = jax.nn.sigmoid(g[:, H:2 * H])
            gg = jnp.tanh(g[:, 2 * H:3 * H])
            o = jax.nn.sigmoid(g[:, 3 * H:])
            cn = f * c + i * gg
            hn = o * jnp.tanh(cn)
            m = (lengths > t).astype(jnp.float32)[:, None]
            h = m * hn + (1 - m) * h
            c = m * cn + (1 - m) * c
            outs[t] = m * hn
        return jnp.stack(outs, axis=1), h

    of, hf = run(p["w_x"][:, :G], p["w_h"][:, :G], p["b"][:, :G], False)
    ob, hb = run(p["w_x"][:, G:], p["w_h"][:, G:], p["b"][:, G:], True)
    return jnp.concatenate([of, ob], -1), jnp.concatenate([hf, hb], -1)


# ---------------------------------------------------------------------------
# Deterministic parameter / input construction and test run.
# ---------------------------------------------------------------------------
def make_params(key, n_vocabs, embed_dim, hidden_dim, padding_idx):
    ks = jax.random.split(key, 7)
    bound = 1.0 / np.sqrt(hidden_dim)
    emb = jax.random.normal(ks[0], (n_vocabs, embed_dim), jnp.float32)
    emb = emb.at[padding_idx].set(0.0)                      # nn.Embedding padding_idx
    u = lambda k, shp: jax.random.uniform(k, shp, jnp.float32, -bound, bound)
    w_ih_f = u(ks[1], (embed_dim, 4 * hidden_dim))
    w_hh_f = u(ks[2], (hidden_dim, 4 * hidden_dim))
    b_f = u(ks[3], (1, 4 * hidden_dim))
    w_ih_b = u(ks[4], (embed_dim, 4 * hidden_dim))
    w_hh_b = u(ks[5], (hidden_dim, 4 * hidden_dim))
    b_b = u(ks[6], (1, 4 * hidden_dim))
    return {
        "embedding": emb,
        # host-side stacked [fwd | bwd] weights; when importing real PyTorch
        # weights, bias must be b_ih + b_hh summed per direction before stacking
        "w_x": jnp.concatenate([w_ih_f, w_ih_b], axis=1),   # (E, 8H)
        "w_h": jnp.concatenate([w_hh_f, w_hh_b], axis=1),   # (H, 8H)
        "b":   jnp.concatenate([b_f, b_b], axis=1),         # (1, 8H)
    }


if __name__ == "__main__":
    n_vocabs, embed_dim, hidden_dim, padding_idx = 50, 32, 32, 0
    d0, d1, d2 = 2, 8, 8          # docs, sentences/doc, words/sentence (B=16, T=8)

    key = jax.random.PRNGKey(0)
    kp, kx, kl = jax.random.split(key, 3)
    params = make_params(kp, n_vocabs, embed_dim, hidden_dim, padding_idx)

    # sentence lengths in [1, d2]; guarantee one full-length sentence so
    # max(len) == T (matches pad_packed_sequence output width statically)
    lengths = jax.random.randint(kl, (d0, d1), 1, d2 + 1).astype(jnp.int32)
    lengths = lengths.at[0, 0].set(d2)

    # token ids in [1, n_vocabs); zero-out (padding_idx) tokens past each length
    doc_x = jax.random.randint(kx, (d0, d1, d2), 1, n_vocabs).astype(jnp.int32)
    pos = jnp.arange(d2)[None, None, :]
    doc_x = jnp.where(pos < lengths[:, :, None], doc_x, padding_idx)

    fwd = jax.jit(sentence_embedding_forward)
    doc_output, doc_hidden = fwd(params, doc_x, lengths)
    jax.block_until_ready((doc_output, doc_hidden))

    # correctness check against an f32 pure-JAX reference (kernel uses bf16
    # MXU operands with f32 accumulation -> slightly looser tolerance)
    emb = jnp.take(params["embedding"], doc_x, axis=0).reshape(d0 * d1, d2, embed_dim)
    ref_out, ref_h = ref_bilstm(emb, lengths.reshape(-1), params)
    ref_hidden = ref_h.reshape(d0, d1, -1)
    np.testing.assert_allclose(np.asarray(doc_output), np.asarray(ref_out),
                               rtol=2e-2, atol=2e-2)
    np.testing.assert_allclose(np.asarray(doc_hidden), np.asarray(ref_hidden),
                               rtol=2e-2, atol=2e-2)

    assert doc_output.shape == (d0 * d1, d2, 2 * hidden_dim)
    assert doc_hidden.shape == (d0, d1, 2 * hidden_dim)
    print("KERNEL_OK")
</pallas_src>

<mosaic_0001>
module attributes {stable_mosaic.version = 11 : i64} {
  func.func @bilstm_kernel(%arg0: i32, %arg1: memref<8x8x32xbf16, #tpu.memory_space<vmem>>, %arg2: memref<8x8x32xf32, #tpu.memory_space<vmem>>, %arg3: memref<32x256xbf16, #tpu.memory_space<vmem>>, %arg4: memref<32x256xbf16, #tpu.memory_space<vmem>>, %arg5: memref<1x256xf32, #tpu.memory_space<vmem>>, %arg6: memref<8x8x32xf32, #tpu.memory_space<vmem>>, %arg7: memref<8x8x32xf32, #tpu.memory_space<vmem>>, %arg8: memref<8x32xf32, #tpu.memory_space<vmem>>, %arg9: memref<8x32xf32, #tpu.memory_space<vmem>>, %arg10: memref<64x256xf32, #tpu.memory_space<vmem>>) attributes {dimension_semantics = [#tpu.dimension_semantics<parallel>], iteration_bounds = array<i64: 2>, scalar_prefetch = 0 : i64, scratch_operands = 1 : i64, tpu.core_type = #tpu.core_type<tc>, window_params = [{transform_indices = @transform_0, window_bounds = array<i64: 8, 8, 32>}, {transform_indices = @transform_1, window_bounds = array<i64: 8, 8, 32>}, {pipeline_mode = #tpu.pipeline_mode<synchronous>, transform_indices = @transform_2, window_bounds = array<i64: 32, 256>}, {pipeline_mode = #tpu.pipeline_mode<synchronous>, transform_indices = @transform_3, window_bounds = array<i64: 32, 256>}, {pipeline_mode = #tpu.pipeline_mode<synchronous>, transform_indices = @transform_4, window_bounds = array<i64: 1, 256>}, {transform_indices = @transform_5, window_bounds = array<i64: 8, 8, 32>}, {transform_indices = @transform_6, window_bounds = array<i64: 8, 8, 32>}, {transform_indices = @transform_7, window_bounds = array<i64: 8, 32>}, {transform_indices = @transform_8, window_bounds = array<i64: 8, 32>}]} {
    %c0 = arith.constant 0 : index
    %c0_0 = arith.constant 0 : index
    %0 = vector.load %arg3[%c0, %c0_0] : memref<32x256xbf16, #tpu.memory_space<vmem>>, vector<32x256xbf16>
    %c0_1 = arith.constant 0 : index
    %c0_2 = arith.constant 0 : index
    %1 = vector.load %arg5[%c0_1, %c0_2] : memref<1x256xf32, #tpu.memory_space<vmem>>, vector<1x256xf32>
    %c0_3 = arith.constant 0 : index
    %c0_4 = arith.constant 0 : index
    %c0_5 = arith.constant 0 : index
    %2 = vector.load %arg1[%c0_3, %c0_4, %c0_5] : memref<8x8x32xbf16, #tpu.memory_space<vmem>>, vector<1x8x32xbf16>
    %3 = vector.shape_cast %2 : vector<1x8x32xbf16> to vector<8x32xbf16>
    %cst = arith.constant dense<0.000000e+00> : vector<8x256xf32>
    %4 = tpu.matmul %3, %0, %cst {dimension_numbers = #tpu.dot_dimension_numbers<[1], [0], [0], [1], [0, 0, 1, 1], [], []>} : vector<8x32xbf16>, vector<32x256xbf16>, vector<8x256xf32> -> vector<8x256xf32>
    %5 = vector.broadcast %1 : vector<1x256xf32> to vector<8x256xf32>
    %6 = arith.addf %4, %5 : vector<8x256xf32>
    %c0_6 = arith.constant 0 : index
    %c0_7 = arith.constant 0 : index
    %7 = vector.load %arg10[%c0_6, %c0_7] : memref<64x256xf32, #tpu.memory_space<vmem>>, vector<8x256xf32>
    tpu.vector_store %arg10[%c0_6, %c0_7], %6 {strides = array<i32>} : memref<64x256xf32, #tpu.memory_space<vmem>>, vector<8x256xf32>,
    %c1 = arith.constant 1 : index
    %c0_8 = arith.constant 0 : index
    %c0_9 = arith.constant 0 : index
    %8 = vector.load %arg1[%c1, %c0_8, %c0_9] : memref<8x8x32xbf16, #tpu.memory_space<vmem>>, vector<1x8x32xbf16>
    %9 = vector.shape_cast %8 : vector<1x8x32xbf16> to vector<8x32xbf16>
    %cst_10 = arith.constant dense<0.000000e+00> : vector<8x256xf32>
    %10 = tpu.matmul %9, %0, %cst_10 {dimension_numbers = #tpu.dot_dimension_numbers<[1], [0], [0], [1], [0, 0, 1, 1], [], []>} : vector<8x32xbf16>, vector<32x256xbf16>, vector<8x256xf32> -> vector<8x256xf32>
    %11 = vector.broadcast %1 : vector<1x256xf32> to vector<8x256xf32>
    %12 = arith.addf %10, %11 : vector<8x256xf32>
    %c8 = arith.constant 8 : index
    %c0_11 = arith.constant 0 : index
    %13 = vector.load %arg10[%c8, %c0_11] : memref<64x256xf32, #tpu.memory_space<vmem>>, vector<8x256xf32>
    tpu.vector_store %arg10[%c8, %c0_11], %12 {strides = array<i32>} : memref<64x256xf32, #tpu.memory_space<vmem>>, vector<8x256xf32>,
    %c2 = arith.constant 2 : index
    %c0_12 = arith.constant 0 : index
    %c0_13 = arith.constant 0 : index
    %14 = vector.load %arg1[%c2, %c0_12, %c0_13] : memref<8x8x32xbf16, #tpu.memory_space<vmem>>, vector<1x8x32xbf16>
    %15 = vector.shape_cast %14 : vector<1x8x32xbf16> to vector<8x32xbf16>
    %cst_14 = arith.constant dense<0.000000e+00> : vector<8x256xf32>
    %16 = tpu.matmul %15, %0, %cst_14 {dimension_numbers = #tpu.dot_dimension_numbers<[1], [0], [0], [1], [0, 0, 1, 1], [], []>} : vector<8x32xbf16>, vector<32x256xbf16>, vector<8x256xf32> -> vector<8x256xf32>
    %17 = vector.broadcast %1 : vector<1x256xf32> to vector<8x256xf32>
    %18 = arith.addf %16, %17 : vector<8x256xf32>
    %c16 = arith.constant 16 : index
    %c0_15 = arith.constant 0 : index
    %19 = vector.load %arg10[%c16, %c0_15] : memref<64x256xf32, #tpu.memory_space<vmem>>, vector<8x256xf32>
    tpu.vector_store %arg10[%c16, %c0_15], %18 {strides = array<i32>} : memref<64x256xf32, #tpu.memory_space<vmem>>, vector<8x256xf32>,
    %c3 = arith.constant 3 : index
    %c0_16 = arith.constant 0 : index
    %c0_17 = arith.constant 0 : index
    %20 = vector.load %arg1[%c3, %c0_16, %c0_17] : memref<8x8x32xbf16, #tpu.memory_space<vmem>>, vector<1x8x32xbf16>
    %21 = vector.shape_cast %20 : vector<1x8x32xbf16> to vector<8x32xbf16>
    %cst_18 = arith.constant dense<0.000000e+00> : vector<8x256xf32>
    %22 = tpu.matmul %21, %0, %cst_18 {dimension_numbers = #tpu.dot_dimension_numbers<[1], [0], [0], [1], [0, 0, 1, 1], [], []>} : vector<8x32xbf16>, vector<32x256xbf16>, vector<8x256xf32> -> vector<8x256xf32>
    %23 = vector.broadcast %1 : vector<1x256xf32> to vector<8x256xf32>
    %24 = arith.addf %22, %23 : vector<8x256xf32>
    %c24 = arith.constant 24 : index
    %c0_19 = arith.constant 0 : index
    %25 = vector.load %arg10[%c24, %c0_19] : memref<64x256xf32, #tpu.memory_space<vmem>>, vector<8x256xf32>
    tpu.vector_store %arg10[%c24, %c0_19], %24 {strides = array<i32>} : memref<64x256xf32, #tpu.memory_space<vmem>>, vector<8x256xf32>,
    %c4 = arith.constant 4 : index
    %c0_20 = arith.constant 0 : index
    %c0_21 = arith.constant 0 : index
    %26 = vector.load %arg1[%c4, %c0_20, %c0_21] : memref<8x8x32xbf16, #tpu.memory_space<vmem>>, vector<1x8x32xbf16>
    %27 = vector.shape_cast %26 : vector<1x8x32xbf16> to vector<8x32xbf16>
    %cst_22 = arith.constant dense<0.000000e+00> : vector<8x256xf32>
    %28 = tpu.matmul %27, %0, %cst_22 {dimension_numbers = #tpu.dot_dimension_numbers<[1], [0], [0], [1], [0, 0, 1, 1], [], []>} : vector<8x32xbf16>, vector<32x256xbf16>, vector<8x256xf32> -> vector<8x256xf32>
    %29 = vector.broadcast %1 : vector<1x256xf32> to vector<8x256xf32>
    %30 = arith.addf %28, %29 : vector<8x256xf32>
    %c32 = arith.constant 32 : index
    %c0_23 = arith.constant 0 : index
    %31 = vector.load %arg10[%c32, %c0_23] : memref<64x256xf32, #tpu.memory_space<vmem>>, vector<8x256xf32>
    tpu.vector_store %arg10[%c32, %c0_23], %30 {strides = array<i32>} : memref<64x256xf32, #tpu.memory_space<vmem>>, vector<8x256xf32>,
    %c5 = arith.constant 5 : index
    %c0_24 = arith.constant 0 : index
    %c0_25 = arith.constant 0 : index
    %32 = vector.load %arg1[%c5, %c0_24, %c0_25] : memref<8x8x32xbf16, #tpu.memory_space<vmem>>, vector<1x8x32xbf16>
    %33 = vector.shape_cast %32 : vector<1x8x32xbf16> to vector<8x32xbf16>
    %cst_26 = arith.constant dense<0.000000e+00> : vector<8x256xf32>
    %34 = tpu.matmul %33, %0, %cst_26 {dimension_numbers = #tpu.dot_dimension_numbers<[1], [0], [0], [1], [0, 0, 1, 1], [], []>} : vector<8x32xbf16>, vector<32x256xbf16>, vector<8x256xf32> -> vector<8x256xf32>
    %35 = vector.broadcast %1 : vector<1x256xf32> to vector<8x256xf32>
    %36 = arith.addf %34, %35 : vector<8x256xf32>
    %c40 = arith.constant 40 : index
    %c0_27 = arith.constant 0 : index
    %37 = vector.load %arg10[%c40, %c0_27] : memref<64x256xf32, #tpu.memory_space<vmem>>, vector<8x256xf32>
    tpu.vector_store %arg10[%c40, %c0_27], %36 {strides = array<i32>} : memref<64x256xf32, #tpu.memory_space<vmem>>, vector<8x256xf32>,
    %c6 = arith.constant 6 : index
    %c0_28 = arith.constant 0 : index
    %c0_29 = arith.constant 0 : index
    %38 = vector.load %arg1[%c6, %c0_28, %c0_29] : memref<8x8x32xbf16, #tpu.memory_space<vmem>>, vector<1x8x32xbf16>
    %39 = vector.shape_cast %38 : vector<1x8x32xbf16> to vector<8x32xbf16>
    %cst_30 = arith.constant dense<0.000000e+00> : vector<8x256xf32>
    %40 = tpu.matmul %39, %0, %cst_30 {dimension_numbers = #tpu.dot_dimension_numbers<[1], [0], [0], [1], [0, 0, 1, 1], [], []>} : vector<8x32xbf16>, vector<32x256xbf16>, vector<8x256xf32> -> vector<8x256xf32>
    %41 = vector.broadcast %1 : vector<1x256xf32> to vector<8x256xf32>
    %42 = arith.addf %40, %41 : vector<8x256xf32>
    %c48 = arith.constant 48 : index
    %c0_31 = arith.constant 0 : index
    %43 = vector.load %arg10[%c48, %c0_31] : memref<64x256xf32, #tpu.memory_space<vmem>>, vector<8x256xf32>
    tpu.vector_store %arg10[%c48, %c0_31], %42 {strides = array<i32>} : memref<64x256xf32, #tpu.memory_space<vmem>>, vector<8x256xf32>,
    %c7 = arith.constant 7 : index
    %c0_32 = arith.constant 0 : index
    %c0_33 = arith.constant 0 : index
    %44 = vector.load %arg1[%c7, %c0_32, %c0_33] : memref<8x8x32xbf16, #tpu.memory_space<vmem>>, vector<1x8x32xbf16>
    %45 = vector.shape_cast %44 : vector<1x8x32xbf16> to vector<8x32xbf16>
    %cst_34 = arith.constant dense<0.000000e+00> : vector<8x256xf32>
    %46 = tpu.matmul %45, %0, %cst_34 {dimension_numbers = #tpu.dot_dimension_numbers<[1], [0], [0], [1], [0, 0, 1, 1], [], []>} : vector<8x32xbf16>, vector<32x256xbf16>, vector<8x256xf32> -> vector<8x256xf32>
    %47 = vector.broadcast %1 : vector<1x256xf32> to vector<8x256xf32>
    %48 = arith.addf %46, %47 : vector<8x256xf32>
    %c56 = arith.constant 56 : index
    %c0_35 = arith.constant 0 : index
    %49 = vector.load %arg10[%c56, %c0_35] : memref<64x256xf32, #tpu.memory_space<vmem>>, vector<8x256xf32>
    tpu.vector_store %arg10[%c56, %c0_35], %48 {strides = array<i32>} : memref<64x256xf32, #tpu.memory_space<vmem>>, vector<8x256xf32>,
    %c0_36 = arith.constant 0 : index
    %c0_37 = arith.constant 0 : index
    %50 = vector.load %arg4[%c0_36, %c0_37] : memref<32x256xbf16, #tpu.memory_space<vmem>>, vector<32x256xbf16>
    %cst_38 = arith.constant 0.000000e+00 : f32
    %51 = vector.broadcast %cst_38 : f32 to vector<16x32xf32>
    %c0_i32 = arith.constant 0 : i32
    %c7_i32 = arith.constant 7 : i32
    %52 = arith.subi %c7_i32, %c0_i32 : i32
    %c8_i32 = arith.constant 8 : i32
    %53 = arith.muli %c0_i32, %c8_i32 : i32
    %c8_i32_39 = arith.constant 8 : i32
    %54 = arith.muli %52, %c8_i32_39 : i32
    %55 = arith.truncf %51 : vector<16x32xf32> to vector<16x32xbf16>
    %cst_40 = arith.constant dense<0.000000e+00> : vector<16x256xf32>
    %56 = tpu.matmul %55, %50, %cst_40 {dimension_numbers = #tpu.dot_dimension_numbers<[1], [0], [0], [1], [0, 0, 1, 1], [], []>} : vector<16x32xbf16>, vector<32x256xbf16>, vector<16x256xf32> -> vector<16x256xf32>
    %57 = arith.index_cast %53 : i32 to index
    %c0_41 = arith.constant 0 : index
    %58 = vector.load %arg10[%57, %c0_41] : memref<64x256xf32, #tpu.memory_space<vmem>>, vector<8x128xf32>
    %59 = vector.extract_strided_slice %56 {offsets = [0, 0], sizes = [8, 128], strides = [1, 1]} : vector<16x256xf32> to vector<8x128xf32>
    %60 = arith.addf %58, %59 : vector<8x128xf32>
    %61 = arith.index_cast %54 : i32 to index
    %c128 = arith.constant 128 : index
    %62 = vector.load %arg10[%61, %c128] : memref<64x256xf32, #tpu.memory_space<vmem>>, vector<8x128xf32>
    %63 = vector.extract_strided_slice %56 {offsets = [8, 128], sizes = [8, 128], strides = [1, 1]} : vector<16x256xf32> to vector<8x128xf32>
    %64 = arith.addf %62, %63 : vector<8x128xf32>
    %65 = tpu.concatenate %60, %64 in 0 : vector<8x128xf32>, vector<8x128xf32> -> vector<16x128xf32>
    %66 = vector.extract_strided_slice %65 {offsets = [0, 0], sizes = [16, 32], strides = [1, 1]} : vector<16x128xf32> to vector<16x32xf32>
    %67 = arith.negf %66 : vector<16x32xf32>
    %68 = math.exp %67 : vector<16x32xf32>
    %cst_42 = arith.constant 1.000000e+00 : f32
    %69 = vector.broadcast %cst_42 : f32 to vector<16x32xf32>
    %70 = arith.addf %69, %68 : vector<16x32xf32>
    %71 = arith.divf %69, %70 : vector<16x32xf32>
    %72 = vector.extract_strided_slice %65 {offsets = [0, 32], sizes = [16, 32], strides = [1, 1]} : vector<16x128xf32> to vector<16x32xf32>
    %73 = arith.negf %72 : vector<16x32xf32>
    %74 = math.exp %73 : vector<16x32xf32>
    %cst_43 = arith.constant 1.000000e+00 : f32
    %75 = vector.broadcast %cst_43 : f32 to vector<16x32xf32>
    %76 = arith.addf %75, %74 : vector<16x32xf32>
    %77 = arith.divf %75, %76 : vector<16x32xf32>
    %78 = vector.extract_strided_slice %65 {offsets = [0, 64], sizes = [16, 32], strides = [1, 1]} : vector<16x128xf32> to vector<16x32xf32>
    %79 = math.tanh %78 : vector<16x32xf32>
    %80 = vector.extract_strided_slice %65 {offsets = [0, 96], sizes = [16, 32], strides = [1, 1]} : vector<16x128xf32> to vector<16x32xf32>
    %81 = arith.negf %80 : vector<16x32xf32>
    %82 = math.exp %81 : vector<16x32xf32>
    %cst_44 = arith.constant 1.000000e+00 : f32
    %83 = vector.broadcast %cst_44 : f32 to vector<16x32xf32>
    %84 = arith.addf %83, %82 : vector<16x32xf32>
    %85 = arith.divf %83, %84 : vector<16x32xf32>
    %86 = arith.mulf %77, %51 : vector<16x32xf32>
    %87 = arith.mulf %71, %79 : vector<16x32xf32>
    %88 = arith.addf %86, %87 : vector<16x32xf32>
    %89 = math.tanh %88 : vector<16x32xf32>
    %90 = arith.mulf %85, %89 : vector<16x32xf32>
    %91 = arith.index_cast %c0_i32 : i32 to index
    %c0_45 = arith.constant 0 : index
    %c0_46 = arith.constant 0 : index
    %92 = vector.load %arg2[%91, %c0_45, %c0_46] : memref<8x8x32xf32, #tpu.memory_space<vmem>>, vector<1x8x32xf32>
    %93 = vector.shape_cast %92 : vector<1x8x32xf32> to vector<8x32xf32>
    %94 = arith.index_cast %52 : i32 to index
    %c0_47 = arith.constant 0 : index
    %c0_48 = arith.constant 0 : index
    %95 = vector.load %arg2[%94, %c0_47, %c0_48] : memref<8x8x32xf32, #tpu.memory_space<vmem>>, vector<1x8x32xf32>
    %96 = vector.shape_cast %95 : vector<1x8x32xf32> to vector<8x32xf32>
    %97 = tpu.concatenate %93, %96 in 0 : vector<8x32xf32>, vector<8x32xf32> -> vector<16x32xf32>
    %cst_49 = arith.constant 0.000000e+00 : f32
    %98 = vector.broadcast %cst_49 : f32 to vector<16x32xf32>
    %99 = arith.cmpf one, %97, %98 : vector<16x32xf32>
    %100 = arith.select %99, %88, %51 : vector<16x32xi1>, vector<16x32xf32>
    %101 = arith.select %99, %90, %51 : vector<16x32xi1>, vector<16x32xf32>
    %cst_50 = arith.constant 0.000000e+00 : f32
    %102 = vector.broadcast %cst_50 : f32 to vector<16x32xf32>
    %103 = arith.select %99, %90, %102 : vector<16x32xi1>, vector<16x32xf32>
    %104 = vector.extract_strided_slice %103 {offsets = [0, 0], sizes = [8, 32], strides = [1, 1]} : vector<16x32xf32> to vector<8x32xf32>
    %105 = arith.index_cast %c0_i32 : i32 to index
    %c0_51 = arith.constant 0 : index
    %c0_52 = arith.constant 0 : index
    %106 = vector.load %arg6[%105, %c0_51, %c0_52] : memref<8x8x32xf32, #tpu.memory_space<vmem>>, vector<1x8x32xf32>
    %107 = vector.shape_cast %106 : vector<1x8x32xf32> to vector<8x32xf32>
    %108 = vector.shape_cast %104 : vector<8x32xf32> to vector<1x8x32xf32>
    tpu.vector_store %arg6[%105, %c0_51, %c0_52], %108 {strides = array<i32>} : memref<8x8x32xf32, #tpu.memory_space<vmem>>, vector<1x8x32xf32>,
    %109 = vector.extract_strided_slice %103 {offsets = [8, 0], sizes = [8, 32], strides = [1, 1]} : vector<16x32xf32> to vector<8x32xf32>
    %110 = arith.index_cast %52 : i32 to index
    %c0_53 = arith.constant 0 : index
    %c0_54 = arith.constant 0 : index
    %111 = vector.load %arg7[%110, %c0_53, %c0_54] : memref<8x8x32xf32, #tpu.memory_space<vmem>>, vector<1x8x32xf32>
    %112 = vector.shape_cast %111 : vector<1x8x32xf32> to vector<8x32xf32>
    %113 = vector.shape_cast %109 : vector<8x32xf32> to vector<1x8x32xf32>
    tpu.vector_store %arg7[%110, %c0_53, %c0_54], %113 {strides = array<i32>} : memref<8x8x32xf32, #tpu.memory_space<vmem>>, vector<1x8x32xf32>,
    %c1_i32 = arith.constant 1 : i32
    %c7_i32_55 = arith.constant 7 : i32
    %114 = arith.subi %c7_i32_55, %c1_i32 : i32
    %c8_i32_56 = arith.constant 8 : i32
    %115 = arith.muli %c1_i32, %c8_i32_56 : i32
    %c8_i32_57 = arith.constant 8 : i32
    %116 = arith.muli %114, %c8_i32_57 : i32
    %117 = arith.truncf %101 : vector<16x32xf32> to vector<16x32xbf16>
    %cst_58 = arith.constant dense<0.000000e+00> : vector<16x256xf32>
    %118 = tpu.matmul %117, %50, %cst_58 {dimension_numbers = #tpu.dot_dimension_numbers<[1], [0], [0], [1], [0, 0, 1, 1], [], []>} : vector<16x32xbf16>, vector<32x256xbf16>, vector<16x256xf32> -> vector<16x256xf32>
    %119 = arith.index_cast %115 : i32 to index
    %c0_59 = arith.constant 0 : index
    %120 = vector.load %arg10[%119, %c0_59] : memref<64x256xf32, #tpu.memory_space<vmem>>, vector<8x128xf32>
    %121 = vector.extract_strided_slice %118 {offsets = [0, 0], sizes = [8, 128], strides = [1, 1]} : vector<16x256xf32> to vector<8x128xf32>
    %122 = arith.addf %120, %121 : vector<8x128xf32>
    %123 = arith.index_cast %116 : i32 to index
    %c128_60 = arith.constant 128 : index
    %124 = vector.load %arg10[%123, %c128_60] : memref<64x256xf32, #tpu.memory_space<vmem>>, vector<8x128xf32>
    %125 = vector.extract_strided_slice %118 {offsets = [8, 128], sizes = [8, 128], strides = [1, 1]} : vector<16x256xf32> to vector<8x128xf32>
    %126 = arith.addf %124, %125 : vector<8x128xf32>
    %127 = tpu.concatenate %122, %126 in 0 : vector<8x128xf32>, vector<8x128xf32> -> vector<16x128xf32>
    %128 = vector.extract_strided_slice %127 {offsets = [0, 0], sizes = [16, 32], strides = [1, 1]} : vector<16x128xf32> to vector<16x32xf32>
    %129 = arith.negf %128 : vector<16x32xf32>
    %130 = math.exp %129 : vector<16x32xf32>
    %cst_61 = arith.constant 1.000000e+00 : f32
    %131 = vector.broadcast %cst_61 : f32 to vector<16x32xf32>
    %132 = arith.addf %131, %130 : vector<16x32xf32>
    %133 = arith.divf %131, %132 : vector<16x32xf32>
    %134 = vector.extract_strided_slice %127 {offsets = [0, 32], sizes = [16, 32], strides = [1, 1]} : vector<16x128xf32> to vector<16x32xf32>
    %135 = arith.negf %134 : vector<16x32xf32>
    %136 = math.exp %135 : vector<16x32xf32>
    %cst_62 = arith.constant 1.000000e+00 : f32
    %137 = vector.broadcast %cst_62 : f32 to vector<16x32xf32>
    %138 = arith.addf %137, %136 : vector<16x32xf32>
    %139 = arith.divf %137, %138 : vector<16x32xf32>
    %140 = vector.extract_strided_slice %127 {offsets = [0, 64], sizes = [16, 32], strides = [1, 1]} : vector<16x128xf32> to vector<16x32xf32>
    %141 = math.tanh %140 : vector<16x32xf32>
    %142 = vector.extract_strided_slice %127 {offsets = [0, 96], sizes = [16, 32], strides = [1, 1]} : vector<16x128xf32> to vector<16x32xf32>
    %143 = arith.negf %142 : vector<16x32xf32>
    %144 = math.exp %143 : vector<16x32xf32>
    %cst_63 = arith.constant 1.000000e+00 : f32
    %145 = vector.broadcast %cst_63 : f32 to vector<16x32xf32>
    %146 = arith.addf %145, %144 : vector<16x32xf32>
    %147 = arith.divf %145, %146 : vector<16x32xf32>
    %148 = arith.mulf %139, %100 : vector<16x32xf32>
    %149 = arith.mulf %133, %141 : vector<16x32xf32>
    %150 = arith.addf %148, %149 : vector<16x32xf32>
    %151 = math.tanh %150 : vector<16x32xf32>
    %152 = arith.mulf %147, %151 : vector<16x32xf32>
    %153 = arith.index_cast %c1_i32 : i32 to index
    %c0_64 = arith.constant 0 : index
    %c0_65 = arith.constant 0 : index
    %154 = vector.load %arg2[%153, %c0_64, %c0_65] : memref<8x8x32xf32, #tpu.memory_space<vmem>>, vector<1x8x32xf32>
    %155 = vector.shape_cast %154 : vector<1x8x32xf32> to vector<8x32xf32>
    %156 = arith.index_cast %114 : i32 to index
    %c0_66 = arith.constant 0 : index
    %c0_67 = arith.constant 0 : index
    %157 = vector.load %arg2[%156, %c0_66, %c0_67] : memref<8x8x32xf32, #tpu.memory_space<vmem>>, vector<1x8x32xf32>
    %158 = vector.shape_cast %157 : vector<1x8x32xf32> to vector<8x32xf32>
    %159 = tpu.concatenate %155, %158 in 0 : vector<8x32xf32>, vector<8x32xf32> -> vector<16x32xf32>
    %cst_68 = arith.constant 0.000000e+00 : f32
    %160 = vector.broadcast %cst_68 : f32 to vector<16x32xf32>
    %161 = arith.cmpf one, %159, %160 : vector<16x32xf32>
    %162 = arith.select %161, %150, %100 : vector<16x32xi1>, vector<16x32xf32>
    %163 = arith.select %161, %152, %101 : vector<16x32xi1>, vector<16x32xf32>
    %cst_69 = arith.constant 0.000000e+00 : f32
    %164 = vector.broadcast %cst_69 : f32 to vector<16x32xf32>
    %165 = arith.select %161, %152, %164 : vector<16x32xi1>, vector<16x32xf32>
    %166 = vector.extract_strided_slice %165 {offsets = [0, 0], sizes = [8, 32], strides = [1, 1]} : vector<16x32xf32> to vector<8x32xf32>
    %167 = arith.index_cast %c1_i32 : i32 to index
    %c0_70 = arith.constant 0 : index
    %c0_71 = arith.constant 0 : index
    %168 = vector.load %arg6[%167, %c0_70, %c0_71] : memref<8x8x32xf32, #tpu.memory_space<vmem>>, vector<1x8x32xf32>
    %169 = vector.shape_cast %168 : vector<1x8x32xf32> to vector<8x32xf32>
    %170 = vector.shape_cast %166 : vector<8x32xf32> to vector<1x8x32xf32>
    tpu.vector_store %arg6[%167, %c0_70, %c0_71], %170 {strides = array<i32>} : memref<8x8x32xf32, #tpu.memory_space<vmem>>, vector<1x8x32xf32>,
    %171 = vector.extract_strided_slice %165 {offsets = [8, 0], sizes = [8, 32], strides = [1, 1]} : vector<16x32xf32> to vector<8x32xf32>
    %172 = arith.index_cast %114 : i32 to index
    %c0_72 = arith.constant 0 : index
    %c0_73 = arith.constant 0 : index
    %173 = vector.load %arg7[%172, %c0_72, %c0_73] : memref<8x8x32xf32, #tpu.memory_space<vmem>>, vector<1x8x32xf32>
    %174 = vector.shape_cast %173 : vector<1x8x32xf32> to vector<8x32xf32>
    %175 = vector.shape_cast %171 : vector<8x32xf32> to vector<1x8x32xf32>
    tpu.vector_store %arg7[%172, %c0_72, %c0_73], %175 {strides = array<i32>} : memref<8x8x32xf32, #tpu.memory_space<vmem>>, vector<1x8x32xf32>,
    %c2_i32 = arith.constant 2 : i32
    %c7_i32_74 = arith.constant 7 : i32
    %176 = arith.subi %c7_i32_74, %c2_i32 : i32
    %c8_i32_75 = arith.constant 8 : i32
    %177 = arith.muli %c2_i32, %c8_i32_75 : i32
    %c8_i32_76 = arith.constant 8 : i32
    %178 = arith.muli %176, %c8_i32_76 : i32
    %179 = arith.truncf %163 : vector<16x32xf32> to vector<16x32xbf16>
    %cst_77 = arith.constant dense<0.000000e+00> : vector<16x256xf32>
    %180 = tpu.matmul %179, %50, %cst_77 {dimension_numbers = #tpu.dot_dimension_numbers<[1], [0], [0], [1], [0, 0, 1, 1], [], []>} : vector<16x32xbf16>, vector<32x256xbf16>, vector<16x256xf32> -> vector<16x256xf32>
    %181 = arith.index_cast %177 : i32 to index
    %c0_78 = arith.constant 0 : index
    %182 = vector.load %arg10[%181, %c0_78] : memref<64x256xf32, #tpu.memory_space<vmem>>, vector<8x128xf32>
    %183 = vector.extract_strided_slice %180 {offsets = [0, 0], sizes = [8, 128], strides = [1, 1]} : vector<16x256xf32> to vector<8x128xf32>
    %184 = arith.addf %182, %183 : vector<8x128xf32>
    %185 = arith.index_cast %178 : i32 to index
    %c128_79 = arith.constant 128 : index
    %186 = vector.load %arg10[%185, %c128_79] : memref<64x256xf32, #tpu.memory_space<vmem>>, vector<8x128xf32>
    %187 = vector.extract_strided_slice %180 {offsets = [8, 128], sizes = [8, 128], strides = [1, 1]} : vector<16x256xf32> to vector<8x128xf32>
    %188 = arith.addf %186, %187 : vector<8x128xf32>
    %189 = tpu.concatenate %184, %188 in 0 : vector<8x128xf32>, vector<8x128xf32> -> vector<16x128xf32>
    %190 = vector.extract_strided_slice %189 {offsets = [0, 0], sizes = [16, 32], strides = [1, 1]} : vector<16x128xf32> to vector<16x32xf32>
    %191 = arith.negf %190 : vector<16x32xf32>
    %192 = math.exp %191 : vector<16x32xf32>
    %cst_80 = arith.constant 1.000000e+00 : f32
    %193 = vector.broadcast %cst_80 : f32 to vector<16x32xf32>
    %194 = arith.addf %193, %192 : vector<16x32xf32>
    %195 = arith.divf %193, %194 : vector<16x32xf32>
    %196 = vector.extract_strided_slice %189 {offsets = [0, 32], sizes = [16, 32], strides = [1, 1]} : vector<16x128xf32> to vector<16x32xf32>
    %197 = arith.negf %196 : vector<16x32xf32>
    %198 = math.exp %197 : vector<16x32xf32>
    %cst_81 = arith.constant 1.000000e+00 : f32
    %199 = vector.broadcast %cst_81 : f32 to vector<16x32xf32>
    %200 = arith.addf %199, %198 : vector<16x32xf32>
    %201 = arith.divf %199, %200 : vector<16x32xf32>
    %202 = vector.extract_strided_slice %189 {offsets = [0, 64], sizes = [16, 32], strides = [1, 1]} : vector<16x128xf32> to vector<16x32xf32>
    %203 = math.tanh %202 : vector<16x32xf32>
    %204 = vector.extract_strided_slice %189 {offsets = [0, 96], sizes = [16, 32], strides = [1, 1]} : vector<16x128xf32> to vector<16x32xf32>
    %205 = arith.negf %204 : vector<16x32xf32>
    %206 = math.exp %205 : vector<16x32xf32>
    %cst_82 = arith.constant 1.000000e+00 : f32
    %207 = vector.broadcast %cst_82 : f32 to vector<16x32xf32>
    %208 = arith.addf %207, %206 : vector<16x32xf32>
    %209 = arith.divf %207, %208 : vector<16x32xf32>
    %210 = arith.mulf %201, %162 : vector<16x32xf32>
    %211 = arith.mulf %195, %203 : vector<16x32xf32>
    %212 = arith.addf %210, %211 : vector<16x32xf32>
    %213 = math.tanh %212 : vector<16x32xf32>
    %214 = arith.mulf %209, %213 : vector<16x32xf32>
    %215 = arith.index_cast %c2_i32 : i32 to index
    %c0_83 = arith.constant 0 : index
    %c0_84 = arith.constant 0 : index
    %216 = vector.load %arg2[%215, %c0_83, %c0_84] : memref<8x8x32xf32, #tpu.memory_space<vmem>>, vector<1x8x32xf32>
    %217 = vector.shape_cast %216 : vector<1x8x32xf32> to vector<8x32xf32>
    %218 = arith.index_cast %176 : i32 to index
    %c0_85 = arith.constant 0 : index
    %c0_86 = arith.constant 0 : index
    %219 = vector.load %arg2[%218, %c0_85, %c0_86] : memref<8x8x32xf32, #tpu.memory_space<vmem>>, vector<1x8x32xf32>
    %220 = vector.shape_cast %219 : vector<1x8x32xf32> to vector<8x32xf32>
    %221 = tpu.concatenate %217, %220 in 0 : vector<8x32xf32>, vector<8x32xf32> -> vector<16x32xf32>
    %cst_87 = arith.constant 0.000000e+00 : f32
    %222 = vector.broadcast %cst_87 : f32 to vector<16x32xf32>
    %223 = arith.cmpf one, %221, %222 : vector<16x32xf32>
    %224 = arith.select %223, %212, %162 : vector<16x32xi1>, vector<16x32xf32>
    %225 = arith.select %223, %214, %163 : vector<16x32xi1>, vector<16x32xf32>
    %cst_88 = arith.constant 0.000000e+00 : f32
    %226 = vector.broadcast %cst_88 : f32 to vector<16x32xf32>
    %227 = arith.select %223, %214, %226 : vector<16x32xi1>, vector<16x32xf32>
    %228 = vector.extract_strided_slice %227 {offsets = [0, 0], sizes = [8, 32], strides = [1, 1]} : vector<16x32xf32> to vector<8x32xf32>
    %229 = arith.index_cast %c2_i32 : i32 to index
    %c0_89 = arith.constant 0 : index
    %c0_90 = arith.constant 0 : index
    %230 = vector.load %arg6[%229, %c0_89, %c0_90] : memref<8x8x32xf32, #tpu.memory_space<vmem>>, vector<1x8x32xf32>
    %231 = vector.shape_cast %230 : vector<1x8x32xf32> to vector<8x32xf32>
    %232 = vector.shape_cast %228 : vector<8x32xf32> to vector<1x8x32xf32>
    tpu.vector_store %arg6[%229, %c0_89, %c0_90], %232 {strides = array<i32>} : memref<8x8x32xf32, #tpu.memory_space<vmem>>, vector<1x8x32xf32>,
    %233 = vector.extract_strided_slice %227 {offsets = [8, 0], sizes = [8, 32], strides = [1, 1]} : vector<16x32xf32> to vector<8x32xf32>
    %234 = arith.index_cast %176 : i32 to index
    %c0_91 = arith.constant 0 : index
    %c0_92 = arith.constant 0 : index
    %235 = vector.load %arg7[%234, %c0_91, %c0_92] : memref<8x8x32xf32, #tpu.memory_space<vmem>>, vector<1x8x32xf32>
    %236 = vector.shape_cast %235 : vector<1x8x32xf32> to vector<8x32xf32>
    %237 = vector.shape_cast %233 : vector<8x32xf32> to vector<1x8x32xf32>
    tpu.vector_store %arg7[%234, %c0_91, %c0_92], %237 {strides = array<i32>} : memref<8x8x32xf32, #tpu.memory_space<vmem>>, vector<1x8x32xf32>,
    %c3_i32 = arith.constant 3 : i32
    %c7_i32_93 = arith.constant 7 : i32
    %238 = arith.subi %c7_i32_93, %c3_i32 : i32
    %c8_i32_94 = arith.constant 8 : i32
    %239 = arith.muli %c3_i32, %c8_i32_94 : i32
    %c8_i32_95 = arith.constant 8 : i32
    %240 = arith.muli %238, %c8_i32_95 : i32
    %241 = arith.truncf %225 : vector<16x32xf32> to vector<16x32xbf16>
    %cst_96 = arith.constant dense<0.000000e+00> : vector<16x256xf32>
    %242 = tpu.matmul %241, %50, %cst_96 {dimension_numbers = #tpu.dot_dimension_numbers<[1], [0], [0], [1], [0, 0, 1, 1], [], []>} : vector<16x32xbf16>, vector<32x256xbf16>, vector<16x256xf32> -> vector<16x256xf32>
    %243 = arith.index_cast %239 : i32 to index
    %c0_97 = arith.constant 0 : index
    %244 = vector.load %arg10[%243, %c0_97] : memref<64x256xf32, #tpu.memory_space<vmem>>, vector<8x128xf32>
    %245 = vector.extract_strided_slice %242 {offsets = [0, 0], sizes = [8, 128], strides = [1, 1]} : vector<16x256xf32> to vector<8x128xf32>
    %246 = arith.addf %244, %245 : vector<8x128xf32>
    %247 = arith.index_cast %240 : i32 to index
    %c128_98 = arith.constant 128 : index
    %248 = vector.load %arg10[%247, %c128_98] : memref<64x256xf32, #tpu.memory_space<vmem>>, vector<8x128xf32>
    %249 = vector.extract_strided_slice %242 {offsets = [8, 128], sizes = [8, 128], strides = [1, 1]} : vector<16x256xf32> to vector<8x128xf32>
    %250 = arith.addf %248, %249 : vector<8x128xf32>
    %251 = tpu.concatenate %246, %250 in 0 : vector<8x128xf32>, vector<8x128xf32> -> vector<16x128xf32>
    %252 = vector.extract_strided_slice %251 {offsets = [0, 0], sizes = [16, 32], strides = [1, 1]} : vector<16x128xf32> to vector<16x32xf32>
    %253 = arith.negf %252 : vector<16x32xf32>
    %254 = math.exp %253 : vector<16x32xf32>
    %cst_99 = arith.constant 1.000000e+00 : f32
    %255 = vector.broadcast %cst_99 : f32 to vector<16x32xf32>
    %256 = arith.addf %255, %254 : vector<16x32xf32>
    %257 = arith.divf %255, %256 : vector<16x32xf32>
    %258 = vector.extract_strided_slice %251 {offsets = [0, 32], sizes = [16, 32], strides = [1, 1]} : vector<16x128xf32> to vector<16x32xf32>
    %259 = arith.negf %258 : vector<16x32xf32>
    %260 = math.exp %259 : vector<16x32xf32>
    %cst_100 = arith.constant 1.000000e+00 : f32
    %261 = vector.broadcast %cst_100 : f32 to vector<16x32xf32>
    %262 = arith.addf %261, %260 : vector<16x32xf32>
    %263 = arith.divf %261, %262 : vector<16x32xf32>
    %264 = vector.extract_strided_slice %251 {offsets = [0, 64], sizes = [16, 32], strides = [1, 1]} : vector<16x128xf32> to vector<16x32xf32>
    %265 = math.tanh %264 : vector<16x32xf32>
    %266 = vector.extract_strided_slice %251 {offsets = [0, 96], sizes = [16, 32], strides = [1, 1]} : vector<16x128xf32> to vector<16x32xf32>
    %267 = arith.negf %266 : vector<16x32xf32>
    %268 = math.exp %267 : vector<16x32xf32>
    %cst_101 = arith.constant 1.000000e+00 : f32
    %269 = vector.broadcast %cst_101 : f32 to vector<16x32xf32>
    %270 = arith.addf %269, %268 : vector<16x32xf32>
    %271 = arith.divf %269, %270 : vector<16x32xf32>
    %272 = arith.mulf %263, %224 : vector<16x32xf32>
    %273 = arith.mulf %257, %265 : vector<16x32xf32>
    %274 = arith.addf %272, %273 : vector<16x32xf32>
    %275 = math.tanh %274 : vector<16x32xf32>
    %276 = arith.mulf %271, %275 : vector<16x32xf32>
    %277 = arith.index_cast %c3_i32 : i32 to index
    %c0_102 = arith.constant 0 : index
    %c0_103 = arith.constant 0 : index
    %278 = vector.load %arg2[%277, %c0_102, %c0_103] : memref<8x8x32xf32, #tpu.memory_space<vmem>>, vector<1x8x32xf32>
    %279 = vector.shape_cast %278 : vector<1x8x32xf32> to vector<8x32xf32>
    %280 = arith.index_cast %238 : i32 to index
    %c0_104 = arith.constant 0 : index
    %c0_105 = arith.constant 0 : index
    %281 = vector.load %arg2[%280, %c0_104, %c0_105] : memref<8x8x32xf32, #tpu.memory_space<vmem>>, vector<1x8x32xf32>
    %282 = vector.shape_cast %281 : vector<1x8x32xf32> to vector<8x32xf32>
    %283 = tpu.concatenate %279, %282 in 0 : vector<8x32xf32>, vector<8x32xf32> -> vector<16x32xf32>
    %cst_106 = arith.constant 0.000000e+00 : f32
    %284 = vector.broadcast %cst_106 : f32 to vector<16x32xf32>
    %285 = arith.cmpf one, %283, %284 : vector<16x32xf32>
    %286 = arith.select %285, %274, %224 : vector<16x32xi1>, vector<16x32xf32>
    %287 = arith.select %285, %276, %225 : vector<16x32xi1>, vector<16x32xf32>
    %cst_107 = arith.constant 0.000000e+00 : f32
    %288 = vector.broadcast %cst_107 : f32 to vector<16x32xf32>
    %289 = arith.select %285, %276, %288 : vector<16x32xi1>, vector<16x32xf32>
    %290 = vector.extract_strided_slice %289 {offsets = [0, 0], sizes = [8, 32], strides = [1, 1]} : vector<16x32xf32> to vector<8x32xf32>
    %291 = arith.index_cast %c3_i32 : i32 to index
    %c0_108 = arith.constant 0 : index
    %c0_109 = arith.constant 0 : index
    %292 = vector.load %arg6[%291, %c0_108, %c0_109] : memref<8x8x32xf32, #tpu.memory_space<vmem>>, vector<1x8x32xf32>
    %293 = vector.shape_cast %292 : vector<1x8x32xf32> to vector<8x32xf32>
    %294 = vector.shape_cast %290 : vector<8x32xf32> to vector<1x8x32xf32>
    tpu.vector_store %arg6[%291, %c0_108, %c0_109], %294 {strides = array<i32>} : memref<8x8x32xf32, #tpu.memory_space<vmem>>, vector<1x8x32xf32>,
    %295 = vector.extract_strided_slice %289 {offsets = [8, 0], sizes = [8, 32], strides = [1, 1]} : vector<16x32xf32> to vector<8x32xf32>
    %296 = arith.index_cast %238 : i32 to index
    %c0_110 = arith.constant 0 : index
    %c0_111 = arith.constant 0 : index
    %297 = vector.load %arg7[%296, %c0_110, %c0_111] : memref<8x8x32xf32, #tpu.memory_space<vmem>>, vector<1x8x32xf32>
    %298 = vector.shape_cast %297 : vector<1x8x32xf32> to vector<8x32xf32>
    %299 = vector.shape_cast %295 : vector<8x32xf32> to vector<1x8x32xf32>
    tpu.vector_store %arg7[%296, %c0_110, %c0_111], %299 {strides = array<i32>} : memref<8x8x32xf32, #tpu.memory_space<vmem>>, vector<1x8x32xf32>,
    %c4_i32 = arith.constant 4 : i32
    %c7_i32_112 = arith.constant 7 : i32
    %300 = arith.subi %c7_i32_112, %c4_i32 : i32
    %c8_i32_113 = arith.constant 8 : i32
    %301 = arith.muli %c4_i32, %c8_i32_113 : i32
    %c8_i32_114 = arith.constant 8 : i32
    %302 = arith.muli %300, %c8_i32_114 : i32
    %303 = arith.truncf %287 : vector<16x32xf32> to vector<16x32xbf16>
    %cst_115 = arith.constant dense<0.000000e+00> : vector<16x256xf32>
    %304 = tpu.matmul %303, %50, %cst_115 {dimension_numbers = #tpu.dot_dimension_numbers<[1], [0], [0], [1], [0, 0, 1, 1], [], []>} : vector<16x32xbf16>, vector<32x256xbf16>, vector<16x256xf32> -> vector<16x256xf32>
    %305 = arith.index_cast %301 : i32 to index
    %c0_116 = arith.constant 0 : index
    %306 = vector.load %arg10[%305, %c0_116] : memref<64x256xf32, #tpu.memory_space<vmem>>, vector<8x128xf32>
    %307 = vector.extract_strided_slice %304 {offsets = [0, 0], sizes = [8, 128], strides = [1, 1]} : vector<16x256xf32> to vector<8x128xf32>
    %308 = arith.addf %306, %307 : vector<8x128xf32>
    %309 = arith.index_cast %302 : i32 to index
    %c128_117 = arith.constant 128 : index
    %310 = vector.load %arg10[%309, %c128_117] : memref<64x256xf32, #tpu.memory_space<vmem>>, vector<8x128xf32>
    %311 = vector.extract_strided_slice %304 {offsets = [8, 128], sizes = [8, 128], strides = [1, 1]} : vector<16x256xf32> to vector<8x128xf32>
    %312 = arith.addf %310, %311 : vector<8x128xf32>
    %313 = tpu.concatenate %308, %312 in 0 : vector<8x128xf32>, vector<8x128xf32> -> vector<16x128xf32>
    %314 = vector.extract_strided_slice %313 {offsets = [0, 0], sizes = [16, 32], strides = [1, 1]} : vector<16x128xf32> to vector<16x32xf32>
    %315 = arith.negf %314 : vector<16x32xf32>
    %316 = math.exp %315 : vector<16x32xf32>
    %cst_118 = arith.constant 1.000000e+00 : f32
    %317 = vector.broadcast %cst_118 : f32 to vector<16x32xf32>
    %318 = arith.addf %317, %316 : vector<16x32xf32>
    %319 = arith.divf %317, %318 : vector<16x32xf32>
    %320 = vector.extract_strided_slice %313 {offsets = [0, 32], sizes = [16, 32], strides = [1, 1]} : vector<16x128xf32> to vector<16x32xf32>
    %321 = arith.negf %320 : vector<16x32xf32>
    %322 = math.exp %321 : vector<16x32xf32>
    %cst_119 = arith.constant 1.000000e+00 : f32
    %323 = vector.broadcast %cst_119 : f32 to vector<16x32xf32>
    %324 = arith.addf %323, %322 : vector<16x32xf32>
    %325 = arith.divf %323, %324 : vector<16x32xf32>
    %326 = vector.extract_strided_slice %313 {offsets = [0, 64], sizes = [16, 32], strides = [1, 1]} : vector<16x128xf32> to vector<16x32xf32>
    %327 = math.tanh %326 : vector<16x32xf32>
    %328 = vector.extract_strided_slice %313 {offsets = [0, 96], sizes = [16, 32], strides = [1, 1]} : vector<16x128xf32> to vector<16x32xf32>
    %329 = arith.negf %328 : vector<16x32xf32>
    %330 = math.exp %329 : vector<16x32xf32>
    %cst_120 = arith.constant 1.000000e+00 : f32
    %331 = vector.broadcast %cst_120 : f32 to vector<16x32xf32>
    %332 = arith.addf %331, %330 : vector<16x32xf32>
    %333 = arith.divf %331, %332 : vector<16x32xf32>
    %334 = arith.mulf %325, %286 : vector<16x32xf32>
    %335 = arith.mulf %319, %327 : vector<16x32xf32>
    %336 = arith.addf %334, %335 : vector<16x32xf32>
    %337 = math.tanh %336 : vector<16x32xf32>
    %338 = arith.mulf %333, %337 : vector<16x32xf32>
    %339 = arith.index_cast %c4_i32 : i32 to index
    %c0_121 = arith.constant 0 : index
    %c0_122 = arith.constant 0 : index
    %340 = vector.load %arg2[%339, %c0_121, %c0_122] : memref<8x8x32xf32, #tpu.memory_space<vmem>>, vector<1x8x32xf32>
    %341 = vector.shape_cast %340 : vector<1x8x32xf32> to vector<8x32xf32>
    %342 = arith.index_cast %300 : i32 to index
    %c0_123 = arith.constant 0 : index
    %c0_124 = arith.constant 0 : index
    %343 = vector.load %arg2[%342, %c0_123, %c0_124] : memref<8x8x32xf32, #tpu.memory_space<vmem>>, vector<1x8x32xf32>
    %344 = vector.shape_cast %343 : vector<1x8x32xf32> to vector<8x32xf32>
    %345 = tpu.concatenate %341, %344 in 0 : vector<8x32xf32>, vector<8x32xf32> -> vector<16x32xf32>
    %cst_125 = arith.constant 0.000000e+00 : f32
    %346 = vector.broadcast %cst_125 : f32 to vector<16x32xf32>
    %347 = arith.cmpf one, %345, %346 : vector<16x32xf32>
    %348 = arith.select %347, %336, %286 : vector<16x32xi1>, vector<16x32xf32>
    %349 = arith.select %347, %338, %287 : vector<16x32xi1>, vector<16x32xf32>
    %cst_126 = arith.constant 0.000000e+00 : f32
    %350 = vector.broadcast %cst_126 : f32 to vector<16x32xf32>
    %351 = arith.select %347, %338, %350 : vector<16x32xi1>, vector<16x32xf32>
    %352 = vector.extract_strided_slice %351 {offsets = [0, 0], sizes = [8, 32], strides = [1, 1]} : vector<16x32xf32> to vector<8x32xf32>
    %353 = arith.index_cast %c4_i32 : i32 to index
    %c0_127 = arith.constant 0 : index
    %c0_128 = arith.constant 0 : index
    %354 = vector.load %arg6[%353, %c0_127, %c0_128] : memref<8x8x32xf32, #tpu.memory_space<vmem>>, vector<1x8x32xf32>
    %355 = vector.shape_cast %354 : vector<1x8x32xf32> to vector<8x32xf32>
    %356 = vector.shape_cast %352 : vector<8x32xf32> to vector<1x8x32xf32>
    tpu.vector_store %arg6[%353, %c0_127, %c0_128], %356 {strides = array<i32>} : memref<8x8x32xf32, #tpu.memory_space<vmem>>, vector<1x8x32xf32>,
    %357 = vector.extract_strided_slice %351 {offsets = [8, 0], sizes = [8, 32], strides = [1, 1]} : vector<16x32xf32> to vector<8x32xf32>
    %358 = arith.index_cast %300 : i32 to index
    %c0_129 = arith.constant 0 : index
    %c0_130 = arith.constant 0 : index
    %359 = vector.load %arg7[%358, %c0_129, %c0_130] : memref<8x8x32xf32, #tpu.memory_space<vmem>>, vector<1x8x32xf32>
    %360 = vector.shape_cast %359 : vector<1x8x32xf32> to vector<8x32xf32>
    %361 = vector.shape_cast %357 : vector<8x32xf32> to vector<1x8x32xf32>
    tpu.vector_store %arg7[%358, %c0_129, %c0_130], %361 {strides = array<i32>} : memref<8x8x32xf32, #tpu.memory_space<vmem>>, vector<1x8x32xf32>,
    %c5_i32 = arith.constant 5 : i32
    %c7_i32_131 = arith.constant 7 : i32
    %362 = arith.subi %c7_i32_131, %c5_i32 : i32
    %c8_i32_132 = arith.constant 8 : i32
    %363 = arith.muli %c5_i32, %c8_i32_132 : i32
    %c8_i32_133 = arith.constant 8 : i32
    %364 = arith.muli %362, %c8_i32_133 : i32
    %365 = arith.truncf %349 : vector<16x32xf32> to vector<16x32xbf16>
    %cst_134 = arith.constant dense<0.000000e+00> : vector<16x256xf32>
    %366 = tpu.matmul %365, %50, %cst_134 {dimension_numbers = #tpu.dot_dimension_numbers<[1], [0], [0], [1], [0, 0, 1, 1], [], []>} : vector<16x32xbf16>, vector<32x256xbf16>, vector<16x256xf32> -> vector<16x256xf32>
    %367 = arith.index_cast %363 : i32 to index
    %c0_135 = arith.constant 0 : index
    %368 = vector.load %arg10[%367, %c0_135] : memref<64x256xf32, #tpu.memory_space<vmem>>, vector<8x128xf32>
    %369 = vector.extract_strided_slice %366 {offsets = [0, 0], sizes = [8, 128], strides = [1, 1]} : vector<16x256xf32> to vector<8x128xf32>
    %370 = arith.addf %368, %369 : vector<8x128xf32>
    %371 = arith.index_cast %364 : i32 to index
    %c128_136 = arith.constant 128 : index
    %372 = vector.load %arg10[%371, %c128_136] : memref<64x256xf32, #tpu.memory_space<vmem>>, vector<8x128xf32>
    %373 = vector.extract_strided_slice %366 {offsets = [8, 128], sizes = [8, 128], strides = [1, 1]} : vector<16x256xf32> to vector<8x128xf32>
    %374 = arith.addf %372, %373 : vector<8x128xf32>
    %375 = tpu.concatenate %370, %374 in 0 : vector<8x128xf32>, vector<8x128xf32> -> vector<16x128xf32>
    %376 = vector.extract_strided_slice %375 {offsets = [0, 0], sizes = [16, 32], strides = [1, 1]} : vector<16x128xf32> to vector<16x32xf32>
    %377 = arith.negf %376 : vector<16x32xf32>
    %378 = math.exp %377 : vector<16x32xf32>
    %cst_137 = arith.constant 1.000000e+00 : f32
    %379 = vector.broadcast %cst_137 : f32 to vector<16x32xf32>
    %380 = arith.addf %379, %378 : vector<16x32xf32>
    %381 = arith.divf %379, %380 : vector<16x32xf32>
    %382 = vector.extract_strided_slice %375 {offsets = [0, 32], sizes = [16, 32], strides = [1, 1]} : vector<16x128xf32> to vector<16x32xf32>
    %383 = arith.negf %382 : vector<16x32xf32>
    %384 = math.exp %383 : vector<16x32xf32>
    %cst_138 = arith.constant 1.000000e+00 : f32
    %385 = vector.broadcast %cst_138 : f32 to vector<16x32xf32>
    %386 = arith.addf %385, %384 : vector<16x32xf32>
    %387 = arith.divf %385, %386 : vector<16x32xf32>
    %388 = vector.extract_strided_slice %375 {offsets = [0, 64], sizes = [16, 32], strides = [1, 1]} : vector<16x128xf32> to vector<16x32xf32>
    %389 = math.tanh %388 : vector<16x32xf32>
    %390 = vector.extract_strided_slice %375 {offsets = [0, 96], sizes = [16, 32], strides = [1, 1]} : vector<16x128xf32> to vector<16x32xf32>
    %391 = arith.negf %390 : vector<16x32xf32>
    %392 = math.exp %391 : vector<16x32xf32>
    %cst_139 = arith.constant 1.000000e+00 : f32
    %393 = vector.broadcast %cst_139 : f32 to vector<16x32xf32>
    %394 = arith.addf %393, %392 : vector<16x32xf32>
    %395 = arith.divf %393, %394 : vector<16x32xf32>
    %396 = arith.mulf %387, %348 : vector<16x32xf32>
    %397 = arith.mulf %381, %389 : vector<16x32xf32>
    %398 = arith.addf %396, %397 : vector<16x32xf32>
    %399 = math.tanh %398 : vector<16x32xf32>
    %400 = arith.mulf %395, %399 : vector<16x32xf32>
    %401 = arith.index_cast %c5_i32 : i32 to index
    %c0_140 = arith.constant 0 : index
    %c0_141 = arith.constant 0 : index
    %402 = vector.load %arg2[%401, %c0_140, %c0_141] : memref<8x8x32xf32, #tpu.memory_space<vmem>>, vector<1x8x32xf32>
    %403 = vector.shape_cast %402 : vector<1x8x32xf32> to vector<8x32xf32>
    %404 = arith.index_cast %362 : i32 to index
    %c0_142 = arith.constant 0 : index
    %c0_143 = arith.constant 0 : index
    %405 = vector.load %arg2[%404, %c0_142, %c0_143] : memref<8x8x32xf32, #tpu.memory_space<vmem>>, vector<1x8x32xf32>
    %406 = vector.shape_cast %405 : vector<1x8x32xf32> to vector<8x32xf32>
    %407 = tpu.concatenate %403, %406 in 0 : vector<8x32xf32>, vector<8x32xf32> -> vector<16x32xf32>
    %cst_144 = arith.constant 0.000000e+00 : f32
    %408 = vector.broadcast %cst_144 : f32 to vector<16x32xf32>
    %409 = arith.cmpf one, %407, %408 : vector<16x32xf32>
    %410 = arith.select %409, %398, %348 : vector<16x32xi1>, vector<16x32xf32>
    %411 = arith.select %409, %400, %349 : vector<16x32xi1>, vector<16x32xf32>
    %cst_145 = arith.constant 0.000000e+00 : f32
    %412 = vector.broadcast %cst_145 : f32 to vector<16x32xf32>
    %413 = arith.select %409, %400, %412 : vector<16x32xi1>, vector<16x32xf32>
    %414 = vector.extract_strided_slice %413 {offsets = [0, 0], sizes = [8, 32], strides = [1, 1]} : vector<16x32xf32> to vector<8x32xf32>
    %415 = arith.index_cast %c5_i32 : i32 to index
    %c0_146 = arith.constant 0 : index
    %c0_147 = arith.constant 0 : index
    %416 = vector.load %arg6[%415, %c0_146, %c0_147] : memref<8x8x32xf32, #tpu.memory_space<vmem>>, vector<1x8x32xf32>
    %417 = vector.shape_cast %416 : vector<1x8x32xf32> to vector<8x32xf32>
    %418 = vector.shape_cast %414 : vector<8x32xf32> to vector<1x8x32xf32>
    tpu.vector_store %arg6[%415, %c0_146, %c0_147], %418 {strides = array<i32>} : memref<8x8x32xf32, #tpu.memory_space<vmem>>, vector<1x8x32xf32>,
    %419 = vector.extract_strided_slice %413 {offsets = [8, 0], sizes = [8, 32], strides = [1, 1]} : vector<16x32xf32> to vector<8x32xf32>
    %420 = arith.index_cast %362 : i32 to index
    %c0_148 = arith.constant 0 : index
    %c0_149 = arith.constant 0 : index
    %421 = vector.load %arg7[%420, %c0_148, %c0_149] : memref<8x8x32xf32, #tpu.memory_space<vmem>>, vector<1x8x32xf32>
    %422 = vector.shape_cast %421 : vector<1x8x32xf32> to vector<8x32xf32>
    %423 = vector.shape_cast %419 : vector<8x32xf32> to vector<1x8x32xf32>
    tpu.vector_store %arg7[%420, %c0_148, %c0_149], %423 {strides = array<i32>} : memref<8x8x32xf32, #tpu.memory_space<vmem>>, vector<1x8x32xf32>,
    %c6_i32 = arith.constant 6 : i32
    %c7_i32_150 = arith.constant 7 : i32
    %424 = arith.subi %c7_i32_150, %c6_i32 : i32
    %c8_i32_151 = arith.constant 8 : i32
    %425 = arith.muli %c6_i32, %c8_i32_151 : i32
    %c8_i32_152 = arith.constant 8 : i32
    %426 = arith.muli %424, %c8_i32_152 : i32
    %427 = arith.truncf %411 : vector<16x32xf32> to vector<16x32xbf16>
    %cst_153 = arith.constant dense<0.000000e+00> : vector<16x256xf32>
    %428 = tpu.matmul %427, %50, %cst_153 {dimension_numbers = #tpu.dot_dimension_numbers<[1], [0], [0], [1], [0, 0, 1, 1], [], []>} : vector<16x32xbf16>, vector<32x256xbf16>, vector<16x256xf32> -> vector<16x256xf32>
    %429 = arith.index_cast %425 : i32 to index
    %c0_154 = arith.constant 0 : index
    %430 = vector.load %arg10[%429, %c0_154] : memref<64x256xf32, #tpu.memory_space<vmem>>, vector<8x128xf32>
    %431 = vector.extract_strided_slice %428 {offsets = [0, 0], sizes = [8, 128], strides = [1, 1]} : vector<16x256xf32> to vector<8x128xf32>
    %432 = arith.addf %430, %431 : vector<8x128xf32>
    %433 = arith.index_cast %426 : i32 to index
    %c128_155 = arith.constant 128 : index
    %434 = vector.load %arg10[%433, %c128_155] : memref<64x256xf32, #tpu.memory_space<vmem>>, vector<8x128xf32>
    %435 = vector.extract_strided_slice %428 {offsets = [8, 128], sizes = [8, 128], strides = [1, 1]} : vector<16x256xf32> to vector<8x128xf32>
    %436 = arith.addf %434, %435 : vector<8x128xf32>
    %437 = tpu.concatenate %432, %436 in 0 : vector<8x128xf32>, vector<8x128xf32> -> vector<16x128xf32>
    %438 = vector.extract_strided_slice %437 {offsets = [0, 0], sizes = [16, 32], strides = [1, 1]} : vector<16x128xf32> to vector<16x32xf32>
    %439 = arith.negf %438 : vector<16x32xf32>
    %440 = math.exp %439 : vector<16x32xf32>
    %cst_156 = arith.constant 1.000000e+00 : f32
    %441 = vector.broadcast %cst_156 : f32 to vector<16x32xf32>
    %442 = arith.addf %441, %440 : vector<16x32xf32>
    %443 = arith.divf %441, %442 : vector<16x32xf32>
    %444 = vector.extract_strided_slice %437 {offsets = [0, 32], sizes = [16, 32], strides = [1, 1]} : vector<16x128xf32> to vector<16x32xf32>
    %445 = arith.negf %444 : vector<16x32xf32>
    %446 = math.exp %445 : vector<16x32xf32>
    %cst_157 = arith.constant 1.000000e+00 : f32
    %447 = vector.broadcast %cst_157 : f32 to vector<16x32xf32>
    %448 = arith.addf %447, %446 : vector<16x32xf32>
    %449 = arith.divf %447, %448 : vector<16x32xf32>
    %450 = vector.extract_strided_slice %437 {offsets = [0, 64], sizes = [16, 32], strides = [1, 1]} : vector<16x128xf32> to vector<16x32xf32>
    %451 = math.tanh %450 : vector<16x32xf32>
    %452 = vector.extract_strided_slice %437 {offsets = [0, 96], sizes = [16, 32], strides = [1, 1]} : vector<16x128xf32> to vector<16x32xf32>
    %453 = arith.negf %452 : vector<16x32xf32>
    %454 = math.exp %453 : vector<16x32xf32>
    %cst_158 = arith.constant 1.000000e+00 : f32
    %455 = vector.broadcast %cst_158 : f32 to vector<16x32xf32>
    %456 = arith.addf %455, %454 : vector<16x32xf32>
    %457 = arith.divf %455, %456 : vector<16x32xf32>
    %458 = arith.mulf %449, %410 : vector<16x32xf32>
    %459 = arith.mulf %443, %451 : vector<16x32xf32>
    %460 = arith.addf %458, %459 : vector<16x32xf32>
    %461 = math.tanh %460 : vector<16x32xf32>
    %462 = arith.mulf %457, %461 : vector<16x32xf32>
    %463 = arith.index_cast %c6_i32 : i32 to index
    %c0_159 = arith.constant 0 : index
    %c0_160 = arith.constant 0 : index
    %464 = vector.load %arg2[%463, %c0_159, %c0_160] : memref<8x8x32xf32, #tpu.memory_space<vmem>>, vector<1x8x32xf32>
    %465 = vector.shape_cast %464 : vector<1x8x32xf32> to vector<8x32xf32>
    %466 = arith.index_cast %424 : i32 to index
    %c0_161 = arith.constant 0 : index
    %c0_162 = arith.constant 0 : index
    %467 = vector.load %arg2[%466, %c0_161, %c0_162] : memref<8x8x32xf32, #tpu.memory_space<vmem>>, vector<1x8x32xf32>
    %468 = vector.shape_cast %467 : vector<1x8x32xf32> to vector<8x32xf32>
    %469 = tpu.concatenate %465, %468 in 0 : vector<8x32xf32>, vector<8x32xf32> -> vector<16x32xf32>
    %cst_163 = arith.constant 0.000000e+00 : f32
    %470 = vector.broadcast %cst_163 : f32 to vector<16x32xf32>
    %471 = arith.cmpf one, %469, %470 : vector<16x32xf32>
    %472 = arith.select %471, %460, %410 : vector<16x32xi1>, vector<16x32xf32>
    %473 = arith.select %471, %462, %411 : vector<16x32xi1>, vector<16x32xf32>
    %cst_164 = arith.constant 0.000000e+00 : f32
    %474 = vector.broadcast %cst_164 : f32 to vector<16x32xf32>
    %475 = arith.select %471, %462, %474 : vector<16x32xi1>, vector<16x32xf32>
    %476 = vector.extract_strided_slice %475 {offsets = [0, 0], sizes = [8, 32], strides = [1, 1]} : vector<16x32xf32> to vector<8x32xf32>
    %477 = arith.index_cast %c6_i32 : i32 to index
    %c0_165 = arith.constant 0 : index
    %c0_166 = arith.constant 0 : index
    %478 = vector.load %arg6[%477, %c0_165, %c0_166] : memref<8x8x32xf32, #tpu.memory_space<vmem>>, vector<1x8x32xf32>
    %479 = vector.shape_cast %478 : vector<1x8x32xf32> to vector<8x32xf32>
    %480 = vector.shape_cast %476 : vector<8x32xf32> to vector<1x8x32xf32>
    tpu.vector_store %arg6[%477, %c0_165, %c0_166], %480 {strides = array<i32>} : memref<8x8x32xf32, #tpu.memory_space<vmem>>, vector<1x8x32xf32>,
    %481 = vector.extract_strided_slice %475 {offsets = [8, 0], sizes = [8, 32], strides = [1, 1]} : vector<16x32xf32> to vector<8x32xf32>
    %482 = arith.index_cast %424 : i32 to index
    %c0_167 = arith.constant 0 : index
    %c0_168 = arith.constant 0 : index
    %483 = vector.load %arg7[%482, %c0_167, %c0_168] : memref<8x8x32xf32, #tpu.memory_space<vmem>>, vector<1x8x32xf32>
    %484 = vector.shape_cast %483 : vector<1x8x32xf32> to vector<8x32xf32>
    %485 = vector.shape_cast %481 : vector<8x32xf32> to vector<1x8x32xf32>
    tpu.vector_store %arg7[%482, %c0_167, %c0_168], %485 {strides = array<i32>} : memref<8x8x32xf32, #tpu.memory_space<vmem>>, vector<1x8x32xf32>,
    %c7_i32_169 = arith.constant 7 : i32
    %c7_i32_170 = arith.constant 7 : i32
    %486 = arith.subi %c7_i32_170, %c7_i32_169 : i32
    %c8_i32_171 = arith.constant 8 : i32
    %487 = arith.muli %c7_i32_169, %c8_i32_171 : i32
    %c8_i32_172 = arith.constant 8 : i32
    %488 = arith.muli %486, %c8_i32_172 : i32
    %489 = arith.truncf %473 : vector<16x32xf32> to vector<16x32xbf16>
    %cst_173 = arith.constant dense<0.000000e+00> : vector<16x256xf32>
    %490 = tpu.matmul %489, %50, %cst_173 {dimension_numbers = #tpu.dot_dimension_numbers<[1], [0], [0], [1], [0, 0, 1, 1], [], []>} : vector<16x32xbf16>, vector<32x256xbf16>, vector<16x256xf32> -> vector<16x256xf32>
    %491 = arith.index_cast %487 : i32 to index
    %c0_174 = arith.constant 0 : index
    %492 = vector.load %arg10[%491, %c0_174] : memref<64x256xf32, #tpu.memory_space<vmem>>, vector<8x128xf32>
    %493 = vector.extract_strided_slice %490 {offsets = [0, 0], sizes = [8, 128], strides = [1, 1]} : vector<16x256xf32> to vector<8x128xf32>
    %494 = arith.addf %492, %493 : vector<8x128xf32>
    %495 = arith.index_cast %488 : i32 to index
    %c128_175 = arith.constant 128 : index
    %496 = vector.load %arg10[%495, %c128_175] : memref<64x256xf32, #tpu.memory_space<vmem>>, vector<8x128xf32>
    %497 = vector.extract_strided_slice %490 {offsets = [8, 128], sizes = [8, 128], strides = [1, 1]} : vector<16x256xf32> to vector<8x128xf32>
    %498 = arith.addf %496, %497 : vector<8x128xf32>
    %499 = tpu.concatenate %494, %498 in 0 : vector<8x128xf32>, vector<8x128xf32> -> vector<16x128xf32>
    %500 = vector.extract_strided_slice %499 {offsets = [0, 0], sizes = [16, 32], strides = [1, 1]} : vector<16x128xf32> to vector<16x32xf32>
    %501 = arith.negf %500 : vector<16x32xf32>
    %502 = math.exp %501 : vector<16x32xf32>
    %cst_176 = arith.constant 1.000000e+00 : f32
    %503 = vector.broadcast %cst_176 : f32 to vector<16x32xf32>
    %504 = arith.addf %503, %502 : vector<16x32xf32>
    %505 = arith.divf %503, %504 : vector<16x32xf32>
    %506 = vector.extract_strided_slice %499 {offsets = [0, 32], sizes = [16, 32], strides = [1, 1]} : vector<16x128xf32> to vector<16x32xf32>
    %507 = arith.negf %506 : vector<16x32xf32>
    %508 = math.exp %507 : vector<16x32xf32>
    %cst_177 = arith.constant 1.000000e+00 : f32
    %509 = vector.broadcast %cst_177 : f32 to vector<16x32xf32>
    %510 = arith.addf %509, %508 : vector<16x32xf32>
    %511 = arith.divf %509, %510 : vector<16x32xf32>
    %512 = vector.extract_strided_slice %499 {offsets = [0, 64], sizes = [16, 32], strides = [1, 1]} : vector<16x128xf32> to vector<16x32xf32>
    %513 = math.tanh %512 : vector<16x32xf32>
    %514 = vector.extract_strided_slice %499 {offsets = [0, 96], sizes = [16, 32], strides = [1, 1]} : vector<16x128xf32> to vector<16x32xf32>
    %515 = arith.negf %514 : vector<16x32xf32>
    %516 = math.exp %515 : vector<16x32xf32>
    %cst_178 = arith.constant 1.000000e+00 : f32
    %517 = vector.broadcast %cst_178 : f32 to vector<16x32xf32>
    %518 = arith.addf %517, %516 : vector<16x32xf32>
    %519 = arith.divf %517, %518 : vector<16x32xf32>
    %520 = arith.mulf %511, %472 : vector<16x32xf32>
    %521 = arith.mulf %505, %513 : vector<16x32xf32>
    %522 = arith.addf %520, %521 : vector<16x32xf32>
    %523 = math.tanh %522 : vector<16x32xf32>
    %524 = arith.mulf %519, %523 : vector<16x32xf32>
    %525 = arith.index_cast %c7_i32_169 : i32 to index
    %c0_179 = arith.constant 0 : index
    %c0_180 = arith.constant 0 : index
    %526 = vector.load %arg2[%525, %c0_179, %c0_180] : memref<8x8x32xf32, #tpu.memory_space<vmem>>, vector<1x8x32xf32>
    %527 = vector.shape_cast %526 : vector<1x8x32xf32> to vector<8x32xf32>
    %528 = arith.index_cast %486 : i32 to index
    %c0_181 = arith.constant 0 : index
    %c0_182 = arith.constant 0 : index
    %529 = vector.load %arg2[%528, %c0_181, %c0_182] : memref<8x8x32xf32, #tpu.memory_space<vmem>>, vector<1x8x32xf32>
    %530 = vector.shape_cast %529 : vector<1x8x32xf32> to vector<8x32xf32>
    %531 = tpu.concatenate %527, %530 in 0 : vector<8x32xf32>, vector<8x32xf32> -> vector<16x32xf32>
    %cst_183 = arith.constant 0.000000e+00 : f32
    %532 = vector.broadcast %cst_183 : f32 to vector<16x32xf32>
    %533 = arith.cmpf one, %531, %532 : vector<16x32xf32>
    %534 = arith.select %533, %522, %472 : vector<16x32xi1>, vector<16x32xf32>
    %535 = arith.select %533, %524, %473 : vector<16x32xi1>, vector<16x32xf32>
    %cst_184 = arith.constant 0.000000e+00 : f32
    %536 = vector.broadcast %cst_184 : f32 to vector<16x32xf32>
    %537 = arith.select %533, %524, %536 : vector<16x32xi1>, vector<16x32xf32>
    %538 = vector.extract_strided_slice %537 {offsets = [0, 0], sizes = [8, 32], strides = [1, 1]} : vector<16x32xf32> to vector<8x32xf32>
    %539 = arith.index_cast %c7_i32_169 : i32 to index
    %c0_185 = arith.constant 0 : index
    %c0_186 = arith.constant 0 : index
    %540 = vector.load %arg6[%539, %c0_185, %c0_186] : memref<8x8x32xf32, #tpu.memory_space<vmem>>, vector<1x8x32xf32>
    %541 = vector.shape_cast %540 : vector<1x8x32xf32> to vector<8x32xf32>
    %542 = vector.shape_cast %538 : vector<8x32xf32> to vector<1x8x32xf32>
    tpu.vector_store %arg6[%539, %c0_185, %c0_186], %542 {strides = array<i32>} : memref<8x8x32xf32, #tpu.memory_space<vmem>>, vector<1x8x32xf32>,
    %543 = vector.extract_strided_slice %537 {offsets = [8, 0], sizes = [8, 32], strides = [1, 1]} : vector<16x32xf32> to vector<8x32xf32>
    %544 = arith.index_cast %486 : i32 to index
    %c0_187 = arith.constant 0 : index
    %c0_188 = arith.constant 0 : index
    %545 = vector.load %arg7[%544, %c0_187, %c0_188] : memref<8x8x32xf32, #tpu.memory_space<vmem>>, vector<1x8x32xf32>
    %546 = vector.shape_cast %545 : vector<1x8x32xf32> to vector<8x32xf32>
    %547 = vector.shape_cast %543 : vector<8x32xf32> to vector<1x8x32xf32>
    tpu.vector_store %arg7[%544, %c0_187, %c0_188], %547 {strides = array<i32>} : memref<8x8x32xf32, #tpu.memory_space<vmem>>, vector<1x8x32xf32>,
    %c8_i32_189 = arith.constant 8 : i32
    %548 = vector.extract_strided_slice %535 {offsets = [0, 0], sizes = [8, 32], strides = [1, 1]} : vector<16x32xf32> to vector<8x32xf32>
    %c0_190 = arith.constant 0 : index
    %c0_191 = arith.constant 0 : index
    %549 = vector.load %arg8[%c0_190, %c0_191] : memref<8x32xf32, #tpu.memory_space<vmem>>, vector<8x32xf32>
    tpu.vector_store %arg8[%c0_190, %c0_191], %548 {strides = array<i32>} : memref<8x32xf32, #tpu.memory_space<vmem>>, vector<8x32xf32>,
    %550 = vector.extract_strided_slice %535 {offsets = [8, 0], sizes = [8, 32], strides = [1, 1]} : vector<16x32xf32> to vector<8x32xf32>
    %c0_192 = arith.constant 0 : index
    %c0_193 = arith.constant 0 : index
    %551 = vector.load %arg9[%c0_192, %c0_193] : memref<8x32xf32, #tpu.memory_space<vmem>>, vector<8x32xf32>
    tpu.vector_store %arg9[%c0_192, %c0_193], %550 {strides = array<i32>} : memref<8x32xf32, #tpu.memory_space<vmem>>, vector<8x32xf32>,
    return
  }
  func.func @transform_0(%arg0: i32) -> (i32, i32, i32) {
    %c0_i32 = arith.constant 0 : i32
    %c0_i32_0 = arith.constant 0 : i32
    %c0_i32_1 = arith.constant 0 : i32
    return %c0_i32, %arg0, %c0_i32_0 : i32, i32, i32
  }
  func.func @transform_1(%arg0: i32) -> (i32, i32, i32) {
    %c0_i32 = arith.constant 0 : i32
    %c0_i32_0 = arith.constant 0 : i32
    %c0_i32_1 = arith.constant 0 : i32
    return %c0_i32, %arg0, %c0_i32_0 : i32, i32, i32
  }
  func.func @transform_2(%arg0: i32) -> (i32, i32) {
    %c0_i32 = arith.constant 0 : i32
    %c0_i32_0 = arith.constant 0 : i32
    %c0_i32_1 = arith.constant 0 : i32
    return %c0_i32, %c0_i32_0 : i32, i32
  }
  func.func @transform_3(%arg0: i32) -> (i32, i32) {
    %c0_i32 = arith.constant 0 : i32
    %c0_i32_0 = arith.constant 0 : i32
    %c0_i32_1 = arith.constant 0 : i32
    return %c0_i32, %c0_i32_0 : i32, i32
  }
  func.func @transform_4(%arg0: i32) -> (i32, i32) {
    %c0_i32 = arith.constant 0 : i32
    %c0_i32_0 = arith.constant 0 : i32
    %c0_i32_1 = arith.constant 0 : i32
    return %c0_i32, %c0_i32_0 : i32, i32
  }
  func.func @transform_5(%arg0: i32) -> (i32, i32, i32) {
    %c0_i32 = arith.constant 0 : i32
    %c0_i32_0 = arith.constant 0 : i32
    %c0_i32_1 = arith.constant 0 : i32
    return %c0_i32, %arg0, %c0_i32_0 : i32, i32, i32
  }
  func.func @transform_6(%arg0: i32) -> (i32, i32, i32) {
    %c0_i32 = arith.constant 0 : i32
    %c0_i32_0 = arith.constant 0 : i32
    %c0_i32_1 = arith.constant 0 : i32
    return %c0_i32, %arg0, %c0_i32_0 : i32, i32, i32
  }
  func.func @transform_7(%arg0: i32) -> (i32, i32) {
    %c0_i32 = arith.constant 0 : i32
    %c0_i32_0 = arith.constant 0 : i32
    return %arg0, %c0_i32 : i32, i32
  }
  func.func @transform_8(%arg0: i32) -> (i32, i32) {
    %c0_i32 = arith.constant 0 : i32
    %c0_i32_0 = arith.constant 0 : i32
    return %arg0, %c0_i32 : i32, i32
  }
}

</mosaic_0001>

<llo_original>
// kernel: sentence_embedding_forward.1
$region0: #{sentence_embedding_forward.1}
  #allocation0 [shape = 'u32[]', space=smem, size = 0x4, offset = 0x4, fixed_abs, tag = 'smem constant byte address 0x4 - core index']
  #allocation1 [shape = 'u32[144,128]{1,0:T(1,128)}', space=vmem, size = 0x12000, scoped, tag = 'internal scratch']
  #allocation2 [shape = 'f32[64,256]{1,0:T(8,128)}', space=vmem, size = 0x10000, scoped, tag = 'scratch operand']
  %s0 = inlined_call_operand.vmem [shape: bf16[8,16,32], index: 0, kind: input, shape index: {}]
  %s1 = inlined_call_operand.vmem [shape: f32[8,16,32], index: 1, kind: input, shape index: {}]
  %s2 = inlined_call_operand.vmem [shape: bf16[32,256], index: 2, kind: input, shape index: {}]
  %s3 = inlined_call_operand.vmem [shape: bf16[32,256], index: 3, kind: input, shape index: {}]
  %s4 = inlined_call_operand.vmem [shape: f32[1,256], index: 4, kind: input, shape index: {}]
  %s5 = inlined_call_operand.vmem [shape: f32[8,16,32], index: 5, kind: output, shape index: {0}]
  %s6 = inlined_call_operand.vmem [shape: f32[8,16,32], index: 6, kind: output, shape index: {1}]
  %s7 = inlined_call_operand.vmem [shape: f32[16,32], index: 7, kind: output, shape index: {2}]
  %s8 = inlined_call_operand.vmem [shape: f32[16,32], index: 8, kind: output, shape index: {3}]
  %9 = xla_tuple %s5, %s6, %s7, %s8
  %s10 = sld [smem:[#allocation0]]
  $region224: #{sentence_embedding_forward.1} parent=0
    _
  %s12 = ssub.s32 1, %s10
  %s13 = scalar_select 0, %s12, %s10
  $region1: #{sentence_embedding_forward.1} parent=0
    #allocation3 [shape = 'u8[32768]{0}', space=vmem, size = 0x8000, scoped, tag = 'input window, operand 0']
    #allocation4 [shape = 'u8[65536]{0}', space=vmem, size = 0x10000, scoped, tag = 'input window, operand 1']
    #allocation5 [shape = 'u8[65536]{0}', space=vmem, size = 0x10000, scoped, tag = 'output window, operand 0']
    #allocation6 [shape = 'u8[65536]{0}', space=vmem, size = 0x10000, scoped, tag = 'output window, operand 1']
    loop: start=0, step=1, limit=4
    $region2: #{sentence_embedding_forward.1} parent=1 // loop_pre_header
      _
    $region3: #{sentence_embedding_forward.1} parent=1 // loop_header
      %s15 = sphi 0, %s19
      %p16 = scmp.ge.s32.totalorder %s15, 4
      %s25 = sphi 0, %s27
      %s28 = sphi 0, %s25
      %s29 = sphi 0, %s28
      %s45 = sphi 0, %s29
      %s51 = sphi 0, %s53
      %s54 = sphi 0, %s51
      %s55 = sphi 0, %s54
      %s71 = sphi 0, %s55
      %s75 = sphi 0, %s75
      %s77 = sphi 0, %s75
      %s78 = sphi 0, %s77
      %s92 = sphi 0, %s78
      %s96 = sphi 0, %s96
      %s98 = sphi 0, %s96
      %s99 = sphi 0, %s98
      %s113 = sphi 0, %s99
      %s117 = sphi 0, %s117
      %s119 = sphi 0, %s117
      %s120 = sphi 0, %s119
      %s134 = sphi 0, %s120
      %s140 = sphi 0, %s142
      %s143 = sphi 0, %s140
      %s144 = sphi 0, %s143
      %s160 = sphi 0, %s144
      %s166 = sphi 0, %s168
      %s169 = sphi 0, %s166
      %s170 = sphi 0, %s169
      %s186 = sphi 0, %s170
      %s192 = sphi 0, %s194
      %s195 = sphi 0, %s192
      %s196 = sphi 0, %s195
      %s212 = sphi 0, %s196
      %s218 = sphi 0, %s220
      %s221 = sphi 0, %s218
      %s222 = sphi 0, %s221
      %s238 = sphi 0, %s222
    $region4: #{sentence_embedding_forward.1} parent=1 // loop_header_branch
      %18 = sbr.rel (%p16) target = $region8
    $region5: #{sentence_embedding_forward.1} parent=1 // loop_body
      %s20 = ssub.s32 %s15, 1
      %s21 = ssub.s32 %s15, 2
      %s22 = sadd.s32 %s15, 1
      %s23 = ssub.s32 %s15, %s22
      %p24 = scmp.eq.s32.totalorder %s23, 0
      %s26 = sadd.s32 %s25, 1
      %s27 = scalar_select %p24, %s25, %s26
      %p30 = pneg %p24
      %p31 = scmp.eq.s32.totalorder %s15, 1
      %p32 = por %p30, %p31
      %p33 = scmp.ne.s32.totalorder %s25, %s28
      %p34 = scmp.eq.s32.totalorder %s15, 0
      %p35 = por %p33, %p34
      %p36 = scmp.ne.s32.totalorder %s25, %s28
      %p37 = scmp.eq.s32.totalorder %s20, 1
      %p38 = por %p36, %p37
      %p39 = scmp.ne.s32.totalorder %s28, %s29
      %p40 = scmp.eq.s32.totalorder %s20, 0
      %p41 = por %p39, %p40
      %p42 = scmp.ne.s32.totalorder %s28, %s29
      %p43 = scmp.eq.s32.totalorder %s21, 1
      %p44 = por %p42, %p43
      %p46 = scmp.ne.s32.totalorder %s29, %s45
      %p47 = scmp.eq.s32.totalorder %s21, 0
      %p48 = por %p46, %p47
      %s49 = ssub.s32 %s15, %s22
      %p50 = scmp.eq.s32.totalorder %s49, 0
      %s52 = sadd.s32 %s51, 1
      %s53 = scalar_select %p50, %s51, %s52
      %p56 = pneg %p50
      %p57 = scmp.eq.s32.totalorder %s15, 1
      %p58 = por %p56, %p57
      %p59 = scmp.ne.s32.totalorder %s51, %s54
      %p60 = scmp.eq.s32.totalorder %s15, 0
      %p61 = por %p59, %p60
      %p62 = scmp.ne.s32.totalorder %s51, %s54
      %p63 = scmp.eq.s32.totalorder %s20, 1
      %p64 = por %p62, %p63
      %p65 = scmp.ne.s32.totalorder %s54, %s55
      %p66 = scmp.eq.s32.totalorder %s20, 0
      %p67 = por %p65, %p66
      %p68 = scmp.ne.s32.totalorder %s54, %s55
      %p69 = scmp.eq.s32.totalorder %s21, 1
      %p70 = por %p68, %p69
      %p72 = scmp.ne.s32.totalorder %s55, %s71
      %p73 = scmp.eq.s32.totalorder %s21, 0
      %p74 = por %p72, %p73
      %s76 = sadd.s32 %s75, 1
      %p79 = scmp.eq.s32.totalorder %s15, 1
      %p80 = scmp.ne.s32.totalorder %s75, %s77
      %p81 = scmp.eq.s32.totalorder %s15, 0
      %p82 = por %p80, %p81
      %p83 = scmp.ne.s32.totalorder %s75, %s77
      %p84 = scmp.eq.s32.totalorder %s20, 1
      %p85 = por %p83, %p84
      %p86 = scmp.ne.s32.totalorder %s77, %s78
      %p87 = scmp.eq.s32.totalorder %s20, 0
      %p88 = por %p86, %p87
      %p89 = scmp.ne.s32.totalorder %s77, %s78
      %p90 = scmp.eq.s32.totalorder %s21, 1
      %p91 = por %p89, %p90
      %p93 = scmp.ne.s32.totalorder %s78, %s92
      %p94 = scmp.eq.s32.totalorder %s21, 0
      %p95 = por %p93, %p94
      %s97 = sadd.s32 %s96, 1
      %p100 = scmp.eq.s32.totalorder %s15, 1
      %p101 = scmp.ne.s32.totalorder %s96, %s98
      %p102 = scmp.eq.s32.totalorder %s15, 0
      %p103 = por %p101, %p102
      %p104 = scmp.ne.s32.totalorder %s96, %s98
      %p105 = scmp.eq.s32.totalorder %s20, 1
      %p106 = por %p104, %p105
      %p107 = scmp.ne.s32.totalorder %s98, %s99
      %p108 = scmp.eq.s32.totalorder %s20, 0
      %p109 = por %p107, %p108
      %p110 = scmp.ne.s32.totalorder %s98, %s99
      %p111 = scmp.eq.s32.totalorder %s21, 1
      %p112 = por %p110, %p111
      %p114 = scmp.ne.s32.totalorder %s99, %s113
      %p115 = scmp.eq.s32.totalorder %s21, 0
      %p116 = por %p114, %p115
      %s118 = sadd.s32 %s117, 1
      %p121 = scmp.eq.s32.totalorder %s15, 1
      %p122 = scmp.ne.s32.totalorder %s117, %s119
      %p123 = scmp.eq.s32.totalorder %s15, 0
      %p124 = por %p122, %p123
      %p125 = scmp.ne.s32.totalorder %s117, %s119
      %p126 = scmp.eq.s32.totalorder %s20, 1
      %p127 = por %p125, %p126
      %p128 = scmp.ne.s32.totalorder %s119, %s120
      %p129 = scmp.eq.s32.totalorder %s20, 0
      %p130 = por %p128, %p129
      %p131 = scmp.ne.s32.totalorder %s119, %s120
      %p132 = scmp.eq.s32.totalorder %s21, 1
      %p133 = por %p131, %p132
      %p135 = scmp.ne.s32.totalorder %s120, %s134
      %p136 = scmp.eq.s32.totalorder %s21, 0
      %p137 = por %p135, %p136
      %s138 = ssub.s32 %s15, %s22
      %p139 = scmp.eq.s32.totalorder %s138, 0
      %s141 = sadd.s32 %s140, 1
      %s142 = scalar_select %p139, %s140, %s141
      %p145 = pneg %p139
      %p146 = scmp.eq.s32.totalorder %s15, 1
      %p147 = por %p145, %p146
      %p148 = scmp.ne.s32.totalorder %s140, %s143
      %p149 = scmp.eq.s32.totalorder %s15, 0
      %p150 = por %p148, %p149
      %p151 = scmp.ne.s32.totalorder %s140, %s143
      %p152 = scmp.eq.s32.totalorder %s20, 1
      %p153 = por %p151, %p152
      %p154 = scmp.ne.s32.totalorder %s143, %s144
      %p155 = scmp.eq.s32.totalorder %s20, 0
      %p156 = por %p154, %p155
      %p157 = scmp.ne.s32.totalorder %s143, %s144
      %p158 = scmp.eq.s32.totalorder %s21, 1
      %p159 = por %p157, %p158
      %p161 = scmp.ne.s32.totalorder %s144, %s160
      %p162 = scmp.eq.s32.totalorder %s21, 0
      %p163 = por %p161, %p162
      %s164 = ssub.s32 %s15, %s22
      %p165 = scmp.eq.s32.totalorder %s164, 0
      %s167 = sadd.s32 %s166, 1
      %s168 = scalar_select %p165, %s166, %s167
      %p171 = pneg %p165
      %p172 = scmp.eq.s32.totalorder %s15, 1
      %p173 = por %p171, %p172
      %p174 = scmp.ne.s32.totalorder %s166, %s169
      %p175 = scmp.eq.s32.totalorder %s15, 0
      %p176 = por %p174, %p175
      %p177 = scmp.ne.s32.totalorder %s166, %s169
      %p178 = scmp.eq.s32.totalorder %s20, 1
      %p179 = por %p177, %p178
      %p180 = scmp.ne.s32.totalorder %s169, %s170
      %p181 = scmp.eq.s32.totalorder %s20, 0
      %p182 = por %p180, %p181
      %p183 = scmp.ne.s32.totalorder %s169, %s170
      %p184 = scmp.eq.s32.totalorder %s21, 1
      %p185 = por %p183, %p184
      %p187 = scmp.ne.s32.totalorder %s170, %s186
      %p188 = scmp.eq.s32.totalorder %s21, 0
      %p189 = por %p187, %p188
      %s190 = ssub.s32 %s15, %s22
      %p191 = scmp.eq.s32.totalorder %s190, 0
      %s193 = sadd.s32 %s192, 1
      %s194 = scalar_select %p191, %s192, %s193
      %p197 = pneg %p191
      %p198 = scmp.eq.s32.totalorder %s15, 1
      %p199 = por %p197, %p198
      %p200 = scmp.ne.s32.totalorder %s192, %s195
      %p201 = scmp.eq.s32.totalorder %s15, 0
      %p202 = por %p200, %p201
      %p203 = scmp.ne.s32.totalorder %s192, %s195
      %p204 = scmp.eq.s32.totalorder %s20, 1
      %p205 = por %p203, %p204
      %p206 = scmp.ne.s32.totalorder %s195, %s196
      %p207 = scmp.eq.s32.totalorder %s20, 0
      %p208 = por %p206, %p207
      %p209 = scmp.ne.s32.totalorder %s195, %s196
      %p210 = scmp.eq.s32.totalorder %s21, 1
      %p211 = por %p209, %p210
      %p213 = scmp.ne.s32.totalorder %s196, %s212
      %p214 = scmp.eq.s32.totalorder %s21, 0
      %p215 = por %p213, %p214
      %s216 = ssub.s32 %s15, %s22
      %p217 = scmp.eq.s32.totalorder %s216, 0
      %s219 = sadd.s32 %s218, 1
      %s220 = scalar_select %p217, %s218, %s219
      %p223 = pneg %p217
      %p224 = scmp.eq.s32.totalorder %s15, 1
      %p225 = por %p223, %p224
      %p226 = scmp.ne.s32.totalorder %s218, %s221
      %p227 = scmp.eq.s32.totalorder %s15, 0
      %p228 = por %p226, %p227
      %p229 = scmp.ne.s32.totalorder %s218, %s221
      %p230 = scmp.eq.s32.totalorder %s20, 1
      %p231 = por %p229, %p230
      %p232 = scmp.ne.s32.totalorder %s221, %s222
      %p233 = scmp.eq.s32.totalorder %s20, 0
      %p234 = por %p232, %p233
      %p235 = scmp.ne.s32.totalorder %s221, %s222
      %p236 = scmp.eq.s32.totalorder %s21, 1
      %p237 = por %p235, %p236
      %p239 = scmp.ne.s32.totalorder %s222, %s238
      %p240 = scmp.eq.s32.totalorder %s21, 0
      %p241 = por %p239, %p240
      %p242 = scmp.le.s32.totalorder 1, %s15
      %p243 = scmp.lt.s32.totalorder %s15, 3
      %p244 = pnand %p242, %p243
      %p245 = pneg %p244
      // Predicated region
      $region9: #{sentence_embedding_forward.1} parent=5 // pred_check
        _
      $region10: #{sentence_embedding_forward.1} parent=5 // pred_check_branch
        %247 = sbr.rel (%p244) target = $region12
      $region11: #{sentence_embedding_forward.1} parent=5 // pred_region
        %s248 = ssub.s32 %s15, 1
        // Predicated region
        $region13: #{sentence_embedding_forward.1} parent=11 // pred_check
          %p249 = pneg %p88
        $region14: #{sentence_embedding_forward.1} parent=11 // pred_check_branch
          %251 = sbr.rel (%p249) target = $region16
        $region15: #{sentence_embedding_forward.1} parent=11 // pred_region
          _
        $region16: #{sentence_embedding_forward.1} parent=11 // pred_fallthru
          _
        // Predicated region
        $region17: #{sentence_embedding_forward.1} parent=11 // pred_check
          %p252 = pneg %p109
        $region18: #{sentence_embedding_forward.1} parent=11 // pred_check_branch
          %254 = sbr.rel (%p252) target = $region20
        $region19: #{sentence_embedding_forward.1} parent=11 // pred_region
          _
        $region20: #{sentence_embedding_forward.1} parent=11 // pred_fallthru
          _
        // Predicated region
        $region21: #{sentence_embedding_forward.1} parent=11 // pred_check
          %p255 = pneg %p130
        $region22: #{sentence_embedding_forward.1} parent=11 // pred_check_branch
          %257 = sbr.rel (%p255) target = $region24
        $region23: #{sentence_embedding_forward.1} parent=11 // pred_region
          _
        $region24: #{sentence_embedding_forward.1} parent=11 // pred_fallthru
          _
      $region12: #{sentence_embedding_forward.1} parent=5 // pred_fallthru
        _
      %p258 = scmp.lt.s32.totalorder %s15, 2
      // Predicated region
      $region25: #{sentence_embedding_forward.1} parent=5 // pred_check
        %p259 = pneg %p258
      $region26: #{sentence_embedding_forward.1} parent=5 // pred_check_branch
        %261 = sbr.rel (%p259) target = $region28
      $region27: #{sentence_embedding_forward.1} parent=5 // pred_region
        // Predicated region
        $region29: #{sentence_embedding_forward.1} parent=27 // pred_check
          %p262 = pneg %p35
        $region30: #{sentence_embedding_forward.1} parent=27 // pred_check_branch
          %264 = sbr.rel (%p262) target = $region32
        $region31: #{sentence_embedding_forward.1} parent=27 // pred_region
          %s265 = sand.u32 %s25, 1
          %s266 = sand.u32 %s25, 1
          %s267 = smul.addr %s266, 32
          %s268 = scalar_lea.vmem [#allocation3], %s267
          %s269 = smul.addr %s15, 4
          %s270 = scalar_lea.vmem %s0, %s269
          // Predicated region
          $region33: #{sentence_embedding_forward.1} parent=31 // pred_check
            _
          $region34: #{sentence_embedding_forward.1} parent=31 // pred_check_branch
            %272 = sbr.rel (0) target = $region36
          $region35: #{sentence_embedding_forward.1} parent=31 // pred_region
            // Predicated region
            $region37: #{sentence_embedding_forward.1} parent=35 // pred_check
              _
            $region38: #{sentence_embedding_forward.1} parent=35 // pred_check_branch
              %274 = sbr.rel target = $region40
            $region39: #{sentence_embedding_forward.1} parent=35 // pred_region
              // Predicated region
              $region52: #{sentence_embedding_forward.1} parent=39 // pred_check
                _
              $region53: #{sentence_embedding_forward.1} parent=39 // pred_check_branch
                %304 = sbr.rel (0) target = $region55
              $region54: #{sentence_embedding_forward.1} parent=39 // pred_region
                loop: start=0, step=1, limit=1
                $region56: #{sentence_embedding_forward.1} parent=54 // loop_pre_header
                  _
                $region57: #{sentence_embedding_forward.1} parent=54 // loop_header
                  %s306 = sphi 0, %s310
                  %p307 = scmp.ge.s32.totalorder %s306, 1
                  %s311 = sphi %s270, %s270
                  %s312 = sphi %s268, %s268
                $region58: #{sentence_embedding_forward.1} parent=54 // loop_header_branch
                  %309 = sbr.rel (%p307) target = $region62
                $region59: #{sentence_embedding_forward.1} parent=54 // loop_body
                  _
                $region60: #{sentence_embedding_forward.1} parent=54 // loop_footer
                  %s310 = sadd.s32 1, %s306
                $region61: #{sentence_embedding_forward.1} parent=54 // loop_footer_branch
                  %305 = sbr.rel target = $region57
                $region62: #{sentence_embedding_forward.1} parent=54 // loop_exit
                  _
                %s314 = ssub.s32 16, 1
                loop: start=0, step=1, limit=1
                $region63: #{sentence_embedding_forward.1} parent=54 // loop_pre_header
                  _
                $region64: #{sentence_embedding_forward.1} parent=54 // loop_header
                  %s316 = sphi 0, %s320
                  %p317 = scmp.ge.s32.totalorder %s316, 1
                  %s321 = sphi %s270, %s270
                  %s322 = sphi %s268, %s268
                $region65: #{sentence_embedding_forward.1} parent=54 // loop_header_branch
                  %319 = sbr.rel (%p317) target = $region69
                $region66: #{sentence_embedding_forward.1} parent=54 // loop_body
                  %v323 = vld [vmem:[%s321] sm:%s314]
                  %324 = vst [vmem:[%s322] sm:%s314] %v323
                  %v325 = vld [vmem:[%s321 + $0x8] sm:%s314]
                  %326 = vst [vmem:[%s322 + $0x4] sm:%s314] %v325
                  %v327 = vld [vmem:[%s321 + $0x10] sm:%s314]
                  %328 = vst [vmem:[%s322 + $0x8] sm:%s314] %v327
                  %v329 = vld [vmem:[%s321 + $0x18] sm:%s314]
                  %330 = vst [vmem:[%s322 + $0xc] sm:%s314] %v329
                  %v331 = vld [vmem:[%s321 + $0x20] sm:%s314]
                  %332 = vst [vmem:[%s322 + $0x10] sm:%s314] %v331
                  %v333 = vld [vmem:[%s321 + $0x28] sm:%s314]
                  %334 = vst [vmem:[%s322 + $0x14] sm:%s314] %v333
                  %v335 = vld [vmem:[%s321 + $0x30] sm:%s314]
                  %336 = vst [vmem:[%s322 + $0x18] sm:%s314] %v335
                  %v337 = vld [vmem:[%s321 + $0x38] sm:%s314]
                  %338 = vst [vmem:[%s322 + $0x1c] sm:%s314] %v337
                $region67: #{sentence_embedding_forward.1} parent=54 // loop_footer
                  %s320 = sadd.s32 1, %s316
                $region68: #{sentence_embedding_forward.1} parent=54 // loop_footer_branch
                  %315 = sbr.rel target = $region64
                $region69: #{sentence_embedding_forward.1} parent=54 // loop_exit
                  _
              $region55: #{sentence_embedding_forward.1} parent=39 // pred_fallthru
                _
            $region40: #{sentence_embedding_forward.1} parent=35 // pred_fallthru
              _
            // Predicated region
            $region41: #{sentence_embedding_forward.1} parent=35 // pred_check
              _
            $region42: #{sentence_embedding_forward.1} parent=35 // pred_check_branch
              %276 = sbr.rel (0) target = $region44
            $region43: #{sentence_embedding_forward.1} parent=35 // pred_region
              %s278 = ssub.s32 16, 1
              loop: start=0, step=1, limit=1
              $region45: #{sentence_embedding_forward.1} parent=43 // loop_pre_header
                _
              $region46: #{sentence_embedding_forward.1} parent=43 // loop_header
                %s280 = sphi 0, %s284
                %p281 = scmp.ge.s32.totalorder %s280, 1
                %s285 = sphi %s270, %s270
                %s286 = sphi %s268, %s268
              $region47: #{sentence_embedding_forward.1} parent=43 // loop_header_branch
                %283 = sbr.rel (%p281) target = $region51
              $region48: #{sentence_embedding_forward.1} parent=43 // loop_body
                %v287 = vld [vmem:[%s285] sm:%s278]
                %288 = vst [vmem:[%s286] sm:%s278] %v287
                %v289 = vld [vmem:[%s285 + $0x8] sm:%s278]
                %290 = vst [vmem:[%s286 + $0x4] sm:%s278] %v289
                %v291 = vld [vmem:[%s285 + $0x10] sm:%s278]
                %292 = vst [vmem:[%s286 + $0x8] sm:%s278] %v291
                %v293 = vld [vmem:[%s285 + $0x18] sm:%s278]
                %294 = vst [vmem:[%s286 + $0xc] sm:%s278] %v293
                %v295 = vld [vmem:[%s285 + $0x20] sm:%s278]
                %296 = vst [vmem:[%s286 + $0x10] sm:%s278] %v295
                %v297 = vld [vmem:[%s285 + $0x28] sm:%s278]
                %298 = vst [vmem:[%s286 + $0x14] sm:%s278] %v297
                %v299 = vld [vmem:[%s285 + $0x30] sm:%s278]
                %300 = vst [vmem:[%s286 + $0x18] sm:%s278] %v299
                %v301 = vld [vmem:[%s285 + $0x38] sm:%s278]
                %302 = vst [vmem:[%s286 + $0x1c] sm:%s278] %v301
              $region49: #{sentence_embedding_forward.1} parent=43 // loop_footer
                %s284 = sadd.s32 1, %s280
              $region50: #{sentence_embedding_forward.1} parent=43 // loop_footer_branch
                %279 = sbr.rel target = $region46
              $region51: #{sentence_embedding_forward.1} parent=43 // loop_exit
                _
            $region44: #{sentence_embedding_forward.1} parent=35 // pred_fallthru
              _
          $region36: #{sentence_embedding_forward.1} parent=31 // pred_fallthru
            _
          %339 = vnop
        $region32: #{sentence_embedding_forward.1} parent=27 // pred_fallthru
          _
        // Predicated region
        $region70: #{sentence_embedding_forward.1} parent=27 // pred_check
          %p340 = pneg %p61
        $region71: #{sentence_embedding_forward.1} parent=27 // pred_check_branch
          %342 = sbr.rel (%p340) target = $region73
        $region72: #{sentence_embedding_forward.1} parent=27 // pred_region
          %s343 = sand.u32 %s51, 1
          %s344 = sand.u32 %s51, 1
          %s345 = smul.addr %s344, 64
          %s346 = scalar_lea.vmem [#allocation4], %s345
          %s347 = smul.addr %s15, 8
          %s348 = scalar_lea.vmem %s1, %s347
          // Predicated region
          $region74: #{sentence_embedding_forward.1} parent=72 // pred_check
            _
          $region75: #{sentence_embedding_forward.1} parent=72 // pred_check_branch
            %350 = sbr.rel (0) target = $region77
          $region76: #{sentence_embedding_forward.1} parent=72 // pred_region
            // Predicated region
            $region78: #{sentence_embedding_forward.1} parent=76 // pred_check
              _
            $region79: #{sentence_embedding_forward.1} parent=76 // pred_check_branch
              %352 = sbr.rel (0) target = $region81
            $region80: #{sentence_embedding_forward.1} parent=76 // pred_region
              // Predicated region
              $region93: #{sentence_embedding_forward.1} parent=80 // pred_check
                _
              $region94: #{sentence_embedding_forward.1} parent=80 // pred_check_branch
                %382 = sbr.rel (0) target = $region96
              $region95: #{sentence_embedding_forward.1} parent=80 // pred_region
                loop: start=0, step=1, limit=1
                $region97: #{sentence_embedding_forward.1} parent=95 // loop_pre_header
                  _
                $region98: #{sentence_embedding_forward.1} parent=95 // loop_header
                  %s384 = sphi 0, %s388
                  %p385 = scmp.ge.s32.totalorder %s384, 1
                  %s389 = sphi %s348, %s348
                  %s390 = sphi %s346, %s346
                $region99: #{sentence_embedding_forward.1} parent=95 // loop_header_branch
                  %387 = sbr.rel (%p385) target = $region103
                $region100: #{sentence_embedding_forward.1} parent=95 // loop_body
                  %v391 = vld [vmem:[%s389] sm:$0xff]
                  %392 = vst [vmem:[%s390] sm:$0xff] %v391
                  %v393 = vld [vmem:[%s389 + $0x10] sm:$0xff]
                  %394 = vst [vmem:[%s390 + $0x8] sm:$0xff] %v393
                  %v395 = vld [vmem:[%s389 + $0x20] sm:$0xff]
                  %396 = vst [vmem:[%s390 + $0x10] sm:$0xff] %v395
                  %v397 = vld [vmem:[%s389 + $0x30] sm:$0xff]
                  %398 = vst [vmem:[%s390 + $0x18] sm:$0xff] %v397
                  %v399 = vld [vmem:[%s389 + $0x40] sm:$0xff]
                  %400 = vst [vmem:[%s390 + $0x20] sm:$0xff] %v399
                  %v401 = vld [vmem:[%s389 + $0x50] sm:$0xff]
                  %402 = vst [vmem:[%s390 + $0x28] sm:$0xff] %v401
                  %v403 = vld [vmem:[%s389 + $0x60] sm:$0xff]
                  %404 = vst [vmem:[%s390 + $0x30] sm:$0xff] %v403
                  %v405 = vld [vmem:[%s389 + $0x70] sm:$0xff]
                  %406 = vst [vmem:[%s390 + $0x38] sm:$0xff] %v405
                $region101: #{sentence_embedding_forward.1} parent=95 // loop_footer
                  %s388 = sadd.s32 1, %s384
                $region102: #{sentence_embedding_forward.1} parent=95 // loop_footer_branch
                  %383 = sbr.rel target = $region98
                $region103: #{sentence_embedding_forward.1} parent=95 // loop_exit
                  _
              $region96: #{sentence_embedding_forward.1} parent=80 // pred_fallthru
                _
              // Predicated region
              $region104: #{sentence_embedding_forward.1} parent=80 // pred_check
                _
              $region105: #{sentence_embedding_forward.1} parent=80 // pred_check_branch
                %408 = sbr.rel target = $region107
              $region106: #{sentence_embedding_forward.1} parent=80 // pred_region
                _
              $region107: #{sentence_embedding_forward.1} parent=80 // pred_fallthru
                _
            $region81: #{sentence_embedding_forward.1} parent=76 // pred_fallthru
              _
            // Predicated region
            $region82: #{sentence_embedding_forward.1} parent=76 // pred_check
              _
            $region83: #{sentence_embedding_forward.1} parent=76 // pred_check_branch
              %354 = sbr.rel target = $region85
            $region84: #{sentence_embedding_forward.1} parent=76 // pred_region
              %s356 = ssub.s32 256, 1
              loop: start=0, step=1, limit=1
              $region86: #{sentence_embedding_forward.1} parent=84 // loop_pre_header
                _
              $region87: #{sentence_embedding_forward.1} parent=84 // loop_header
                %s358 = sphi 0, %s362
                %p359 = scmp.ge.s32.totalorder %s358, 1
                %s363 = sphi %s348, %s348
                %s364 = sphi %s346, %s346
              $region88: #{sentence_embedding_forward.1} parent=84 // loop_header_branch
                %361 = sbr.rel (%p359) target = $region92
              $region89: #{sentence_embedding_forward.1} parent=84 // loop_body
                %v365 = vld [vmem:[%s363] sm:%s356]
                %366 = vst [vmem:[%s364] sm:%s356] %v365
                %v367 = vld [vmem:[%s363 + $0x10] sm:%s356]
                %368 = vst [vmem:[%s364 + $0x8] sm:%s356] %v367
                %v369 = vld [vmem:[%s363 + $0x20] sm:%s356]
                %370 = vst [vmem:[%s364 + $0x10] sm:%s356] %v369
                %v371 = vld [vmem:[%s363 + $0x30] sm:%s356]
                %372 = vst [vmem:[%s364 + $0x18] sm:%s356] %v371
                %v373 = vld [vmem:[%s363 + $0x40] sm:%s356]
                %374 = vst [vmem:[%s364 + $0x20] sm:%s356] %v373
                %v375 = vld [vmem:[%s363 + $0x50] sm:%s356]
                %376 = vst [vmem:[%s364 + $0x28] sm:%s356] %v375
                %v377 = vld [vmem:[%s363 + $0x60] sm:%s356]
                %378 = vst [vmem:[%s364 + $0x30] sm:%s356] %v377
                %v379 = vld [vmem:[%s363 + $0x70] sm:%s356]
                %380 = vst [vmem:[%s364 + $0x38] sm:%s356] %v379
              $region90: #{sentence_embedding_forward.1} parent=84 // loop_footer
                %s362 = sadd.s32 1, %s358
              $region91: #{sentence_embedding_forward.1} parent=84 // loop_footer_branch
                %357 = sbr.rel target = $region87
              $region92: #{sentence_embedding_forward.1} parent=84 // loop_exit
                _
            $region85: #{sentence_embedding_forward.1} parent=76 // pred_fallthru
              _
          $region77: #{sentence_embedding_forward.1} parent=72 // pred_fallthru
            _
          %409 = vnop
        $region73: #{sentence_embedding_forward.1} parent=27 // pred_fallthru
          _
      $region28: #{sentence_embedding_forward.1} parent=5 // pred_fallthru
        _
      %p410 = scmp.le.s32.totalorder 1, %s15
      %p411 = scmp.lt.s32.totalorder %s15, 3
      %p412 = pnand %p410, %p411
      %p413 = pneg %p412
      // Predicated region
      $region108: #{sentence_embedding_forward.1} parent=5 // pred_check
        _
      $region109: #{sentence_embedding_forward.1} parent=5 // pred_check_branch
        %415 = sbr.rel (%p412) target = $region111
      $region110: #{sentence_embedding_forward.1} parent=5 // pred_region
        %s416 = ssub.s32 %s15, 1
        %s417 = sand.u32 %s28, 1
        %s418 = sand.u32 %s28, 1
        %s419 = smul.addr %s418, 32
        %s420 = scalar_lea.vmem [#allocation3], %s419
        // Predicated region
        $region112: #{sentence_embedding_forward.1} parent=110 // pred_check
          %p421 = pneg %p41
        $region113: #{sentence_embedding_forward.1} parent=110 // pred_check_branch
          %423 = sbr.rel (%p421) target = $region115
        $region114: #{sentence_embedding_forward.1} parent=110 // pred_region
          _
        $region115: #{sentence_embedding_forward.1} parent=110 // pred_fallthru
          _
        %s424 = sand.u32 %s54, 1
        %s425 = sand.u32 %s54, 1
        %s426 = smul.addr %s425, 64
        %s427 = scalar_lea.vmem [#allocation4], %s426
        // Predicated region
        $region116: #{sentence_embedding_forward.1} parent=110 // pred_check
          %p428 = pneg %p67
        $region117: #{sentence_embedding_forward.1} parent=110 // pred_check_branch
          %430 = sbr.rel (%p428) target = $region119
        $region118: #{sentence_embedding_forward.1} parent=110 // pred_region
          _
        $region119: #{sentence_embedding_forward.1} parent=110 // pred_fallthru
          _
        %s431 = sand.u32 %s28, 1
        %s432 = sand.u32 %s28, 1
        %s433 = smul.addr %s432, 32
        %s434 = scalar_lea.vmem [#allocation3], %s433
        %p435 = pneg %p41
        %p436 = pneg %p38
        %s437 = sand.u32 %s54, 1
        %s438 = sand.u32 %s54, 1
        %s439 = smul.addr %s438, 64
        %s440 = scalar_lea.vmem [#allocation4], %s439
        %p441 = pneg %p67
        %p442 = pneg %p64
        %p443 = pneg %p88
        %p444 = pneg %p85
        %p445 = pneg %p109
        %p446 = pneg %p106
        %p447 = pneg %p130
        %p448 = pneg %p127
        %p449 = pneg %p156
        %p450 = pneg %p153
        %s451 = sand.u32 %s143, 1
        %s452 = sand.u32 %s143, 1
        %s453 = smul.addr %s452, 64
        %s454 = scalar_lea.vmem [#allocation5], %s453
        %p455 = pneg %p182
        %p456 = pneg %p179
        %s457 = sand.u32 %s169, 1
        %s458 = sand.u32 %s169, 1
        %s459 = smul.addr %s458, 64
        %s460 = scalar_lea.vmem [#allocation6], %s459
        %p461 = pneg %p208
        %p462 = pneg %p205
        %p463 = scmp.lt.s32.totalorder %s20, 1
        %s464 = scalar_select %p463, %s20, 1
        %s465 = smul.addr %s464, 8
        %s466 = scalar_lea.vmem %s7, %s465
        %p467 = pneg %p234
        %p468 = pneg %p231
        %p469 = scmp.lt.s32.totalorder %s20, 1
        %s470 = scalar_select %p469, %s20, 1
        %s471 = smul.addr %s470, 8
        %s472 = scalar_lea.vmem %s8, %s471
        %p473 = scmp.lt.s32.totalorder %s20, 1
        %s474 = scalar_select %p473, %s20, 1
        %s475 = smul.addr %s474, 8
        %s476 = scalar_lea.vmem %s7, %s475
        %p477 = scmp.lt.s32.totalorder %s20, 1
        %s478 = scalar_select %p477, %s20, 1
        %s479 = smul.addr %s478, 8
        %s480 = scalar_lea.vmem %s8, %s479
        %v482 = vld [vmem:[%s2] sm:$0xff]
        %v483 = vld [vmem:[%s2 + $0x8] sm:$0xff]
        %v484 = vld [vmem:[%s2 + $0x10] sm:$0xff]
        %v485 = vld [vmem:[%s2 + $0x18] sm:$0xff]
        %v486 = vld [vmem:[%s4] sm:$0x3]
        %v487 = vld [vmem:[%s420] sm:$0xf]
        %v489 = vlaneseq
        %v490 = vshrl.u32 %v489, 7
        %v491 = vsub.s32 0, %v490
        %v492 = vrot.slane %v486, %v491
        %v493 = vlaneseq
        %v494 = vshrl.u32 %v493, 7
        %v495 = vsub.s32 1, %v494
        %v496 = vrot.slane %v486, %v495
        %v503 = vunpack.c.l.b16 %v482
        %v504 = vunpack.c.h.b16 %v482
        %v505 = vunpack.c.l.b16 %v483
        %v506 = vunpack.c.h.b16 %v483
        %v507 = vunpack.c.l.b16 %v484
        %v508 = vunpack.c.h.b16 %v484
        %v509 = vunpack.c.l.b16 %v485
        %v510 = vunpack.c.h.b16 %v485
        %v511 = vpack.c.b16 %v505, %v503
        %v512 = vpack.c.b16 %v506, %v504
        %v513 = vpack.c.b16 %v509, %v507
        %v514 = vpack.c.b16 %v510, %v508
        %vm519 = vcmask 261120
        %v521 = vsel %vm519, %v487, 0
        %523 = vmatprep.subr.bf16.mxu0 0
        %524 = vmatpush1.bf16.msra.mxu0 0
        %525 = vmatprep.subr.bf16.mxu0 0
        %526 = vmatpush1.bf16.msra.mxu0 0
        %527 = vmatprep.subr.bf16.mxu0 0
        %528 = vmatpush1.bf16.msra.mxu0 0
        %529 = vmatprep.subr.bf16.mxu0 0
        %530 = vmatpush1.bf16.msra.mxu0 0
        %531 = vmatprep.subr.bf16.mxu0 0
        %532 = vmatpush1.bf16.msra.mxu0 0
        %533 = vmatprep.subr.bf16.mxu0 0
        %534 = vmatpush1.bf16.msra.mxu0 0
        %535 = vmatprep.subr.bf16.mxu0 %v514
        %536 = vmatpush1.bf16.msra.mxu0 %v513
        %537 = vmatprep.subr.bf16.mxu0 %v512
        %538 = vmatpush1.bf16.msra.mxu0 %v511
        %539 = vmatprep.subr.bf16.mxu0 0
        %540 = vmatpush2.bf16.msra.mxu0 0
        %541 = vmatprep.subr.bf16.mxu0 0
        %542 = vmatpush2.bf16.msra.mxu0 0
        %543 = vmatprep.subr.bf16.mxu0 0
        %544 = vmatpush2.bf16.msra.mxu0 0
        %545 = vmatprep.subr.bf16.mxu0 0
        %546 = vmatpush2.bf16.msra.mxu0 0
        %547 = vmatprep.subr.bf16.mxu0 0
        %548 = vmatpush2.bf16.msra.mxu0 0
        %549 = vmatprep.subr.bf16.mxu0 0
        %550 = vmatpush2.bf16.msra.mxu0 0
        %551 = vmatprep.subr.bf16.mxu0 0
        %552 = vmatpush2.bf16.msra.mxu0 0
        %553 = vmatprep.subr.bf16.mxu0 0
        %554 = vmatpush2.bf16.msra.mxu0 0
        %555 = vmatprep.mubr.bf16.mxu0 0
        %556 = vmatmul.mubr.bf16.gmra.mxu0 %v521
        %v557 = vpop.f32.mrf.mxu0
        %v558 = vadd.f32 %v492, %v557
        %v559 = vpop.f32.mrf.mxu0
        %v560 = vadd.f32 %v496, %v559
        %v561 = vpop.f32.mrf.mxu0
        %v562 = vpop.f32.mrf.mxu0
        %563 = vdwg.mxu0
        %564 = vst [vmem:[#allocation2] sm:$0xff] %v558
        %565 = vst [vmem:[#allocation2 + $0x8] sm:$0xff] %v560
        %s566 = scalar_lea.vmem %s420, 4 [#allocation3]
        %v567 = vld [vmem:[%s566] sm:$0xf]
        %v569 = vsel %vm519, %v567, 0
        %571 = vmatprep.subr.bf16.mxu0 0
        %572 = vmatpush1.bf16.msra.mxu0 0
        %573 = vmatprep.subr.bf16.mxu0 0
        %574 = vmatpush1.bf16.msra.mxu0 0
        %575 = vmatprep.subr.bf16.mxu0 0
        %576 = vmatpush1.bf16.msra.mxu0 0
        %577 = vmatprep.subr.bf16.mxu0 0
        %578 = vmatpush1.bf16.msra.mxu0 0
        %579 = vmatprep.subr.bf16.mxu0 0
        %580 = vmatpush1.bf16.msra.mxu0 0
        %581 = vmatprep.subr.bf16.mxu0 0
        %582 = vmatpush1.bf16.msra.mxu0 0
        %583 = vmatprep.subr.bf16.mxu0 %v514
        %584 = vmatpush1.bf16.msra.mxu0 %v513
        %585 = vmatprep.subr.bf16.mxu0 %v512
        %586 = vmatpush1.bf16.msra.mxu0 %v511
        %587 = vmatprep.subr.bf16.mxu0 0
        %588 = vmatpush2.bf16.msra.mxu0 0
        %589 = vmatprep.subr.bf16.mxu0 0
        %590 = vmatpush2.bf16.msra.mxu0 0
        %591 = vmatprep.subr.bf16.mxu0 0
        %592 = vmatpush2.bf16.msra.mxu0 0
        %593 = vmatprep.subr.bf16.mxu0 0
        %594 = vmatpush2.bf16.msra.mxu0 0
        %595 = vmatprep.subr.bf16.mxu0 0
        %596 = vmatpush2.bf16.msra.mxu0 0
        %597 = vmatprep.subr.bf16.mxu0 0
        %598 = vmatpush2.bf16.msra.mxu0 0
        %599 = vmatprep.subr.bf16.mxu0 0
        %600 = vmatpush2.bf16.msra.mxu0 0
        %601 = vmatprep.subr.bf16.mxu0 0
        %602 = vmatpush2.bf16.msra.mxu0 0
        %603 = vmatprep.mubr.bf16.mxu0 0
        %604 = vmatmul.mubr.bf16.gmra.mxu0 %v569
        %v605 = vpop.f32.mrf.mxu0
        %v606 = vadd.f32 %v492, %v605
        %v607 = vpop.f32.mrf.mxu0
        %v608 = vadd.f32 %v496, %v607
        %v609 = vpop.f32.mrf.mxu0
        %v610 = vpop.f32.mrf.mxu0
        %611 = vdwg.mxu0
        %612 = vst [vmem:[#allocation2 + $0x10] sm:$0xff] %v606
        %613 = vst [vmem:[#allocation2 + $0x18] sm:$0xff] %v608
        %s614 = scalar_lea.vmem %s420, 8 [#allocation3]
        %v615 = vld [vmem:[%s614] sm:$0xf]
        %v617 = vsel %vm519, %v615, 0
        %619 = vmatprep.subr.bf16.mxu0 0
        %620 = vmatpush1.bf16.msra.mxu0 0
        %621 = vmatprep.subr.bf16.mxu0 0
        %622 = vmatpush1.bf16.msra.mxu0 0
        %623 = vmatprep.subr.bf16.mxu0 0
        %624 = vmatpush1.bf16.msra.mxu0 0
        %625 = vmatprep.subr.bf16.mxu0 0
        %626 = vmatpush1.bf16.msra.mxu0 0
        %627 = vmatprep.subr.bf16.mxu0 0
        %628 = vmatpush1.bf16.msra.mxu0 0
        %629 = vmatprep.subr.bf16.mxu0 0
        %630 = vmatpush1.bf16.msra.mxu0 0
        %631 = vmatprep.subr.bf16.mxu0 %v514
        %632 = vmatpush1.bf16.msra.mxu0 %v513
        %633 = vmatprep.subr.bf16.mxu0 %v512
        %634 = vmatpush1.bf16.msra.mxu0 %v511
        %635 = vmatprep.subr.bf16.mxu0 0
        %636 = vmatpush2.bf16.msra.mxu0 0
        %637 = vmatprep.subr.bf16.mxu0 0
        %638 = vmatpush2.bf16.msra.mxu0 0
        %639 = vmatprep.subr.bf16.mxu0 0
        %640 = vmatpush2.bf16.msra.mxu0 0
        %641 = vmatprep.subr.bf16.mxu0 0
        %642 = vmatpush2.bf16.msra.mxu0 0
        %643 = vmatprep.subr.bf16.mxu0 0
        %644 = vmatpush2.bf16.msra.mxu0 0
        %645 = vmatprep.subr.bf16.mxu0 0
        %646 = vmatpush2.bf16.msra.mxu0 0
        %647 = vmatprep.subr.bf16.mxu0 0
        %648 = vmatpush2.bf16.msra.mxu0 0
        %649 = vmatprep.subr.bf16.mxu0 0
        %650 = vmatpush2.bf16.msra.mxu0 0
        %651 = vmatprep.mubr.bf16.mxu0 0
        %652 = vmatmul.mubr.bf16.gmra.mxu0 %v617
        %v653 = vpop.f32.mrf.mxu0
        %v654 = vadd.f32 %v492, %v653
        %v655 = vpop.f32.mrf.mxu0
        %v656 = vadd.f32 %v496, %v655
        %v657 = vpop.f32.mrf.mxu0
        %v658 = vpop.f32.mrf.mxu0
        %659 = vdwg.mxu0
        %660 = vst [vmem:[#allocation2 + $0x20] sm:$0xff] %v654
        %661 = vst [vmem:[#allocation2 + $0x28] sm:$0xff] %v656
        %s662 = scalar_lea.vmem %s420, 12 [#allocation3]
        %v663 = vld [vmem:[%s662] sm:$0xf]
        %v665 = vsel %vm519, %v663, 0
        %667 = vmatprep.subr.bf16.mxu0 0
        %668 = vmatpush1.bf16.msra.mxu0 0
        %669 = vmatprep.subr.bf16.mxu0 0
        %670 = vmatpush1.bf16.msra.mxu0 0
        %671 = vmatprep.subr.bf16.mxu0 0
        %672 = vmatpush1.bf16.msra.mxu0 0
        %673 = vmatprep.subr.bf16.mxu0 0
        %674 = vmatpush1.bf16.msra.mxu0 0
        %675 = vmatprep.subr.bf16.mxu0 0
        %676 = vmatpush1.bf16.msra.mxu0 0
        %677 = vmatprep.subr.bf16.mxu0 0
        %678 = vmatpush1.bf16.msra.mxu0 0
        %679 = vmatprep.subr.bf16.mxu0 %v514
        %680 = vmatpush1.bf16.msra.mxu0 %v513
        %681 = vmatprep.subr.bf16.mxu0 %v512
        %682 = vmatpush1.bf16.msra.mxu0 %v511
        %683 = vmatprep.subr.bf16.mxu0 0
        %684 = vmatpush2.bf16.msra.mxu0 0
        %685 = vmatprep.subr.bf16.mxu0 0
        %686 = vmatpush2.bf16.msra.mxu0 0
        %687 = vmatprep.subr.bf16.mxu0 0
        %688 = vmatpush2.bf16.msra.mxu0 0
        %689 = vmatprep.subr.bf16.mxu0 0
        %690 = vmatpush2.bf16.msra.mxu0 0
        %691 = vmatprep.subr.bf16.mxu0 0
        %692 = vmatpush2.bf16.msra.mxu0 0
        %693 = vmatprep.subr.bf16.mxu0 0
        %694 = vmatpush2.bf16.msra.mxu0 0
        %695 = vmatprep.subr.bf16.mxu0 0
        %696 = vmatpush2.bf16.msra.mxu0 0
        %697 = vmatprep.subr.bf16.mxu0 0
        %698 = vmatpush2.bf16.msra.mxu0 0
        %699 = vmatprep.mubr.bf16.mxu0 0
        %700 = vmatmul.mubr.bf16.gmra.mxu0 %v665
        %v701 = vpop.f32.mrf.mxu0
        %v702 = vadd.f32 %v492, %v701
        %v703 = vpop.f32.mrf.mxu0
        %v704 = vadd.f32 %v496, %v703
        %v705 = vpop.f32.mrf.mxu0
        %v706 = vpop.f32.mrf.mxu0
        %707 = vdwg.mxu0
        %708 = vst [vmem:[#allocation2 + $0x30] sm:$0xff] %v702
        %709 = vst [vmem:[#allocation2 + $0x38] sm:$0xff] %v704
        %s710 = scalar_lea.vmem %s420, 16 [#allocation3]
        %v711 = vld [vmem:[%s710] sm:$0xf]
        %v713 = vsel %vm519, %v711, 0
        %715 = vmatprep.subr.bf16.mxu0 0
        %716 = vmatpush1.bf16.msra.mxu0 0
        %717 = vmatprep.subr.bf16.mxu0 0
        %718 = vmatpush1.bf16.msra.mxu0 0
        %719 = vmatprep.subr.bf16.mxu0 0
        %720 = vmatpush1.bf16.msra.mxu0 0
        %721 = vmatprep.subr.bf16.mxu0 0
        %722 = vmatpush1.bf16.msra.mxu0 0
        %723 = vmatprep.subr.bf16.mxu0 0
        %724 = vmatpush1.bf16.msra.mxu0 0
        %725 = vmatprep.subr.bf16.mxu0 0
        %726 = vmatpush1.bf16.msra.mxu0 0
        %727 = vmatprep.subr.bf16.mxu0 %v514
        %728 = vmatpush1.bf16.msra.mxu0 %v513
        %729 = vmatprep.subr.bf16.mxu0 %v512
        %730 = vmatpush1.bf16.msra.mxu0 %v511
        %731 = vmatprep.subr.bf16.mxu0 0
        %732 = vmatpush2.bf16.msra.mxu0 0
        %733 = vmatprep.subr.bf16.mxu0 0
        %734 = vmatpush2.bf16.msra.mxu0 0
        %735 = vmatprep.subr.bf16.mxu0 0
        %736 = vmatpush2.bf16.msra.mxu0 0
        %737 = vmatprep.subr.bf16.mxu0 0
        %738 = vmatpush2.bf16.msra.mxu0 0
        %739 = vmatprep.subr.bf16.mxu0 0
        %740 = vmatpush2.bf16.msra.mxu0 0
        %741 = vmatprep.subr.bf16.mxu0 0
        %742 = vmatpush2.bf16.msra.mxu0 0
        %743 = vmatprep.subr.bf16.mxu0 0
        %744 = vmatpush2.bf16.msra.mxu0 0
        %745 = vmatprep.subr.bf16.mxu0 0
        %746 = vmatpush2.bf16.msra.mxu0 0
        %747 = vmatprep.mubr.bf16.mxu0 0
        %748 = vmatmul.mubr.bf16.gmra.mxu0 %v713
        %v749 = vpop.f32.mrf.mxu0
        %v750 = vadd.f32 %v492, %v749
        %v751 = vpop.f32.mrf.mxu0
        %v752 = vadd.f32 %v496, %v751
        %v753 = vpop.f32.mrf.mxu0
        %v754 = vpop.f32.mrf.mxu0
        %755 = vdwg.mxu0
        %756 = vst [vmem:[#allocation2 + $0x40] sm:$0xff] %v750
        %757 = vst [vmem:[#allocation2 + $0x48] sm:$0xff] %v752
        %s758 = scalar_lea.vmem %s420, 20 [#allocation3]
        %v759 = vld [vmem:[%s758] sm:$0xf]
        %v761 = vsel %vm519, %v759, 0
        %763 = vmatprep.subr.bf16.mxu0 0
        %764 = vmatpush1.bf16.msra.mxu0 0
        %765 = vmatprep.subr.bf16.mxu0 0
        %766 = vmatpush1.bf16.msra.mxu0 0
        %767 = vmatprep.subr.bf16.mxu0 0
        %768 = vmatpush1.bf16.msra.mxu0 0
        %769 = vmatprep.subr.bf16.mxu0 0
        %770 = vmatpush1.bf16.msra.mxu0 0
        %771 = vmatprep.subr.bf16.mxu0 0
        %772 = vmatpush1.bf16.msra.mxu0 0
        %773 = vmatprep.subr.bf16.mxu0 0
        %774 = vmatpush1.bf16.msra.mxu0 0
        %775 = vmatprep.subr.bf16.mxu0 %v514
        %776 = vmatpush1.bf16.msra.mxu0 %v513
        %777 = vmatprep.subr.bf16.mxu0 %v512
        %778 = vmatpush1.bf16.msra.mxu0 %v511
        %779 = vmatprep.subr.bf16.mxu0 0
        %780 = vmatpush2.bf16.msra.mxu0 0
        %781 = vmatprep.subr.bf16.mxu0 0
        %782 = vmatpush2.bf16.msra.mxu0 0
        %783 = vmatprep.subr.bf16.mxu0 0
        %784 = vmatpush2.bf16.msra.mxu0 0
        %785 = vmatprep.subr.bf16.mxu0 0
        %786 = vmatpush2.bf16.msra.mxu0 0
        %787 = vmatprep.subr.bf16.mxu0 0
        %788 = vmatpush2.bf16.msra.mxu0 0
        %789 = vmatprep.subr.bf16.mxu0 0
        %790 = vmatpush2.bf16.msra.mxu0 0
        %791 = vmatprep.subr.bf16.mxu0 0
        %792 = vmatpush2.bf16.msra.mxu0 0
        %793 = vmatprep.subr.bf16.mxu0 0
        %794 = vmatpush2.bf16.msra.mxu0 0
        %795 = vmatprep.mubr.bf16.mxu0 0
        %796 = vmatmul.mubr.bf16.gmra.mxu0 %v761
        %v797 = vpop.f32.mrf.mxu0
        %v798 = vadd.f32 %v492, %v797
        %v799 = vpop.f32.mrf.mxu0
        %v800 = vadd.f32 %v496, %v799
        %v801 = vpop.f32.mrf.mxu0
        %v802 = vpop.f32.mrf.mxu0
        %803 = vdwg.mxu0
        %804 = vst [vmem:[#allocation2 + $0x50] sm:$0xff] %v798
        %805 = vst [vmem:[#allocation2 + $0x58] sm:$0xff] %v800
        %s806 = scalar_lea.vmem %s420, 24 [#allocation3]
        %v807 = vld [vmem:[%s806] sm:$0xf]
        %v809 = vsel %vm519, %v807, 0
        %811 = vmatprep.subr.bf16.mxu0 0
        %812 = vmatpush1.bf16.msra.mxu0 0
        %813 = vmatprep.subr.bf16.mxu0 0
        %814 = vmatpush1.bf16.msra.mxu0 0
        %815 = vmatprep.subr.bf16.mxu0 0
        %816 = vmatpush1.bf16.msra.mxu0 0
        %817 = vmatprep.subr.bf16.mxu0 0
        %818 = vmatpush1.bf16.msra.mxu0 0
        %819 = vmatprep.subr.bf16.mxu0 0
        %820 = vmatpush1.bf16.msra.mxu0 0
        %821 = vmatprep.subr.bf16.mxu0 0
        %822 = vmatpush1.bf16.msra.mxu0 0
        %823 = vmatprep.subr.bf16.mxu0 %v514
        %824 = vmatpush1.bf16.msra.mxu0 %v513
        %825 = vmatprep.subr.bf16.mxu0 %v512
        %826 = vmatpush1.bf16.msra.mxu0 %v511
        %827 = vmatprep.subr.bf16.mxu0 0
        %828 = vmatpush2.bf16.msra.mxu0 0
        %829 = vmatprep.subr.bf16.mxu0 0
        %830 = vmatpush2.bf16.msra.mxu0 0
        %831 = vmatprep.subr.bf16.mxu0 0
        %832 = vmatpush2.bf16.msra.mxu0 0
        %833 = vmatprep.subr.bf16.mxu0 0
        %834 = vmatpush2.bf16.msra.mxu0 0
        %835 = vmatprep.subr.bf16.mxu0 0
        %836 = vmatpush2.bf16.msra.mxu0 0
        %837 = vmatprep.subr.bf16.mxu0 0
        %838 = vmatpush2.bf16.msra.mxu0 0
        %839 = vmatprep.subr.bf16.mxu0 0
        %840 = vmatpush2.bf16.msra.mxu0 0
        %841 = vmatprep.subr.bf16.mxu0 0
        %842 = vmatpush2.bf16.msra.mxu0 0
        %843 = vmatprep.mubr.bf16.mxu0 0
        %844 = vmatmul.mubr.bf16.gmra.mxu0 %v809
        %v845 = vpop.f32.mrf.mxu0
        %v846 = vadd.f32 %v492, %v845
        %v847 = vpop.f32.mrf.mxu0
        %v848 = vadd.f32 %v496, %v847
        %v849 = vpop.f32.mrf.mxu0
        %v850 = vpop.f32.mrf.mxu0
        %851 = vdwg.mxu0
        %852 = vst [vmem:[#allocation2 + $0x60] sm:$0xff] %v846
        %853 = vst [vmem:[#allocation2 + $0x68] sm:$0xff] %v848
        %s854 = scalar_lea.vmem %s420, 28 [#allocation3]
        %v855 = vld [vmem:[%s854] sm:$0xf]
        %v857 = vsel %vm519, %v855, 0
        %859 = vmatprep.subr.bf16.mxu0 0
        %860 = vmatpush1.bf16.msra.mxu0 0
        %861 = vmatprep.subr.bf16.mxu0 0
        %862 = vmatpush1.bf16.msra.mxu0 0
        %863 = vmatprep.subr.bf16.mxu0 0
        %864 = vmatpush1.bf16.msra.mxu0 0
        %865 = vmatprep.subr.bf16.mxu0 0
        %866 = vmatpush1.bf16.msra.mxu0 0
        %867 = vmatprep.subr.bf16.mxu0 0
        %868 = vmatpush1.bf16.msra.mxu0 0
        %869 = vmatprep.subr.bf16.mxu0 0
        %870 = vmatpush1.bf16.msra.mxu0 0
        %871 = vmatprep.subr.bf16.mxu0 %v514
        %872 = vmatpush1.bf16.msra.mxu0 %v513
        %873 = vmatprep.subr.bf16.mxu0 %v512
        %874 = vmatpush1.bf16.msra.mxu0 %v511
        %875 = vmatprep.subr.bf16.mxu0 0
        %876 = vmatpush2.bf16.msra.mxu0 0
        %877 = vmatprep.subr.bf16.mxu0 0
        %878 = vmatpush2.bf16.msra.mxu0 0
        %879 = vmatprep.subr.bf16.mxu0 0
        %880 = vmatpush2.bf16.msra.mxu0 0
        %881 = vmatprep.subr.bf16.mxu0 0
        %882 = vmatpush2.bf16.msra.mxu0 0
        %883 = vmatprep.subr.bf16.mxu0 0
        %884 = vmatpush2.bf16.msra.mxu0 0
        %885 = vmatprep.subr.bf16.mxu0 0
        %886 = vmatpush2.bf16.msra.mxu0 0
        %887 = vmatprep.subr.bf16.mxu0 0
        %888 = vmatpush2.bf16.msra.mxu0 0
        %889 = vmatprep.subr.bf16.mxu0 0
        %890 = vmatpush2.bf16.msra.mxu0 0
        %891 = vmatprep.mubr.bf16.mxu0 0
        %892 = vmatmul.mubr.bf16.gmra.mxu0 %v857
        %v893 = vpop.f32.mrf.mxu0
        %v894 = vadd.f32 %v492, %v893
        %v895 = vpop.f32.mrf.mxu0
        %v896 = vadd.f32 %v496, %v895
        %v897 = vpop.f32.mrf.mxu0
        %v898 = vpop.f32.mrf.mxu0
        %899 = vdwg.mxu0
        %900 = vst [vmem:[#allocation2 + $0x70] sm:$0xff] %v894
        %901 = vst [vmem:[#allocation2 + $0x78] sm:$0xff] %v896
        %v902 = vld [vmem:[%s3] sm:$0xff]
        %v903 = vld [vmem:[%s3 + $0x8] sm:$0xff]
        %v904 = vld [vmem:[%s3 + $0x10] sm:$0xff]
        %v905 = vld [vmem:[%s3 + $0x18] sm:$0xff]
        %v910 = vunpack.c.l.b16 %v902
        %v911 = vunpack.c.h.b16 %v902
        %v912 = vunpack.c.l.b16 %v903
        %v913 = vunpack.c.h.b16 %v903
        %v914 = vunpack.c.l.b16 %v904
        %v915 = vunpack.c.h.b16 %v904
        %v916 = vunpack.c.l.b16 %v905
        %v917 = vunpack.c.h.b16 %v905
        %v918 = vpack.c.b16 %v912, %v910
        %v919 = vpack.c.b16 %v913, %v911
        %v920 = vpack.c.b16 %v916, %v914
        %v921 = vpack.c.b16 %v917, %v915
        %v927 = vsel %vm519, 0, 0
        %929 = vmatprep.subr.bf16.mxu0 0
        %930 = vmatpush1.bf16.msra.mxu0 0
        %931 = vmatprep.subr.bf16.mxu0 0
        %932 = vmatpush1.bf16.msra.mxu0 0
        %933 = vmatprep.subr.bf16.mxu0 0
        %934 = vmatpush1.bf16.msra.mxu0 0
        %935 = vmatprep.subr.bf16.mxu0 0
        %936 = vmatpush1.bf16.msra.mxu0 0
        %937 = vmatprep.subr.bf16.mxu0 0
        %938 = vmatpush1.bf16.msra.mxu0 0
        %939 = vmatprep.subr.bf16.mxu0 0
        %940 = vmatpush1.bf16.msra.mxu0 0
        %941 = vmatprep.subr.bf16.mxu0 %v921
        %942 = vmatpush1.bf16.msra.mxu0 %v920
        %943 = vmatprep.subr.bf16.mxu0 %v919
        %944 = vmatpush1.bf16.msra.mxu0 %v918
        %945 = vmatprep.subr.bf16.mxu0 0
        %946 = vmatpush2.bf16.msra.mxu0 0
        %947 = vmatprep.subr.bf16.mxu0 0
        %948 = vmatpush2.bf16.msra.mxu0 0
        %949 = vmatprep.subr.bf16.mxu0 0
        %950 = vmatpush2.bf16.msra.mxu0 0
        %951 = vmatprep.subr.bf16.mxu0 0
        %952 = vmatpush2.bf16.msra.mxu0 0
        %953 = vmatprep.subr.bf16.mxu0 0
        %954 = vmatpush2.bf16.msra.mxu0 0
        %955 = vmatprep.subr.bf16.mxu0 0
        %956 = vmatpush2.bf16.msra.mxu0 0
        %957 = vmatprep.subr.bf16.mxu0 0
        %958 = vmatpush2.bf16.msra.mxu0 0
        %959 = vmatprep.subr.bf16.mxu0 0
        %960 = vmatpush2.bf16.msra.mxu0 0
        %961 = vmatprep.mubr.bf16.mxu0 0
        %962 = vmatmul.mubr.bf16.gmra.mxu0 %v927
        %v963 = vpop.f32.mrf.mxu0
        %v964 = vadd.f32 0.0, %v963
        %v965 = vpop.f32.mrf.mxu0
        %v966 = vpop.f32.mrf.mxu0
        %v967 = vpop.f32.mrf.mxu0
        %v968 = vadd.f32 0.0, %v967
        %969 = vdwg.mxu0
        %v970 = vld [vmem:[#allocation2] sm:$0xff]
        %v971 = vadd.f32 %v970, %v964
        %v972 = vld [vmem:[#allocation2 + $0x78] sm:$0xff]
        %v973 = vadd.f32 %v972, %v968
        %v974 = vxor.u32 %v971, 2147483648
        %v975 = vxor.u32 %v973, 2147483648
        %v976 = vmul.f32 %v974, 1.442695
        %v977 = vpow.pop %v976
        %v978 = vmul.f32 %v975, 1.442695
        %v979 = vpow.pop %v978
        %v980 = vadd.f32 %v977, 1.0
        %v981 = vadd.f32 %v979, 1.0
        %v982 = vrcp.pop %v980
        %v983 = vmul.f32 1.0, %v982
        %v984 = vrcp.pop %v981
        %v985 = vmul.f32 1.0, %v984
        %v986 = vtanh.pop %v971
        %v987 = vtanh.pop %v973
        %v988 = vmul.f32 %v983, 0.0
        %v989 = vmul.f32 %v985, 0.0
        %992 = vrot.lane.b32.xlu0 %v986, 64
        %v993 = vpop.permute.xlu0 %992
        %994 = vrot.lane.b32.xlu0 %v987, 64
        %v995 = vpop.permute.xlu0 %994
        %v998 = vmul.f32 %v983, %v993
        %v999 = vmul.f32 %v985, %v995
        %1002 = vrot.lane.b32.xlu0 %v998, 32
        %v1003 = vpop.permute.xlu0 %1002
        %1004 = vrot.lane.b32.xlu0 %v999, 32
        %v1005 = vpop.permute.xlu0 %1004
        %v1008 = vadd.f32 %v988, %v1003
        %v1009 = vadd.f32 %v989, %v1005
        %v1010 = vtanh.pop %v1008
        %v1011 = vtanh.pop %v1009
        %1014 = vrot.lane.b32.xlu0 %v1010, 64
        %v1015 = vpop.permute.xlu0 %1014
        %1016 = vrot.lane.b32.xlu0 %v1011, 64
        %v1017 = vpop.permute.xlu0 %1016
        %v1020 = vmul.f32 %v983, %v1015
        %v1021 = vmul.f32 %v985, %v1017
        %v1022 = vld [vmem:[%s427] sm:$0xff]
        %s1023 = scalar_lea.vmem %s427, 56 [#allocation4]
        %v1024 = vld [vmem:[%s1023] sm:$0xff]
        %vm1025 = vcmp.ne.f32.partialorder %v1022, 0.0
        %vm1026 = vcmp.ne.f32.partialorder %v1024, 0.0
        %1029 = vrot.lane.b32.xlu0 %v1008, 96
        %v1030 = vpop.permute.xlu0 %1029
        %1031 = vrot.lane.b32.xlu0 %v1009, 96
        %v1032 = vpop.permute.xlu0 %1031
        %v1035 = vsel %vm1025, %v1030, 0.0
        %v1036 = vsel %vm1026, %v1032, 0.0
        %1039 = vrot.lane.b32.xlu0 %v1020, 32
        %v1040 = vpop.permute.xlu0 %1039
        %1041 = vrot.lane.b32.xlu0 %v1021, 32
        %v1042 = vpop.permute.xlu0 %1041
        %v1045 = vsel %vm1025, %v1040, 0.0
        %v1046 = vsel %vm1026, %v1042, 0.0
        %1047 = vst.msk [vmem:[%s454] sm:$0xff] %vm519, %v1045
        %s1048 = scalar_lea.vmem %s460, 56 [#allocation6]
        %1049 = vst.msk [vmem:[%s1048] sm:$0xff] %vm519, %v1046
        %v1050 = vpack.c.bf16 %v1046, %v1045
        %v1052 = vsel %vm519, %v1050, 0
        %1054 = vmatprep.subr.bf16.mxu0 0
        %1055 = vmatpush1.bf16.msra.mxu0 0
        %1056 = vmatprep.subr.bf16.mxu0 0
        %1057 = vmatpush1.bf16.msra.mxu0 0
        %1058 = vmatprep.subr.bf16.mxu0 0
        %1059 = vmatpush1.bf16.msra.mxu0 0
        %1060 = vmatprep.subr.bf16.mxu0 0
        %1061 = vmatpush1.bf16.msra.mxu0 0
        %1062 = vmatprep.subr.bf16.mxu0 0
        %1063 = vmatpush1.bf16.msra.mxu0 0
        %1064 = vmatprep.subr.bf16.mxu0 0
        %1065 = vmatpush1.bf16.msra.mxu0 0
        %1066 = vmatprep.subr.bf16.mxu0 %v921
        %1067 = vmatpush1.bf16.msra.mxu0 %v920
        %1068 = vmatprep.subr.bf16.mxu0 %v919
        %1069 = vmatpush1.bf16.msra.mxu0 %v918
        %1070 = vmatprep.subr.bf16.mxu0 0
        %1071 = vmatpush2.bf16.msra.mxu0 0
        %1072 = vmatprep.subr.bf16.mxu0 0
        %1073 = vmatpush2.bf16.msra.mxu0 0
        %1074 = vmatprep.subr.bf16.mxu0 0
        %1075 = vmatpush2.bf16.msra.mxu0 0
        %1076 = vmatprep.subr.bf16.mxu0 0
        %1077 = vmatpush2.bf16.msra.mxu0 0
        %1078 = vmatprep.subr.bf16.mxu0 0
        %1079 = vmatpush2.bf16.msra.mxu0 0
        %1080 = vmatprep.subr.bf16.mxu0 0
        %1081 = vmatpush2.bf16.msra.mxu0 0
        %1082 = vmatprep.subr.bf16.mxu0 0
        %1083 = vmatpush2.bf16.msra.mxu0 0
        %1084 = vmatprep.subr.bf16.mxu0 0
        %1085 = vmatpush2.bf16.msra.mxu0 0
        %1086 = vmatprep.mubr.bf16.mxu0 0
        %1087 = vmatmul.mubr.bf16.gmra.mxu0 %v1052
        %v1088 = vpop.f32.mrf.mxu0
        %v1089 = vadd.f32 0.0, %v1088
        %v1090 = vpop.f32.mrf.mxu0
        %v1091 = vpop.f32.mrf.mxu0
        %v1092 = vpop.f32.mrf.mxu0
        %v1093 = vadd.f32 0.0, %v1092
        %1094 = vdwg.mxu0
        %v1095 = vld [vmem:[#allocation2 + $0x10] sm:$0xff]
        %v1096 = vadd.f32 %v1095, %v1089
        %v1097 = vld [vmem:[#allocation2 + $0x68] sm:$0xff]
        %v1098 = vadd.f32 %v1097, %v1093
        %v1099 = vxor.u32 %v1096, 2147483648
        %v1100 = vxor.u32 %v1098, 2147483648
        %v1101 = vmul.f32 %v1099, 1.442695
        %v1102 = vpow.pop %v1101
        %v1103 = vmul.f32 %v1100, 1.442695
        %v1104 = vpow.pop %v1103
        %v1105 = vadd.f32 %v1102, 1.0
        %v1106 = vadd.f32 %v1104, 1.0
        %v1107 = vrcp.pop %v1105
        %v1108 = vmul.f32 1.0, %v1107
        %v1109 = vrcp.pop %v1106
        %v1110 = vmul.f32 1.0, %v1109
        %v1111 = vtanh.pop %v1096
        %v1112 = vtanh.pop %v1098
        %1115 = vrot.lane.b32.xlu0 %v1035, 32
        %v1116 = vpop.permute.xlu0 %1115
        %1117 = vrot.lane.b32.xlu0 %v1036, 32
        %v1118 = vpop.permute.xlu0 %1117
        %v1121 = vmul.f32 %v1108, %v1116
        %v1122 = vmul.f32 %v1110, %v1118
        %1125 = vrot.lane.b32.xlu0 %v1111, 64
        %v1126 = vpop.permute.xlu0 %1125
        %1127 = vrot.lane.b32.xlu0 %v1112, 64
        %v1128 = vpop.permute.xlu0 %1127
        %v1131 = vmul.f32 %v1108, %v1126
        %v1132 = vmul.f32 %v1110, %v1128
        %1135 = vrot.lane.b32.xlu0 %v1131, 32
        %v1136 = vpop.permute.xlu0 %1135
        %1137 = vrot.lane.b32.xlu0 %v1132, 32
        %v1138 = vpop.permute.xlu0 %1137
        %v1141 = vadd.f32 %v1121, %v1136
        %v1142 = vadd.f32 %v1122, %v1138
        %v1143 = vtanh.pop %v1141
        %v1144 = vtanh.pop %v1142
        %1147 = vrot.lane.b32.xlu0 %v1143, 64
        %v1148 = vpop.permute.xlu0 %1147
        %1149 = vrot.lane.b32.xlu0 %v1144, 64
        %v1150 = vpop.permute.xlu0 %1149
        %v1153 = vmul.f32 %v1108, %v1148
        %v1154 = vmul.f32 %v1110, %v1150
        %s1155 = scalar_lea.vmem %s427, 8 [#allocation4]
        %v1156 = vld [vmem:[%s1155] sm:$0xff]
        %s1157 = scalar_lea.vmem %s427, 48 [#allocation4]
        %v1158 = vld [vmem:[%s1157] sm:$0xff]
        %vm1159 = vcmp.ne.f32.partialorder %v1156, 0.0
        %vm1160 = vcmp.ne.f32.partialorder %v1158, 0.0
        %1163 = vrot.lane.b32.xlu0 %v1141, 96
        %v1164 = vpop.permute.xlu0 %1163
        %1165 = vrot.lane.b32.xlu0 %v1142, 96
        %v1166 = vpop.permute.xlu0 %1165
        %v1169 = vsel %vm1159, %v1164, %v1035
        %v1170 = vsel %vm1160, %v1166, %v1036
        %1173 = vrot.lane.b32.xlu0 %v1153, 32
        %v1174 = vpop.permute.xlu0 %1173
        %1175 = vrot.lane.b32.xlu0 %v1154, 32
        %v1176 = vpop.permute.xlu0 %1175
        %v1179 = vsel %vm1159, %v1174, %v1045
        %v1180 = vsel %vm1160, %v1176, %v1046
        %v1181 = vsel %vm1159, %v1174, 0.0
        %v1182 = vsel %vm1160, %v1176, 0.0
        %s1183 = scalar_lea.vmem %s454, 8 [#allocation5]
        %1184 = vst.msk [vmem:[%s1183] sm:$0xff] %vm519, %v1181
        %s1185 = scalar_lea.vmem %s460, 48 [#allocation6]
        %1186 = vst.msk [vmem:[%s1185] sm:$0xff] %vm519, %v1182
        %v1187 = vpack.c.bf16 %v1180, %v1179
        %v1189 = vsel %vm519, %v1187, 0
        %1191 = vmatprep.subr.bf16.mxu0 0
        %1192 = vmatpush1.bf16.msra.mxu0 0
        %1193 = vmatprep.subr.bf16.mxu0 0
        %1194 = vmatpush1.bf16.msra.mxu0 0
        %1195 = vmatprep.subr.bf16.mxu0 0
        %1196 = vmatpush1.bf16.msra.mxu0 0
        %1197 = vmatprep.subr.bf16.mxu0 0
        %1198 = vmatpush1.bf16.msra.mxu0 0
        %1199 = vmatprep.subr.bf16.mxu0 0
        %1200 = vmatpush1.bf16.msra.mxu0 0
        %1201 = vmatprep.subr.bf16.mxu0 0
        %1202 = vmatpush1.bf16.msra.mxu0 0
        %1203 = vmatprep.subr.bf16.mxu0 %v921
        %1204 = vmatpush1.bf16.msra.mxu0 %v920
        %1205 = vmatprep.subr.bf16.mxu0 %v919
        %1206 = vmatpush1.bf16.msra.mxu0 %v918
        %1207 = vmatprep.subr.bf16.mxu0 0
        %1208 = vmatpush2.bf16.msra.mxu0 0
        %1209 = vmatprep.subr.bf16.mxu0 0
        %1210 = vmatpush2.bf16.msra.mxu0 0
        %1211 = vmatprep.subr.bf16.mxu0 0
        %1212 = vmatpush2.bf16.msra.mxu0 0
        %1213 = vmatprep.subr.bf16.mxu0 0
        %1214 = vmatpush2.bf16.msra.mxu0 0
        %1215 = vmatprep.subr.bf16.mxu0 0
        %1216 = vmatpush2.bf16.msra.mxu0 0
        %1217 = vmatprep.subr.bf16.mxu0 0
        %1218 = vmatpush2.bf16.msra.mxu0 0
        %1219 = vmatprep.subr.bf16.mxu0 0
        %1220 = vmatpush2.bf16.msra.mxu0 0
        %1221 = vmatprep.subr.bf16.mxu0 0
        %1222 = vmatpush2.bf16.msra.mxu0 0
        %1223 = vmatprep.mubr.bf16.mxu0 0
        %1224 = vmatmul.mubr.bf16.gmra.mxu0 %v1189
        %v1225 = vpop.f32.mrf.mxu0
        %v1226 = vadd.f32 0.0, %v1225
        %v1227 = vpop.f32.mrf.mxu0
        %v1228 = vpop.f32.mrf.mxu0
        %v1229 = vpop.f32.mrf.mxu0
        %v1230 = vadd.f32 0.0, %v1229
        %1231 = vdwg.mxu0
        %v1232 = vld [vmem:[#allocation2 + $0x20] sm:$0xff]
        %v1233 = vadd.f32 %v1232, %v1226
        %v1234 = vld [vmem:[#allocation2 + $0x58] sm:$0xff]
        %v1235 = vadd.f32 %v1234, %v1230
        %v1236 = vxor.u32 %v1233, 2147483648
        %v1237 = vxor.u32 %v1235, 2147483648
        %v1238 = vmul.f32 %v1236, 1.442695
        %v1239 = vpow.pop %v1238
        %v1240 = vmul.f32 %v1237, 1.442695
        %v1241 = vpow.pop %v1240
        %v1242 = vadd.f32 %v1239, 1.0
        %v1243 = vadd.f32 %v1241, 1.0
        %v1244 = vrcp.pop %v1242
        %v1245 = vmul.f32 1.0, %v1244
        %v1246 = vrcp.pop %v1243
        %v1247 = vmul.f32 1.0, %v1246
        %v1248 = vtanh.pop %v1233
        %v1249 = vtanh.pop %v1235
        %1252 = vrot.lane.b32.xlu0 %v1169, 32
        %v1253 = vpop.permute.xlu0 %1252
        %1254 = vrot.lane.b32.xlu0 %v1170, 32
        %v1255 = vpop.permute.xlu0 %1254
        %v1258 = vmul.f32 %v1245, %v1253
        %v1259 = vmul.f32 %v1247, %v1255
        %1262 = vrot.lane.b32.xlu0 %v1248, 64
        %v1263 = vpop.permute.xlu0 %1262
        %1264 = vrot.lane.b32.xlu0 %v1249, 64
        %v1265 = vpop.permute.xlu0 %1264
        %v1268 = vmul.f32 %v1245, %v1263
        %v1269 = vmul.f32 %v1247, %v1265
        %1272 = vrot.lane.b32.xlu0 %v1268, 32
        %v1273 = vpop.permute.xlu0 %1272
        %1274 = vrot.lane.b32.xlu0 %v1269, 32
        %v1275 = vpop.permute.xlu0 %1274
        %v1278 = vadd.f32 %v1258, %v1273
        %v1279 = vadd.f32 %v1259, %v1275
        %v1280 = vtanh.pop %v1278
        %v1281 = vtanh.pop %v1279
        %1284 = vrot.lane.b32.xlu0 %v1280, 64
        %v1285 = vpop.permute.xlu0 %1284
        %1286 = vrot.lane.b32.xlu0 %v1281, 64
        %v1287 = vpop.permute.xlu0 %1286
        %v1290 = vmul.f32 %v1245, %v1285
        %v1291 = vmul.f32 %v1247, %v1287
        %s1292 = scalar_lea.vmem %s427, 16 [#allocation4]
        %v1293 = vld [vmem:[%s1292] sm:$0xff]
        %s1294 = scalar_lea.vmem %s427, 40 [#allocation4]
        %v1295 = vld [vmem:[%s1294] sm:$0xff]
        %vm1296 = vcmp.ne.f32.partialorder %v1293, 0.0
        %vm1297 = vcmp.ne.f32.partialorder %v1295, 0.0
        %1300 = vrot.lane.b32.xlu0 %v1278, 96
        %v1301 = vpop.permute.xlu0 %1300
        %1302 = vrot.lane.b32.xlu0 %v1279, 96
        %v1303 = vpop.permute.xlu0 %1302
        %v1306 = vsel %vm1296, %v1301, %v1169
        %v1307 = vsel %vm1297, %v1303, %v1170
        %1310 = vrot.lane.b32.xlu0 %v1290, 32
        %v1311 = vpop.permute.xlu0 %1310
        %1312 = vrot.lane.b32.xlu0 %v1291, 32
        %v1313 = vpop.permute.xlu0 %1312
        %v1316 = vsel %vm1296, %v1311, %v1179
        %v1317 = vsel %vm1297, %v1313, %v1180
        %v1318 = vsel %vm1296, %v1311, 0.0
        %v1319 = vsel %vm1297, %v1313, 0.0
        %s1320 = scalar_lea.vmem %s454, 16 [#allocation5]
        %1321 = vst.msk [vmem:[%s1320] sm:$0xff] %vm519, %v1318
        %s1322 = scalar_lea.vmem %s460, 40 [#allocation6]
        %1323 = vst.msk [vmem:[%s1322] sm:$0xff] %vm519, %v1319
        %v1324 = vpack.c.bf16 %v1317, %v1316
        %v1326 = vsel %vm519, %v1324, 0
        %1328 = vmatprep.subr.bf16.mxu0 0
        %1329 = vmatpush1.bf16.msra.mxu0 0
        %1330 = vmatprep.subr.bf16.mxu0 0
        %1331 = vmatpush1.bf16.msra.mxu0 0
        %1332 = vmatprep.subr.bf16.mxu0 0
        %1333 = vmatpush1.bf16.msra.mxu0 0
        %1334 = vmatprep.subr.bf16.mxu0 0
        %1335 = vmatpush1.bf16.msra.mxu0 0
        %1336 = vmatprep.subr.bf16.mxu0 0
        %1337 = vmatpush1.bf16.msra.mxu0 0
        %1338 = vmatprep.subr.bf16.mxu0 0
        %1339 = vmatpush1.bf16.msra.mxu0 0
        %1340 = vmatprep.subr.bf16.mxu0 %v921
        %1341 = vmatpush1.bf16.msra.mxu0 %v920
        %1342 = vmatprep.subr.bf16.mxu0 %v919
        %1343 = vmatpush1.bf16.msra.mxu0 %v918
        %1344 = vmatprep.subr.bf16.mxu0 0
        %1345 = vmatpush2.bf16.msra.mxu0 0
        %1346 = vmatprep.subr.bf16.mxu0 0
        %1347 = vmatpush2.bf16.msra.mxu0 0
        %1348 = vmatprep.subr.bf16.mxu0 0
        %1349 = vmatpush2.bf16.msra.mxu0 0
        %1350 = vmatprep.subr.bf16.mxu0 0
        %1351 = vmatpush2.bf16.msra.mxu0 0
        %1352 = vmatprep.subr.bf16.mxu0 0
        %1353 = vmatpush2.bf16.msra.mxu0 0
        %1354 = vmatprep.subr.bf16.mxu0 0
        %1355 = vmatpush2.bf16.msra.mxu0 0
        %1356 = vmatprep.subr.bf16.mxu0 0
        %1357 = vmatpush2.bf16.msra.mxu0 0
        %1358 = vmatprep.subr.bf16.mxu0 0
        %1359 = vmatpush2.bf16.msra.mxu0 0
        %1360 = vmatprep.mubr.bf16.mxu0 0
        %1361 = vmatmul.mubr.bf16.gmra.mxu0 %v1326
        %v1362 = vpop.f32.mrf.mxu0
        %v1363 = vadd.f32 0.0, %v1362
        %v1364 = vpop.f32.mrf.mxu0
        %v1365 = vpop.f32.mrf.mxu0
        %v1366 = vpop.f32.mrf.mxu0
        %v1367 = vadd.f32 0.0, %v1366
        %1368 = vdwg.mxu0
        %v1369 = vld [vmem:[#allocation2 + $0x30] sm:$0xff]
        %v1370 = vadd.f32 %v1369, %v1363
        %v1371 = vld [vmem:[#allocation2 + $0x48] sm:$0xff]
        %v1372 = vadd.f32 %v1371, %v1367
        %v1373 = vxor.u32 %v1370, 2147483648
        %v1374 = vxor.u32 %v1372, 2147483648
        %v1375 = vmul.f32 %v1373, 1.442695
        %v1376 = vpow.pop %v1375
        %v1377 = vmul.f32 %v1374, 1.442695
        %v1378 = vpow.pop %v1377
        %v1379 = vadd.f32 %v1376, 1.0
        %v1380 = vadd.f32 %v1378, 1.0
        %v1381 = vrcp.pop %v1379
        %v1382 = vmul.f32 1.0, %v1381
        %v1383 = vrcp.pop %v1380
        %v1384 = vmul.f32 1.0, %v1383
        %v1385 = vtanh.pop %v1370
        %v1386 = vtanh.pop %v1372
        %1389 = vrot.lane.b32.xlu0 %v1306, 32
        %v1390 = vpop.permute.xlu0 %1389
        %1391 = vrot.lane.b32.xlu0 %v1307, 32
        %v1392 = vpop.permute.xlu0 %1391
        %v1395 = vmul.f32 %v1382, %v1390
        %v1396 = vmul.f32 %v1384, %v1392
        %1399 = vrot.lane.b32.xlu0 %v1385, 64
        %v1400 = vpop.permute.xlu0 %1399
        %1401 = vrot.lane.b32.xlu0 %v1386, 64
        %v1402 = vpop.permute.xlu0 %1401
        %v1405 = vmul.f32 %v1382, %v1400
        %v1406 = vmul.f32 %v1384, %v1402
        %1409 = vrot.lane.b32.xlu0 %v1405, 32
        %v1410 = vpop.permute.xlu0 %1409
        %1411 = vrot.lane.b32.xlu0 %v1406, 32
        %v1412 = vpop.permute.xlu0 %1411
        %v1415 = vadd.f32 %v1395, %v1410
        %v1416 = vadd.f32 %v1396, %v1412
        %v1417 = vtanh.pop %v1415
        %v1418 = vtanh.pop %v1416
        %1421 = vrot.lane.b32.xlu0 %v1417, 64
        %v1422 = vpop.permute.xlu0 %1421
        %1423 = vrot.lane.b32.xlu0 %v1418, 64
        %v1424 = vpop.permute.xlu0 %1423
        %v1427 = vmul.f32 %v1382, %v1422
        %v1428 = vmul.f32 %v1384, %v1424
        %s1429 = scalar_lea.vmem %s427, 24 [#allocation4]
        %v1430 = vld [vmem:[%s1429] sm:$0xff]
        %s1431 = scalar_lea.vmem %s427, 32 [#allocation4]
        %v1432 = vld [vmem:[%s1431] sm:$0xff]
        %vm1433 = vcmp.ne.f32.partialorder %v1430, 0.0
        %vm1434 = vcmp.ne.f32.partialorder %v1432, 0.0
        %1437 = vrot.lane.b32.xlu0 %v1415, 96
        %v1438 = vpop.permute.xlu0 %1437
        %1439 = vrot.lane.b32.xlu0 %v1416, 96
        %v1440 = vpop.permute.xlu0 %1439
        %v1443 = vsel %vm1433, %v1438, %v1306
        %v1444 = vsel %vm1434, %v1440, %v1307
        %1447 = vrot.lane.b32.xlu0 %v1427, 32
        %v1448 = vpop.permute.xlu0 %1447
        %1449 = vrot.lane.b32.xlu0 %v1428, 32
        %v1450 = vpop.permute.xlu0 %1449
        %v1453 = vsel %vm1433, %v1448, %v1316
        %v1454 = vsel %vm1434, %v1450, %v1317
        %v1455 = vsel %vm1433, %v1448, 0.0
        %v1456 = vsel %vm1434, %v1450, 0.0
        %s1457 = scalar_lea.vmem %s454, 24 [#allocation5]
        %1458 = vst.msk [vmem:[%s1457] sm:$0xff] %vm519, %v1455
        %s1459 = scalar_lea.vmem %s460, 32 [#allocation6]
        %1460 = vst.msk [vmem:[%s1459] sm:$0xff] %vm519, %v1456
        %v1461 = vpack.c.bf16 %v1454, %v1453
        %v1463 = vsel %vm519, %v1461, 0
        %1465 = vmatprep.subr.bf16.mxu0 0
        %1466 = vmatpush1.bf16.msra.mxu0 0
        %1467 = vmatprep.subr.bf16.mxu0 0
        %1468 = vmatpush1.bf16.msra.mxu0 0
        %1469 = vmatprep.subr.bf16.mxu0 0
        %1470 = vmatpush1.bf16.msra.mxu0 0
        %1471 = vmatprep.subr.bf16.mxu0 0
        %1472 = vmatpush1.bf16.msra.mxu0 0
        %1473 = vmatprep.subr.bf16.mxu0 0
        %1474 = vmatpush1.bf16.msra.mxu0 0
        %1475 = vmatprep.subr.bf16.mxu0 0
        %1476 = vmatpush1.bf16.msra.mxu0 0
        %1477 = vmatprep.subr.bf16.mxu0 %v921
        %1478 = vmatpush1.bf16.msra.mxu0 %v920
        %1479 = vmatprep.subr.bf16.mxu0 %v919
        %1480 = vmatpush1.bf16.msra.mxu0 %v918
        %1481 = vmatprep.subr.bf16.mxu0 0
        %1482 = vmatpush2.bf16.msra.mxu0 0
        %1483 = vmatprep.subr.bf16.mxu0 0
        %1484 = vmatpush2.bf16.msra.mxu0 0
        %1485 = vmatprep.subr.bf16.mxu0 0
        %1486 = vmatpush2.bf16.msra.mxu0 0
        %1487 = vmatprep.subr.bf16.mxu0 0
        %1488 = vmatpush2.bf16.msra.mxu0 0
        %1489 = vmatprep.subr.bf16.mxu0 0
        %1490 = vmatpush2.bf16.msra.mxu0 0
        %1491 = vmatprep.subr.bf16.mxu0 0
        %1492 = vmatpush2.bf16.msra.mxu0 0
        %1493 = vmatprep.subr.bf16.mxu0 0
        %1494 = vmatpush2.bf16.msra.mxu0 0
        %1495 = vmatprep.subr.bf16.mxu0 0
        %1496 = vmatpush2.bf16.msra.mxu0 0
        %1497 = vmatprep.mubr.bf16.mxu0 0
        %1498 = vmatmul.mubr.bf16.gmra.mxu0 %v1463
        %v1499 = vpop.f32.mrf.mxu0
        %v1500 = vadd.f32 0.0, %v1499
        %v1501 = vpop.f32.mrf.mxu0
        %v1502 = vpop.f32.mrf.mxu0
        %v1503 = vpop.f32.mrf.mxu0
        %v1504 = vadd.f32 0.0, %v1503
        %1505 = vdwg.mxu0
        %v1506 = vld [vmem:[#allocation2 + $0x40] sm:$0xff]
        %v1507 = vadd.f32 %v1506, %v1500
        %v1508 = vld [vmem:[#allocation2 + $0x38] sm:$0xff]
        %v1509 = vadd.f32 %v1508, %v1504
        %v1510 = vxor.u32 %v1507, 2147483648
        %v1511 = vxor.u32 %v1509, 2147483648
        %v1512 = vmul.f32 %v1510, 1.442695
        %v1513 = vpow.pop %v1512
        %v1514 = vmul.f32 %v1511, 1.442695
        %v1515 = vpow.pop %v1514
        %v1516 = vadd.f32 %v1513, 1.0
        %v1517 = vadd.f32 %v1515, 1.0
        %v1518 = vrcp.pop %v1516
        %v1519 = vmul.f32 1.0, %v1518
        %v1520 = vrcp.pop %v1517
        %v1521 = vmul.f32 1.0, %v1520
        %v1522 = vtanh.pop %v1507
        %v1523 = vtanh.pop %v1509
        %1526 = vrot.lane.b32.xlu0 %v1443, 32
        %v1527 = vpop.permute.xlu0 %1526
        %1528 = vrot.lane.b32.xlu0 %v1444, 32
        %v1529 = vpop.permute.xlu0 %1528
        %v1532 = vmul.f32 %v1519, %v1527
        %v1533 = vmul.f32 %v1521, %v1529
        %1536 = vrot.lane.b32.xlu0 %v1522, 64
        %v1537 = vpop.permute.xlu0 %1536
        %1538 = vrot.lane.b32.xlu0 %v1523, 64
        %v1539 = vpop.permute.xlu0 %1538
        %v1542 = vmul.f32 %v1519, %v1537
        %v1543 = vmul.f32 %v1521, %v1539
        %1546 = vrot.lane.b32.xlu0 %v1542, 32
        %v1547 = vpop.permute.xlu0 %1546
        %1548 = vrot.lane.b32.xlu0 %v1543, 32
        %v1549 = vpop.permute.xlu0 %1548
        %v1552 = vadd.f32 %v1532, %v1547
        %v1553 = vadd.f32 %v1533, %v1549
        %v1554 = vtanh.pop %v1552
        %v1555 = vtanh.pop %v1553
        %1558 = vrot.lane.b32.xlu0 %v1554, 64
        %v1559 = vpop.permute.xlu0 %1558
        %1560 = vrot.lane.b32.xlu0 %v1555, 64
        %v1561 = vpop.permute.xlu0 %1560
        %v1564 = vmul.f32 %v1519, %v1559
        %v1565 = vmul.f32 %v1521, %v1561
        %v1566 = vld [vmem:[%s1431] sm:$0xff]
        %v1567 = vld [vmem:[%s1429] sm:$0xff]
        %vm1568 = vcmp.ne.f32.partialorder %v1566, 0.0
        %vm1569 = vcmp.ne.f32.partialorder %v1567, 0.0
        %1572 = vrot.lane.b32.xlu0 %v1552, 96
        %v1573 = vpop.permute.xlu0 %1572
        %1574 = vrot.lane.b32.xlu0 %v1553, 96
        %v1575 = vpop.permute.xlu0 %1574
        %v1578 = vsel %vm1568, %v1573, %v1443
        %v1579 = vsel %vm1569, %v1575, %v1444
        %1582 = vrot.lane.b32.xlu0 %v1564, 32
        %v1583 = vpop.permute.xlu0 %1582
        %1584 = vrot.lane.b32.xlu0 %v1565, 32
        %v1585 = vpop.permute.xlu0 %1584
        %v1588 = vsel %vm1568, %v1583, %v1453
        %v1589 = vsel %vm1569, %v1585, %v1454
        %v1590 = vsel %vm1568, %v1583, 0.0
        %v1591 = vsel %vm1569, %v1585, 0.0
        %s1592 = scalar_lea.vmem %s454, 32 [#allocation5]
        %1593 = vst.msk [vmem:[%s1592] sm:$0xff] %vm519, %v1590
        %s1594 = scalar_lea.vmem %s460, 24 [#allocation6]
        %1595 = vst.msk [vmem:[%s1594] sm:$0xff] %vm519, %v1591
        %v1596 = vpack.c.bf16 %v1589, %v1588
        %v1598 = vsel %vm519, %v1596, 0
        %1600 = vmatprep.subr.bf16.mxu0 0
        %1601 = vmatpush1.bf16.msra.mxu0 0
        %1602 = vmatprep.subr.bf16.mxu0 0
        %1603 = vmatpush1.bf16.msra.mxu0 0
        %1604 = vmatprep.subr.bf16.mxu0 0
        %1605 = vmatpush1.bf16.msra.mxu0 0
        %1606 = vmatprep.subr.bf16.mxu0 0
        %1607 = vmatpush1.bf16.msra.mxu0 0
        %1608 = vmatprep.subr.bf16.mxu0 0
        %1609 = vmatpush1.bf16.msra.mxu0 0
        %1610 = vmatprep.subr.bf16.mxu0 0
        %1611 = vmatpush1.bf16.msra.mxu0 0
        %1612 = vmatprep.subr.bf16.mxu0 %v921
        %1613 = vmatpush1.bf16.msra.mxu0 %v920
        %1614 = vmatprep.subr.bf16.mxu0 %v919
        %1615 = vmatpush1.bf16.msra.mxu0 %v918
        %1616 = vmatprep.subr.bf16.mxu0 0
        %1617 = vmatpush2.bf16.msra.mxu0 0
        %1618 = vmatprep.subr.bf16.mxu0 0
        %1619 = vmatpush2.bf16.msra.mxu0 0
        %1620 = vmatprep.subr.bf16.mxu0 0
        %1621 = vmatpush2.bf16.msra.mxu0 0
        %1622 = vmatprep.subr.bf16.mxu0 0
        %1623 = vmatpush2.bf16.msra.mxu0 0
        %1624 = vmatprep.subr.bf16.mxu0 0
        %1625 = vmatpush2.bf16.msra.mxu0 0
        %1626 = vmatprep.subr.bf16.mxu0 0
        %1627 = vmatpush2.bf16.msra.mxu0 0
        %1628 = vmatprep.subr.bf16.mxu0 0
        %1629 = vmatpush2.bf16.msra.mxu0 0
        %1630 = vmatprep.subr.bf16.mxu0 0
        %1631 = vmatpush2.bf16.msra.mxu0 0
        %1632 = vmatprep.mubr.bf16.mxu0 0
        %1633 = vmatmul.mubr.bf16.gmra.mxu0 %v1598
        %v1634 = vpop.f32.mrf.mxu0
        %v1635 = vadd.f32 0.0, %v1634
        %v1636 = vpop.f32.mrf.mxu0
        %v1637 = vpop.f32.mrf.mxu0
        %v1638 = vpop.f32.mrf.mxu0
        %v1639 = vadd.f32 0.0, %v1638
        %1640 = vdwg.mxu0
        %v1641 = vld [vmem:[#allocation2 + $0x50] sm:$0xff]
        %v1642 = vadd.f32 %v1641, %v1635
        %v1643 = vld [vmem:[#allocation2 + $0x28] sm:$0xff]
        %v1644 = vadd.f32 %v1643, %v1639
        %v1645 = vxor.u32 %v1642, 2147483648
        %v1646 = vxor.u32 %v1644, 2147483648
        %v1647 = vmul.f32 %v1645, 1.442695
        %v1648 = vpow.pop %v1647
        %v1649 = vmul.f32 %v1646, 1.442695
        %v1650 = vpow.pop %v1649
        %v1651 = vadd.f32 %v1648, 1.0
        %v1652 = vadd.f32 %v1650, 1.0
        %v1653 = vrcp.pop %v1651
        %v1654 = vmul.f32 1.0, %v1653
        %v1655 = vrcp.pop %v1652
        %v1656 = vmul.f32 1.0, %v1655
        %v1657 = vtanh.pop %v1642
        %v1658 = vtanh.pop %v1644
        %1661 = vrot.lane.b32.xlu0 %v1578, 32
        %v1662 = vpop.permute.xlu0 %1661
        %1663 = vrot.lane.b32.xlu0 %v1579, 32
        %v1664 = vpop.permute.xlu0 %1663
        %v1667 = vmul.f32 %v1654, %v1662
        %v1668 = vmul.f32 %v1656, %v1664
        %1671 = vrot.lane.b32.xlu0 %v1657, 64
        %v1672 = vpop.permute.xlu0 %1671
        %1673 = vrot.lane.b32.xlu0 %v1658, 64
        %v1674 = vpop.permute.xlu0 %1673
        %v1677 = vmul.f32 %v1654, %v1672
        %v1678 = vmul.f32 %v1656, %v1674
        %1681 = vrot.lane.b32.xlu0 %v1677, 32
        %v1682 = vpop.permute.xlu0 %1681
        %1683 = vrot.lane.b32.xlu0 %v1678, 32
        %v1684 = vpop.permute.xlu0 %1683
        %v1687 = vadd.f32 %v1667, %v1682
        %v1688 = vadd.f32 %v1668, %v1684
        %v1689 = vtanh.pop %v1687
        %v1690 = vtanh.pop %v1688
        %1693 = vrot.lane.b32.xlu0 %v1689, 64
        %v1694 = vpop.permute.xlu0 %1693
        %1695 = vrot.lane.b32.xlu0 %v1690, 64
        %v1696 = vpop.permute.xlu0 %1695
        %v1699 = vmul.f32 %v1654, %v1694
        %v1700 = vmul.f32 %v1656, %v1696
        %v1701 = vld [vmem:[%s1294] sm:$0xff]
        %v1702 = vld [vmem:[%s1292] sm:$0xff]
        %vm1703 = vcmp.ne.f32.partialorder %v1701, 0.0
        %vm1704 = vcmp.ne.f32.partialorder %v1702, 0.0
        %1707 = vrot.lane.b32.xlu0 %v1687, 96
        %v1708 = vpop.permute.xlu0 %1707
        %1709 = vrot.lane.b32.xlu0 %v1688, 96
        %v1710 = vpop.permute.xlu0 %1709
        %v1713 = vsel %vm1703, %v1708, %v1578
        %v1714 = vsel %vm1704, %v1710, %v1579
        %1717 = vrot.lane.b32.xlu0 %v1699, 32
        %v1718 = vpop.permute.xlu0 %1717
        %1719 = vrot.lane.b32.xlu0 %v1700, 32
        %v1720 = vpop.permute.xlu0 %1719
        %v1723 = vsel %vm1703, %v1718, %v1588
        %v1724 = vsel %vm1704, %v1720, %v1589
        %v1725 = vsel %vm1703, %v1718, 0.0
        %v1726 = vsel %vm1704, %v1720, 0.0
        %s1727 = scalar_lea.vmem %s454, 40 [#allocation5]
        %1728 = vst.msk [vmem:[%s1727] sm:$0xff] %vm519, %v1725
        %s1729 = scalar_lea.vmem %s460, 16 [#allocation6]
        %1730 = vst.msk [vmem:[%s1729] sm:$0xff] %vm519, %v1726
        %v1731 = vpack.c.bf16 %v1724, %v1723
        %v1733 = vsel %vm519, %v1731, 0
        %1735 = vmatprep.subr.bf16.mxu0 0
        %1736 = vmatpush1.bf16.msra.mxu0 0
        %1737 = vmatprep.subr.bf16.mxu0 0
        %1738 = vmatpush1.bf16.msra.mxu0 0
        %1739 = vmatprep.subr.bf16.mxu0 0
        %1740 = vmatpush1.bf16.msra.mxu0 0
        %1741 = vmatprep.subr.bf16.mxu0 0
        %1742 = vmatpush1.bf16.msra.mxu0 0
        %1743 = vmatprep.subr.bf16.mxu0 0
        %1744 = vmatpush1.bf16.msra.mxu0 0
        %1745 = vmatprep.subr.bf16.mxu0 0
        %1746 = vmatpush1.bf16.msra.mxu0 0
        %1747 = vmatprep.subr.bf16.mxu0 %v921
        %1748 = vmatpush1.bf16.msra.mxu0 %v920
        %1749 = vmatprep.subr.bf16.mxu0 %v919
        %1750 = vmatpush1.bf16.msra.mxu0 %v918
        %1751 = vmatprep.subr.bf16.mxu0 0
        %1752 = vmatpush2.bf16.msra.mxu0 0
        %1753 = vmatprep.subr.bf16.mxu0 0
        %1754 = vmatpush2.bf16.msra.mxu0 0
        %1755 = vmatprep.subr.bf16.mxu0 0
        %1756 = vmatpush2.bf16.msra.mxu0 0
        %1757 = vmatprep.subr.bf16.mxu0 0
        %1758 = vmatpush2.bf16.msra.mxu0 0
        %1759 = vmatprep.subr.bf16.mxu0 0
        %1760 = vmatpush2.bf16.msra.mxu0 0
        %1761 = vmatprep.subr.bf16.mxu0 0
        %1762 = vmatpush2.bf16.msra.mxu0 0
        %1763 = vmatprep.subr.bf16.mxu0 0
        %1764 = vmatpush2.bf16.msra.mxu0 0
        %1765 = vmatprep.subr.bf16.mxu0 0
        %1766 = vmatpush2.bf16.msra.mxu0 0
        %1767 = vmatprep.mubr.bf16.mxu0 0
        %1768 = vmatmul.mubr.bf16.gmra.mxu0 %v1733
        %v1769 = vpop.f32.mrf.mxu0
        %v1770 = vadd.f32 0.0, %v1769
        %v1771 = vpop.f32.mrf.mxu0
        %v1772 = vpop.f32.mrf.mxu0
        %v1773 = vpop.f32.mrf.mxu0
        %v1774 = vadd.f32 0.0, %v1773
        %1775 = vdwg.mxu0
        %v1776 = vld [vmem:[#allocation2 + $0x60] sm:$0xff]
        %v1777 = vadd.f32 %v1776, %v1770
        %v1778 = vld [vmem:[#allocation2 + $0x18] sm:$0xff]
        %v1779 = vadd.f32 %v1778, %v1774
        %v1780 = vxor.u32 %v1777, 2147483648
        %v1781 = vxor.u32 %v1779, 2147483648
        %v1782 = vmul.f32 %v1780, 1.442695
        %v1783 = vpow.pop %v1782
        %v1784 = vmul.f32 %v1781, 1.442695
        %v1785 = vpow.pop %v1784
        %v1786 = vadd.f32 %v1783, 1.0
        %v1787 = vadd.f32 %v1785, 1.0
        %v1788 = vrcp.pop %v1786
        %v1789 = vmul.f32 1.0, %v1788
        %v1790 = vrcp.pop %v1787
        %v1791 = vmul.f32 1.0, %v1790
        %v1792 = vtanh.pop %v1777
        %v1793 = vtanh.pop %v1779
        %1796 = vrot.lane.b32.xlu0 %v1713, 32
        %v1797 = vpop.permute.xlu0 %1796
        %1798 = vrot.lane.b32.xlu0 %v1714, 32
        %v1799 = vpop.permute.xlu0 %1798
        %v1802 = vmul.f32 %v1789, %v1797
        %v1803 = vmul.f32 %v1791, %v1799
        %1806 = vrot.lane.b32.xlu0 %v1792, 64
        %v1807 = vpop.permute.xlu0 %1806
        %1808 = vrot.lane.b32.xlu0 %v1793, 64
        %v1809 = vpop.permute.xlu0 %1808
        %v1812 = vmul.f32 %v1789, %v1807
        %v1813 = vmul.f32 %v1791, %v1809
        %1816 = vrot.lane.b32.xlu0 %v1812, 32
        %v1817 = vpop.permute.xlu0 %1816
        %1818 = vrot.lane.b32.xlu0 %v1813, 32
        %v1819 = vpop.permute.xlu0 %1818
        %v1822 = vadd.f32 %v1802, %v1817
        %v1823 = vadd.f32 %v1803, %v1819
        %v1824 = vtanh.pop %v1822
        %v1825 = vtanh.pop %v1823
        %1828 = vrot.lane.b32.xlu0 %v1824, 64
        %v1829 = vpop.permute.xlu0 %1828
        %1830 = vrot.lane.b32.xlu0 %v1825, 64
        %v1831 = vpop.permute.xlu0 %1830
        %v1834 = vmul.f32 %v1789, %v1829
        %v1835 = vmul.f32 %v1791, %v1831
        %v1836 = vld [vmem:[%s1157] sm:$0xff]
        %v1837 = vld [vmem:[%s1155] sm:$0xff]
        %vm1838 = vcmp.ne.f32.partialorder %v1836, 0.0
        %vm1839 = vcmp.ne.f32.partialorder %v1837, 0.0
        %1842 = vrot.lane.b32.xlu0 %v1822, 96
        %v1843 = vpop.permute.xlu0 %1842
        %1844 = vrot.lane.b32.xlu0 %v1823, 96
        %v1845 = vpop.permute.xlu0 %1844
        %v1848 = vsel %vm1838, %v1843, %v1713
        %v1849 = vsel %vm1839, %v1845, %v1714
        %1852 = vrot.lane.b32.xlu0 %v1834, 32
        %v1853 = vpop.permute.xlu0 %1852
        %1854 = vrot.lane.b32.xlu0 %v1835, 32
        %v1855 = vpop.permute.xlu0 %1854
        %v1858 = vsel %vm1838, %v1853, %v1723
        %v1859 = vsel %vm1839, %v1855, %v1724
        %v1860 = vsel %vm1838, %v1853, 0.0
        %v1861 = vsel %vm1839, %v1855, 0.0
        %s1862 = scalar_lea.vmem %s454, 48 [#allocation5]
        %1863 = vst.msk [vmem:[%s1862] sm:$0xff] %vm519, %v1860
        %s1864 = scalar_lea.vmem %s460, 8 [#allocation6]
        %1865 = vst.msk [vmem:[%s1864] sm:$0xff] %vm519, %v1861
        %v1866 = vpack.c.bf16 %v1859, %v1858
        %v1868 = vsel %vm519, %v1866, 0
        %1870 = vmatprep.subr.bf16.mxu0 0
        %1871 = vmatpush1.bf16.msra.mxu0 0
        %1872 = vmatprep.subr.bf16.mxu0 0
        %1873 = vmatpush1.bf16.msra.mxu0 0
        %1874 = vmatprep.subr.bf16.mxu0 0
        %1875 = vmatpush1.bf16.msra.mxu0 0
        %1876 = vmatprep.subr.bf16.mxu0 0
        %1877 = vmatpush1.bf16.msra.mxu0 0
        %1878 = vmatprep.subr.bf16.mxu0 0
        %1879 = vmatpush1.bf16.msra.mxu0 0
        %1880 = vmatprep.subr.bf16.mxu0 0
        %1881 = vmatpush1.bf16.msra.mxu0 0
        %1882 = vmatprep.subr.bf16.mxu0 %v921
        %1883 = vmatpush1.bf16.msra.mxu0 %v920
        %1884 = vmatprep.subr.bf16.mxu0 %v919
        %1885 = vmatpush1.bf16.msra.mxu0 %v918
        %1886 = vmatprep.subr.bf16.mxu0 0
        %1887 = vmatpush2.bf16.msra.mxu0 0
        %1888 = vmatprep.subr.bf16.mxu0 0
        %1889 = vmatpush2.bf16.msra.mxu0 0
        %1890 = vmatprep.subr.bf16.mxu0 0
        %1891 = vmatpush2.bf16.msra.mxu0 0
        %1892 = vmatprep.subr.bf16.mxu0 0
        %1893 = vmatpush2.bf16.msra.mxu0 0
        %1894 = vmatprep.subr.bf16.mxu0 0
        %1895 = vmatpush2.bf16.msra.mxu0 0
        %1896 = vmatprep.subr.bf16.mxu0 0
        %1897 = vmatpush2.bf16.msra.mxu0 0
        %1898 = vmatprep.subr.bf16.mxu0 0
        %1899 = vmatpush2.bf16.msra.mxu0 0
        %1900 = vmatprep.subr.bf16.mxu0 0
        %1901 = vmatpush2.bf16.msra.mxu0 0
        %1902 = vmatprep.mubr.bf16.mxu0 0
        %1903 = vmatmul.mubr.bf16.gmra.mxu0 %v1868
        %v1904 = vpop.f32.mrf.mxu0
        %v1905 = vadd.f32 0.0, %v1904
        %v1906 = vpop.f32.mrf.mxu0
        %v1907 = vpop.f32.mrf.mxu0
        %v1908 = vpop.f32.mrf.mxu0
        %v1909 = vadd.f32 0.0, %v1908
        %1910 = vdwg.mxu0
        %v1911 = vld [vmem:[#allocation2 + $0x70] sm:$0xff]
        %v1912 = vadd.f32 %v1911, %v1905
        %v1913 = vld [vmem:[#allocation2 + $0x8] sm:$0xff]
        %v1914 = vadd.f32 %v1913, %v1909
        %v1915 = vxor.u32 %v1912, 2147483648
        %v1916 = vxor.u32 %v1914, 2147483648
        %v1917 = vmul.f32 %v1915, 1.442695
        %v1918 = vpow.pop %v1917
        %v1919 = vmul.f32 %v1916, 1.442695
        %v1920 = vpow.pop %v1919
        %v1921 = vadd.f32 %v1918, 1.0
        %v1922 = vadd.f32 %v1920, 1.0
        %v1923 = vrcp.pop %v1921
        %v1924 = vmul.f32 1.0, %v1923
        %v1925 = vrcp.pop %v1922
        %v1926 = vmul.f32 1.0, %v1925
        %v1927 = vtanh.pop %v1912
        %v1928 = vtanh.pop %v1914
        %1931 = vrot.lane.b32.xlu0 %v1848, 32
        %v1932 = vpop.permute.xlu0 %1931
        %1933 = vrot.lane.b32.xlu0 %v1849, 32
        %v1934 = vpop.permute.xlu0 %1933
        %v1937 = vmul.f32 %v1924, %v1932
        %v1938 = vmul.f32 %v1926, %v1934
        %1941 = vrot.lane.b32.xlu0 %v1927, 64
        %v1942 = vpop.permute.xlu0 %1941
        %1943 = vrot.lane.b32.xlu0 %v1928, 64
        %v1944 = vpop.permute.xlu0 %1943
        %v1947 = vmul.f32 %v1924, %v1942
        %v1948 = vmul.f32 %v1926, %v1944
        %1951 = vrot.lane.b32.xlu0 %v1947, 32
        %v1952 = vpop.permute.xlu0 %1951
        %1953 = vrot.lane.b32.xlu0 %v1948, 32
        %v1954 = vpop.permute.xlu0 %1953
        %v1957 = vadd.f32 %v1937, %v1952
        %v1958 = vadd.f32 %v1938, %v1954
        %v1959 = vtanh.pop %v1957
        %v1960 = vtanh.pop %v1958
        %1963 = vrot.lane.b32.xlu0 %v1959, 64
        %v1964 = vpop.permute.xlu0 %1963
        %1965 = vrot.lane.b32.xlu0 %v1960, 64
        %v1966 = vpop.permute.xlu0 %1965
        %v1969 = vmul.f32 %v1924, %v1964
        %v1970 = vmul.f32 %v1926, %v1966
        %v1971 = vld [vmem:[%s1023] sm:$0xff]
        %v1972 = vld [vmem:[%s427] sm:$0xff]
        %vm1973 = vcmp.ne.f32.partialorder %v1971, 0.0
        %vm1974 = vcmp.ne.f32.partialorder %v1972, 0.0
        %1977 = vrot.lane.b32.xlu0 %v1969, 32
        %v1978 = vpop.permute.xlu0 %1977
        %1979 = vrot.lane.b32.xlu0 %v1970, 32
        %v1980 = vpop.permute.xlu0 %1979
        %v1983 = vsel %vm1973, %v1978, %v1858
        %v1984 = vsel %vm1974, %v1980, %v1859
        %v1985 = vsel %vm1973, %v1978, 0.0
        %v1986 = vsel %vm1974, %v1980, 0.0
        %s1987 = scalar_lea.vmem %s454, 56 [#allocation5]
        %1988 = vst.msk [vmem:[%s1987] sm:$0xff] %vm519, %v1985
        %1989 = vst.msk [vmem:[%s460] sm:$0xff] %vm519, %v1986
        %1990 = vst.msk [vmem:[%s476] sm:$0xff] %vm519, %v1983
        %1991 = vst.msk [vmem:[%s480] sm:$0xff] %vm519, %v1984
        %s1992 = sand.u32 %s143, 1
        %s1993 = sand.u32 %s143, 1
        %s1994 = smul.addr %s1993, 64
        %s1995 = scalar_lea.vmem [#allocation5], %s1994
        %s1996 = sand.u32 %s169, 1
        %s1997 = sand.u32 %s169, 1
        %s1998 = smul.addr %s1997, 64
        %s1999 = scalar_lea.vmem [#allocation6], %s1998
        %p2000 = scmp.lt.s32.totalorder %s20, 1
        %s2001 = scalar_select %p2000, %s20, 1
        %s2002 = smul.addr %s2001, 8
        %s2003 = scalar_lea.vmem %s7, %s2002
        %p2004 = scmp.lt.s32.totalorder %s20, 1
        %s2005 = scalar_select %p2004, %s20, 1
        %s2006 = smul.addr %s2005, 8
        %s2007 = scalar_lea.vmem %s8, %s2006
        // Predicated region
        $region120: #{sentence_embedding_forward.1} parent=110 // pred_check
          %p2008 = pneg %p153
        $region121: #{sentence_embedding_forward.1} parent=110 // pred_check_branch
          %2010 = sbr.rel (%p2008) target = $region123
        $region122: #{sentence_embedding_forward.1} parent=110 // pred_region
          %s2011 = smul.addr %s20, 8
          %s2012 = scalar_lea.vmem %s5, %s2011
          // Predicated region
          $region124: #{sentence_embedding_forward.1} parent=122 // pred_check
            _
          $region125: #{sentence_embedding_forward.1} parent=122 // pred_check_branch
            %2014 = sbr.rel (0) target = $region127
          $region126: #{sentence_embedding_forward.1} parent=122 // pred_region
            // Predicated region
            $region128: #{sentence_embedding_forward.1} parent=126 // pred_check
              _
            $region129: #{sentence_embedding_forward.1} parent=126 // pred_check_branch
              %2016 = sbr.rel (0) target = $region131
            $region130: #{sentence_embedding_forward.1} parent=126 // pred_region
              // Predicated region
              $region143: #{sentence_embedding_forward.1} parent=130 // pred_check
                _
              $region144: #{sentence_embedding_forward.1} parent=130 // pred_check_branch
                %2046 = sbr.rel (0) target = $region146
              $region145: #{sentence_embedding_forward.1} parent=130 // pred_region
                loop: start=0, step=1, limit=1
                $region147: #{sentence_embedding_forward.1} parent=145 // loop_pre_header
                  _
                $region148: #{sentence_embedding_forward.1} parent=145 // loop_header
                  %s2048 = sphi 0, %s2052
                  %p2049 = scmp.ge.s32.totalorder %s2048, 1
                  %s2053 = sphi %s1995, %s1995
                  %s2054 = sphi %s2012, %s2012
                $region149: #{sentence_embedding_forward.1} parent=145 // loop_header_branch
                  %2051 = sbr.rel (%p2049) target = $region153
                $region150: #{sentence_embedding_forward.1} parent=145 // loop_body
                  %v2055 = vld [vmem:[%s2053] sm:$0xff]
                  %2056 = vst [vmem:[%s2054] sm:$0xff] %v2055
                  %v2057 = vld [vmem:[%s2053 + $0x8] sm:$0xff]
                  %2058 = vst [vmem:[%s2054 + $0x10] sm:$0xff] %v2057
                  %v2059 = vld [vmem:[%s2053 + $0x10] sm:$0xff]
                  %2060 = vst [vmem:[%s2054 + $0x20] sm:$0xff] %v2059
                  %v2061 = vld [vmem:[%s2053 + $0x18] sm:$0xff]
                  %2062 = vst [vmem:[%s2054 + $0x30] sm:$0xff] %v2061
                  %v2063 = vld [vmem:[%s2053 + $0x20] sm:$0xff]
                  %2064 = vst [vmem:[%s2054 + $0x40] sm:$0xff] %v2063
                  %v2065 = vld [vmem:[%s2053 + $0x28] sm:$0xff]
                  %2066 = vst [vmem:[%s2054 + $0x50] sm:$0xff] %v2065
                  %v2067 = vld [vmem:[%s2053 + $0x30] sm:$0xff]
                  %2068 = vst [vmem:[%s2054 + $0x60] sm:$0xff] %v2067
                  %v2069 = vld [vmem:[%s2053 + $0x38] sm:$0xff]
                  %2070 = vst [vmem:[%s2054 + $0x70] sm:$0xff] %v2069
                $region151: #{sentence_embedding_forward.1} parent=145 // loop_footer
                  %s2052 = sadd.s32 1, %s2048
                $region152: #{sentence_embedding_forward.1} parent=145 // loop_footer_branch
                  %2047 = sbr.rel target = $region148
                $region153: #{sentence_embedding_forward.1} parent=145 // loop_exit
                  _
              $region146: #{sentence_embedding_forward.1} parent=130 // pred_fallthru
                _
              // Predicated region
              $region154: #{sentence_embedding_forward.1} parent=130 // pred_check
                _
              $region155: #{sentence_embedding_forward.1} parent=130 // pred_check_branch
                %2072 = sbr.rel target = $region157
              $region156: #{sentence_embedding_forward.1} parent=130 // pred_region
                _
              $region157: #{sentence_embedding_forward.1} parent=130 // pred_fallthru
                _
            $region131: #{sentence_embedding_forward.1} parent=126 // pred_fallthru
              _
            // Predicated region
            $region132: #{sentence_embedding_forward.1} parent=126 // pred_check
              _
            $region133: #{sentence_embedding_forward.1} parent=126 // pred_check_branch
              %2018 = sbr.rel target = $region135
            $region134: #{sentence_embedding_forward.1} parent=126 // pred_region
              %s2020 = ssub.s32 256, 1
              loop: start=0, step=1, limit=1
              $region136: #{sentence_embedding_forward.1} parent=134 // loop_pre_header
                _
              $region137: #{sentence_embedding_forward.1} parent=134 // loop_header
                %s2022 = sphi 0, %s2026
                %p2023 = scmp.ge.s32.totalorder %s2022, 1
                %s2027 = sphi %s1995, %s1995
                %s2028 = sphi %s2012, %s2012
              $region138: #{sentence_embedding_forward.1} parent=134 // loop_header_branch
                %2025 = sbr.rel (%p2023) target = $region142
              $region139: #{sentence_embedding_forward.1} parent=134 // loop_body
                %v2029 = vld [vmem:[%s2027] sm:%s2020]
                %2030 = vst [vmem:[%s2028] sm:%s2020] %v2029
                %v2031 = vld [vmem:[%s2027 + $0x8] sm:%s2020]
                %2032 = vst [vmem:[%s2028 + $0x10] sm:%s2020] %v2031
                %v2033 = vld [vmem:[%s2027 + $0x10] sm:%s2020]
                %2034 = vst [vmem:[%s2028 + $0x20] sm:%s2020] %v2033
                %v2035 = vld [vmem:[%s2027 + $0x18] sm:%s2020]
                %2036 = vst [vmem:[%s2028 + $0x30] sm:%s2020] %v2035
                %v2037 = vld [vmem:[%s2027 + $0x20] sm:%s2020]
                %2038 = vst [vmem:[%s2028 + $0x40] sm:%s2020] %v2037
                %v2039 = vld [vmem:[%s2027 + $0x28] sm:%s2020]
                %2040 = vst [vmem:[%s2028 + $0x50] sm:%s2020] %v2039
                %v2041 = vld [vmem:[%s2027 + $0x30] sm:%s2020]
                %2042 = vst [vmem:[%s2028 + $0x60] sm:%s2020] %v2041
                %v2043 = vld [vmem:[%s2027 + $0x38] sm:%s2020]
                %2044 = vst [vmem:[%s2028 + $0x70] sm:%s2020] %v2043
              $region140: #{sentence_embedding_forward.1} parent=134 // loop_footer
                %s2026 = sadd.s32 1, %s2022
              $region141: #{sentence_embedding_forward.1} parent=134 // loop_footer_branch
                %2021 = sbr.rel target = $region137
              $region142: #{sentence_embedding_forward.1} parent=134 // loop_exit
                _
            $region135: #{sentence_embedding_forward.1} parent=126 // pred_fallthru
              _
          $region127: #{sentence_embedding_forward.1} parent=122 // pred_fallthru
            _
          %2073 = vnop
        $region123: #{sentence_embedding_forward.1} parent=110 // pred_fallthru
          _
        // Predicated region
        $region158: #{sentence_embedding_forward.1} parent=110 // pred_check
          %p2074 = pneg %p179
        $region159: #{sentence_embedding_forward.1} parent=110 // pred_check_branch
          %2076 = sbr.rel (%p2074) target = $region161
        $region160: #{sentence_embedding_forward.1} parent=110 // pred_region
          %s2077 = smul.addr %s20, 8
          %s2078 = scalar_lea.vmem %s6, %s2077
          // Predicated region
          $region162: #{sentence_embedding_forward.1} parent=160 // pred_check
            _
          $region163: #{sentence_embedding_forward.1} parent=160 // pred_check_branch
            %2080 = sbr.rel (0) target = $region165
          $region164: #{sentence_embedding_forward.1} parent=160 // pred_region
            // Predicated region
            $region166: #{sentence_embedding_forward.1} parent=164 // pred_check
              _
            $region167: #{sentence_embedding_forward.1} parent=164 // pred_check_branch
              %2082 = sbr.rel (0) target = $region169
            $region168: #{sentence_embedding_forward.1} parent=164 // pred_region
              // Predicated region
              $region181: #{sentence_embedding_forward.1} parent=168 // pred_check
                _
              $region182: #{sentence_embedding_forward.1} parent=168 // pred_check_branch
                %2112 = sbr.rel (0) target = $region184
              $region183: #{sentence_embedding_forward.1} parent=168 // pred_region
                loop: start=0, step=1, limit=1
                $region185: #{sentence_embedding_forward.1} parent=183 // loop_pre_header
                  _
                $region186: #{sentence_embedding_forward.1} parent=183 // loop_header
                  %s2114 = sphi 0, %s2118
                  %p2115 = scmp.ge.s32.totalorder %s2114, 1
                  %s2119 = sphi %s1999, %s1999
                  %s2120 = sphi %s2078, %s2078
                $region187: #{sentence_embedding_forward.1} parent=183 // loop_header_branch
                  %2117 = sbr.rel (%p2115) target = $region191
                $region188: #{sentence_embedding_forward.1} parent=183 // loop_body
                  %v2121 = vld [vmem:[%s2119] sm:$0xff]
                  %2122 = vst [vmem:[%s2120] sm:$0xff] %v2121
                  %v2123 = vld [vmem:[%s2119 + $0x8] sm:$0xff]
                  %2124 = vst [vmem:[%s2120 + $0x10] sm:$0xff] %v2123
                  %v2125 = vld [vmem:[%s2119 + $0x10] sm:$0xff]
                  %2126 = vst [vmem:[%s2120 + $0x20] sm:$0xff] %v2125
                  %v2127 = vld [vmem:[%s2119 + $0x18] sm:$0xff]
                  %2128 = vst [vmem:[%s2120 + $0x30] sm:$0xff] %v2127
                  %v2129 = vld [vmem:[%s2119 + $0x20] sm:$0xff]
                  %2130 = vst [vmem:[%s2120 + $0x40] sm:$0xff] %v2129
                  %v2131 = vld [vmem:[%s2119 + $0x28] sm:$0xff]
                  %2132 = vst [vmem:[%s2120 + $0x50] sm:$0xff] %v2131
                  %v2133 = vld [vmem:[%s2119 + $0x30] sm:$0xff]
                  %2134 = vst [vmem:[%s2120 + $0x60] sm:$0xff] %v2133
                  %v2135 = vld [vmem:[%s2119 + $0x38] sm:$0xff]
                  %2136 = vst [vmem:[%s2120 + $0x70] sm:$0xff] %v2135
                $region189: #{sentence_embedding_forward.1} parent=183 // loop_footer
                  %s2118 = sadd.s32 1, %s2114
                $region190: #{sentence_embedding_forward.1} parent=183 // loop_footer_branch
                  %2113 = sbr.rel target = $region186
                $region191: #{sentence_embedding_forward.1} parent=183 // loop_exit
                  _
              $region184: #{sentence_embedding_forward.1} parent=168 // pred_fallthru
                _
              // Predicated region
              $region192: #{sentence_embedding_forward.1} parent=168 // pred_check
                _
              $region193: #{sentence_embedding_forward.1} parent=168 // pred_check_branch
                %2138 = sbr.rel target = $region195
              $region194: #{sentence_embedding_forward.1} parent=168 // pred_region
                _
              $region195: #{sentence_embedding_forward.1} parent=168 // pred_fallthru
                _
            $region169: #{sentence_embedding_forward.1} parent=164 // pred_fallthru
              _
            // Predicated region
            $region170: #{sentence_embedding_forward.1} parent=164 // pred_check
              _
            $region171: #{sentence_embedding_forward.1} parent=164 // pred_check_branch
              %2084 = sbr.rel target = $region173
            $region172: #{sentence_embedding_forward.1} parent=164 // pred_region
              %s2086 = ssub.s32 256, 1
              loop: start=0, step=1, limit=1
              $region174: #{sentence_embedding_forward.1} parent=172 // loop_pre_header
                _
              $region175: #{sentence_embedding_forward.1} parent=172 // loop_header
                %s2088 = sphi 0, %s2092
                %p2089 = scmp.ge.s32.totalorder %s2088, 1
                %s2093 = sphi %s1999, %s1999
                %s2094 = sphi %s2078, %s2078
              $region176: #{sentence_embedding_forward.1} parent=172 // loop_header_branch
                %2091 = sbr.rel (%p2089) target = $region180
              $region177: #{sentence_embedding_forward.1} parent=172 // loop_body
                %v2095 = vld [vmem:[%s2093] sm:%s2086]
                %2096 = vst [vmem:[%s2094] sm:%s2086] %v2095
                %v2097 = vld [vmem:[%s2093 + $0x8] sm:%s2086]
                %2098 = vst [vmem:[%s2094 + $0x10] sm:%s2086] %v2097
                %v2099 = vld [vmem:[%s2093 + $0x10] sm:%s2086]
                %2100 = vst [vmem:[%s2094 + $0x20] sm:%s2086] %v2099
                %v2101 = vld [vmem:[%s2093 + $0x18] sm:%s2086]
                %2102 = vst [vmem:[%s2094 + $0x30] sm:%s2086] %v2101
                %v2103 = vld [vmem:[%s2093 + $0x20] sm:%s2086]
                %2104 = vst [vmem:[%s2094 + $0x40] sm:%s2086] %v2103
                %v2105 = vld [vmem:[%s2093 + $0x28] sm:%s2086]
                %2106 = vst [vmem:[%s2094 + $0x50] sm:%s2086] %v2105
                %v2107 = vld [vmem:[%s2093 + $0x30] sm:%s2086]
                %2108 = vst [vmem:[%s2094 + $0x60] sm:%s2086] %v2107
                %v2109 = vld [vmem:[%s2093 + $0x38] sm:%s2086]
                %2110 = vst [vmem:[%s2094 + $0x70] sm:%s2086] %v2109
              $region178: #{sentence_embedding_forward.1} parent=172 // loop_footer
                %s2092 = sadd.s32 1, %s2088
              $region179: #{sentence_embedding_forward.1} parent=172 // loop_footer_branch
                %2087 = sbr.rel target = $region175
              $region180: #{sentence_embedding_forward.1} parent=172 // loop_exit
                _
            $region173: #{sentence_embedding_forward.1} parent=164 // pred_fallthru
              _
          $region165: #{sentence_embedding_forward.1} parent=160 // pred_fallthru
            _
          %2139 = vnop
        $region161: #{sentence_embedding_forward.1} parent=110 // pred_fallthru
          _
        // Predicated region
        $region196: #{sentence_embedding_forward.1} parent=110 // pred_check
          %p2140 = pneg %p205
        $region197: #{sentence_embedding_forward.1} parent=110 // pred_check_branch
          %2142 = sbr.rel (%p2140) target = $region199
        $region198: #{sentence_embedding_forward.1} parent=110 // pred_region
          _
        $region199: #{sentence_embedding_forward.1} parent=110 // pred_fallthru
          _
        // Predicated region
        $region200: #{sentence_embedding_forward.1} parent=110 // pred_check
          %p2143 = pneg %p231
        $region201: #{sentence_embedding_forward.1} parent=110 // pred_check_branch
          %2145 = sbr.rel (%p2143) target = $region203
        $region202: #{sentence_embedding_forward.1} parent=110 // pred_region
          _
        $region203: #{sentence_embedding_forward.1} parent=110 // pred_fallthru
          _
      $region111: #{sentence_embedding_forward.1} parent=5 // pred_fallthru
        _
      %p2146 = scmp.le.s32.totalorder 2, %s15
      // Predicated region
      $region204: #{sentence_embedding_forward.1} parent=5 // pred_check
        %p2147 = pneg %p2146
      $region205: #{sentence_embedding_forward.1} parent=5 // pred_check_branch
        %2149 = sbr.rel (%p2147) target = $region207
      $region206: #{sentence_embedding_forward.1} parent=5 // pred_region
        %s2150 = ssub.s32 %s15, 2
        // Predicated region
        $region208: #{sentence_embedding_forward.1} parent=206 // pred_check
          %p2151 = pneg %p159
        $region209: #{sentence_embedding_forward.1} parent=206 // pred_check_branch
          %2153 = sbr.rel (%p2151) target = $region211
        $region210: #{sentence_embedding_forward.1} parent=206 // pred_region
          %s2154 = sand.u32 %s144, 1
          %s2155 = sand.u32 %s144, 1
          %s2156 = smul.addr %s2155, 64
          %s2157 = scalar_lea.vmem [#allocation5], %s2156
        $region211: #{sentence_embedding_forward.1} parent=206 // pred_fallthru
          _
        // Predicated region
        $region212: #{sentence_embedding_forward.1} parent=206 // pred_check
          %p2158 = pneg %p185
        $region213: #{sentence_embedding_forward.1} parent=206 // pred_check_branch
          %2160 = sbr.rel (%p2158) target = $region215
        $region214: #{sentence_embedding_forward.1} parent=206 // pred_region
          %s2161 = sand.u32 %s170, 1
          %s2162 = sand.u32 %s170, 1
          %s2163 = smul.addr %s2162, 64
          %s2164 = scalar_lea.vmem [#allocation6], %s2163
        $region215: #{sentence_embedding_forward.1} parent=206 // pred_fallthru
          _
        // Predicated region
        $region216: #{sentence_embedding_forward.1} parent=206 // pred_check
          %p2165 = pneg %p211
        $region217: #{sentence_embedding_forward.1} parent=206 // pred_check_branch
          %2167 = sbr.rel (%p2165) target = $region219
        $region218: #{sentence_embedding_forward.1} parent=206 // pred_region
          %p2168 = scmp.lt.s32.totalorder %s21, 1
          %s2169 = scalar_select %p2168, %s21, 1
          %s2170 = smul.addr %s2169, 8
          %s2171 = scalar_lea.vmem %s7, %s2170
        $region219: #{sentence_embedding_forward.1} parent=206 // pred_fallthru
          _
        // Predicated region
        $region220: #{sentence_embedding_forward.1} parent=206 // pred_check
          %p2172 = pneg %p237
        $region221: #{sentence_embedding_forward.1} parent=206 // pred_check_branch
          %2174 = sbr.rel (%p2172) target = $region223
        $region222: #{sentence_embedding_forward.1} parent=206 // pred_region
          %p2175 = scmp.lt.s32.totalorder %s21, 1
          %s2176 = scalar_select %p2175, %s21, 1
          %s2177 = smul.addr %s2176, 8
          %s2178 = scalar_lea.vmem %s8, %s2177
        $region223: #{sentence_embedding_forward.1} parent=206 // pred_fallthru
          _
      $region207: #{sentence_embedding_forward.1} parent=5 // pred_fallthru
        _
    $region6: #{sentence_embedding_forward.1} parent=1 // loop_footer
      %s19 = sadd.s32 1, %s15
    $region7: #{sentence_embedding_forward.1} parent=1 // loop_footer_branch
      %14 = sbr.rel target = $region3
    $region8: #{sentence_embedding_forward.1} parent=1 // loop_exit
      _

</llo_original>
